<compile_context>
chip_gen: v6e
topology: v6e:2x2x1
jax: 0.10.0
libtpu: 0.0.40
codegen_flags: <defaults>
</compile_context>

<pallas_src>
import jax
import jax.numpy as jnp
from jax import lax
from jax.experimental import pallas as pl
from jax.experimental.pallas import tpu as pltpu

C = 24          # channels / head dim (fixed by the module)
H = W = 56      # spatial (fixed by out.view(b, 24, 56, 56))
HW = H * W      # 3136
M = 49          # z tokens
D = 768         # z feature dim
SCALE = C ** (-0.5)

TILE_P = 512    # pixel tile (lane dim of q^T); multiple of 128, sweepable


def _ttom_kernel(z_ref, xt_ref, xr_ref, wk_ref, bk_ref, wv_ref, bv_ref,
                 o_ref, k_scr, v_scr):
    p_idx = pl.program_id(1)

    # k / v projections: once per batch element (first pixel tile only).
    @pl.when(p_idx == 0)
    def _():
        z = z_ref[0]                                                    # (49, 768)
        k = jnp.dot(z, wk_ref[...], preferred_element_type=jnp.float32) + bk_ref[...]
        v = jnp.dot(z, wv_ref[...], preferred_element_type=jnp.float32) + bv_ref[...]
        k_scr[...] = k * SCALE                                          # fold the softmax scale into k
        v_scr[...] = v

    # x_nchw tile is exactly q^T for this pixel tile: (24, TILE_P), pixels on lanes.
    qT = xt_ref[0]

    # dots^T = (scale*k) @ q^T  -> (49, TILE_P), lane-dense MXU output (N = TILE_P).
    dots_T = jnp.dot(k_scr[...], qT, preferred_element_type=jnp.float32)

    # Softmax per pixel (over the 49 sublane axis), numerically stable.
    m = jnp.max(dots_T, axis=0, keepdims=True)                          # (1, TILE_P)
    e = jnp.exp(dots_T - m)                                             # (49, TILE_P)
    inv = pl.reciprocal(jnp.sum(e, axis=0, keepdims=True), approx=True) # EUP vrcp
    attn_T = e * inv                                                    # (49, TILE_P)

    # out = attn @ v, computed as transposed-LHS contraction of attn^T with v:
    #   out[p, c] = sum_m attn^T[m, p] * v[m, c]   -> (TILE_P, 24)
    out = lax.dot_general(
        attn_T, v_scr[...],
        dimension_numbers=(((0,), (0,)), ((), ())),
        preferred_element_type=jnp.float32,
    )

    # Residual against the RAW-reshaped x (matches PyTorch's `x + out.view(...)`).
    o_ref[0] = (xr_ref[0] + out).astype(o_ref.dtype)


def ttom_forward(x, z, wk, bk, wv, bv):
    """x: (B, 24, 56, 56) f32, z: (B, 49, 768) f32 -> (B, 24, 56, 56) f32."""
    B = x.shape[0]
    assert x.shape == (B, C, H, W)
    assert z.shape == (B, M, D)

    # Two free (contiguous) views of x — no transpose, no data movement in the wrapper.
    x_nchw = x.reshape(B, C, HW)   # == q^T per batch (channel-major)
    x_raw = x.reshape(B, HW, C)    # raw reinterpretation, used for the residual add

    n_pt = pl.cdiv(HW, TILE_P)

    out = pl.pallas_call(
        _ttom_kernel,
        out_shape=jax.ShapeDtypeStruct((B, HW, C), x.dtype),
        grid_spec=pltpu.PrefetchScalarGridSpec(
            num_scalar_prefetch=0,
            grid=(B, n_pt),
            in_specs=[
                pl.BlockSpec((1, M, D), lambda b, p: (b, 0, 0)),        # z (fetched once per b)
                pl.BlockSpec((1, C, TILE_P), lambda b, p: (b, 0, p)),   # x_nchw == q^T tile
                pl.BlockSpec((1, TILE_P, C), lambda b, p: (b, p, 0)),   # x_raw tile (residual)
                pl.BlockSpec((D, C), lambda b, p: (0, 0)),              # wk (fetched once)
                pl.BlockSpec((1, C), lambda b, p: (0, 0)),              # bk
                pl.BlockSpec((D, C), lambda b, p: (0, 0)),              # wv
                pl.BlockSpec((1, C), lambda b, p: (0, 0)),              # bv
            ],
            out_specs=pl.BlockSpec((1, TILE_P, C), lambda b, p: (b, p, 0)),
            scratch_shapes=[
                pltpu.VMEM((M, C), jnp.float32),    # k (pre-scaled), persists across pixel tiles
                pltpu.VMEM((M, C), jnp.float32),    # v
            ],
        ),
        compiler_params=pltpu.CompilerParams(
            # Pixel axis carries k/v scratch across tiles -> "arbitrary"; batch is parallel.
            dimension_semantics=("parallel", "arbitrary"),
        ),
    )(z, x_nchw, x_raw, wk, bk, wv, bv)

    # Raw contiguous reinterpretation back to NCHW (same as torch .view(B,24,56,56)).
    return out.reshape(B, C, H, W)


def ttom_reference(x, z, wk, bk, wv, bv):
    """Pure-JAX reference mirroring the PyTorch code (exact softmax, f32)."""
    B = x.shape[0]
    q = jnp.transpose(x.reshape(B, C, HW), (0, 2, 1))
    k = z @ wk + bk[0]
    v = z @ wv + bv[0]
    dots = jnp.einsum("bnc,bmc->bnm", q, k) * SCALE
    attn = jax.nn.softmax(dots, axis=-1)
    out = jnp.einsum("bnm,bmc->bnc", attn, v)
    return x + out.reshape(B, C, H, W)


if __name__ == "__main__":
    key = jax.random.PRNGKey(0)
    kx, kz, k1, k2, k3, k4 = jax.random.split(key, 6)

    B = 2
    x = jax.random.normal(kx, (B, C, H, W), dtype=jnp.float32)
    z = jax.random.normal(kz, (B, M, D), dtype=jnp.float32)

    # Deterministic parameter init (shapes from nn.Linear(768, 24)); stored as
    # (in, out) so the kernel computes z @ W + b.
    bound = 1.0 / (D ** 0.5)
    wk = jax.random.uniform(k1, (D, C), jnp.float32, -bound, bound)
    bk = jax.random.uniform(k2, (1, C), jnp.float32, -bound, bound)
    wv = jax.random.uniform(k3, (D, C), jnp.float32, -bound, bound)
    bv = jax.random.uniform(k4, (1, C), jnp.float32, -bound, bound)

    y = jax.block_until_ready(ttom_forward(x, z, wk, bk, wv, bv))
    y_ref = jax.block_until_ready(ttom_reference(x, z, wk, bk, wv, bv))

    assert y.shape == (B, C, H, W)
    # Tolerance accounts for the approximate (EUP) reciprocal in the softmax denominator.
    assert jnp.allclose(y, y_ref, rtol=5e-3, atol=5e-3), "mismatch vs reference"
    print("KERNEL_OK")
</pallas_src>

<mosaic_0001>
module attributes {stable_mosaic.version = 11 : i64} {
  func.func @_ttom_kernel(%arg0: i32, %arg1: i32, %arg2: memref<1x49x768xf32, #tpu.memory_space<vmem>>, %arg3: memref<1x24x512xf32, #tpu.memory_space<vmem>>, %arg4: memref<1x512x24xf32, #tpu.memory_space<vmem>>, %arg5: memref<768x24xf32, #tpu.memory_space<vmem>>, %arg6: memref<1x24xf32, #tpu.memory_space<vmem>>, %arg7: memref<768x24xf32, #tpu.memory_space<vmem>>, %arg8: memref<1x24xf32, #tpu.memory_space<vmem>>, %arg9: memref<1x512x24xf32, #tpu.memory_space<vmem>>, %arg10: memref<49x24xf32, #tpu.memory_space<vmem>>, %arg11: memref<49x24xf32, #tpu.memory_space<vmem>>) attributes {dimension_semantics = [#tpu.dimension_semantics<parallel>, #tpu.dimension_semantics<arbitrary>], iteration_bounds = array<i64: 2, 7>, scalar_prefetch = 0 : i64, scratch_operands = 2 : i64, tpu.core_type = #tpu.core_type<tc>, window_params = [{transform_indices = @transform_0, window_bounds = array<i64: 1, 49, 768>}, {transform_indices = @transform_1, window_bounds = array<i64: 1, 24, 512>}, {transform_indices = @transform_2, window_bounds = array<i64: 1, 512, 24>}, {pipeline_mode = #tpu.pipeline_mode<synchronous>, transform_indices = @transform_3, window_bounds = array<i64: 768, 24>}, {pipeline_mode = #tpu.pipeline_mode<synchronous>, transform_indices = @transform_4, window_bounds = array<i64: 1, 24>}, {pipeline_mode = #tpu.pipeline_mode<synchronous>, transform_indices = @transform_5, window_bounds = array<i64: 768, 24>}, {pipeline_mode = #tpu.pipeline_mode<synchronous>, transform_indices = @transform_6, window_bounds = array<i64: 1, 24>}, {transform_indices = @transform_7, window_bounds = array<i64: 1, 512, 24>}]} {
    %c0_i32 = arith.constant 0 : i32
    %0 = arith.cmpi eq, %arg1, %c0_i32 : i32
    %1 = arith.extui %0 : i1 to i32
    %c0_i32_0 = arith.constant 0 : i32
    %2 = arith.cmpi ne, %1, %c0_i32_0 : i32
    scf.if %2 {
      %c0_16 = arith.constant 0 : index
      %c0_17 = arith.constant 0 : index
      %c0_18 = arith.constant 0 : index
      %25 = vector.load %arg2[%c0_16, %c0_17, %c0_18] : memref<1x49x768xf32, #tpu.memory_space<vmem>>, vector<1x49x768xf32>
      %26 = vector.shape_cast %25 : vector<1x49x768xf32> to vector<49x768xf32>
      %c0_19 = arith.constant 0 : index
      %c0_20 = arith.constant 0 : index
      %27 = vector.load %arg5[%c0_19, %c0_20] : memref<768x24xf32, #tpu.memory_space<vmem>>, vector<768x24xf32>
      %cst_21 = arith.constant dense<0.000000e+00> : vector<49x24xf32>
      %28 = tpu.matmul %26, %27, %cst_21 {dimension_numbers = #tpu.dot_dimension_numbers<[1], [0], [0], [1], [0, 0, 1, 1], [], []>} : vector<49x768xf32>, vector<768x24xf32>, vector<49x24xf32> -> vector<49x24xf32>
      %c0_22 = arith.constant 0 : index
      %c0_23 = arith.constant 0 : index
      %29 = vector.load %arg6[%c0_22, %c0_23] : memref<1x24xf32, #tpu.memory_space<vmem>>, vector<1x24xf32>
      %30 = vector.broadcast %29 : vector<1x24xf32> to vector<49x24xf32>
      %31 = arith.addf %28, %30 : vector<49x24xf32>
      %c0_24 = arith.constant 0 : index
      %c0_25 = arith.constant 0 : index
      %32 = vector.load %arg7[%c0_24, %c0_25] : memref<768x24xf32, #tpu.memory_space<vmem>>, vector<768x24xf32>
      %cst_26 = arith.constant dense<0.000000e+00> : vector<49x24xf32>
      %33 = tpu.matmul %26, %32, %cst_26 {dimension_numbers = #tpu.dot_dimension_numbers<[1], [0], [0], [1], [0, 0, 1, 1], [], []>} : vector<49x768xf32>, vector<768x24xf32>, vector<49x24xf32> -> vector<49x24xf32>
      %c0_27 = arith.constant 0 : index
      %c0_28 = arith.constant 0 : index
      %34 = vector.load %arg8[%c0_27, %c0_28] : memref<1x24xf32, #tpu.memory_space<vmem>>, vector<1x24xf32>
      %35 = vector.broadcast %34 : vector<1x24xf32> to vector<49x24xf32>
      %36 = arith.addf %33, %35 : vector<49x24xf32>
      %cst_29 = arith.constant 0.204124153 : f32
      %37 = vector.broadcast %cst_29 : f32 to vector<49x24xf32>
      %38 = arith.mulf %31, %37 : vector<49x24xf32>
      %c0_30 = arith.constant 0 : index
      %c0_31 = arith.constant 0 : index
      %39 = vector.load %arg10[%c0_30, %c0_31] : memref<49x24xf32, #tpu.memory_space<vmem>>, vector<49x24xf32>
      tpu.vector_store %arg10[%c0_30, %c0_31], %38 {strides = array<i32>} : memref<49x24xf32, #tpu.memory_space<vmem>>, vector<49x24xf32>,
      %c0_32 = arith.constant 0 : index
      %c0_33 = arith.constant 0 : index
      %40 = vector.load %arg11[%c0_32, %c0_33] : memref<49x24xf32, #tpu.memory_space<vmem>>, vector<49x24xf32>
      tpu.vector_store %arg11[%c0_32, %c0_33], %36 {strides = array<i32>} : memref<49x24xf32, #tpu.memory_space<vmem>>, vector<49x24xf32>,
    } else {
    }
    %c0 = arith.constant 0 : index
    %c0_1 = arith.constant 0 : index
    %c0_2 = arith.constant 0 : index
    %3 = vector.load %arg3[%c0, %c0_1, %c0_2] : memref<1x24x512xf32, #tpu.memory_space<vmem>>, vector<1x24x512xf32>
    %4 = vector.shape_cast %3 : vector<1x24x512xf32> to vector<24x512xf32>
    %c0_3 = arith.constant 0 : index
    %c0_4 = arith.constant 0 : index
    %5 = vector.load %arg10[%c0_3, %c0_4] : memref<49x24xf32, #tpu.memory_space<vmem>>, vector<49x24xf32>
    %cst = arith.constant dense<0.000000e+00> : vector<49x512xf32>
    %6 = tpu.matmul %5, %4, %cst {dimension_numbers = #tpu.dot_dimension_numbers<[1], [0], [0], [1], [0, 0, 1, 1], [], []>} : vector<49x24xf32>, vector<24x512xf32>, vector<49x512xf32> -> vector<49x512xf32>
    %cst_5 = arith.constant dense<0xFF800000> : vector<512xf32>
    %7 = vector.multi_reduction <maximumf>, %6, %cst_5 [0] : vector<49x512xf32> to vector<512xf32>
    %8 = vector.shape_cast %7 : vector<512xf32> to vector<1x512xf32>
    %9 = vector.broadcast %8 : vector<1x512xf32> to vector<49x512xf32>
    %10 = arith.subf %6, %9 : vector<49x512xf32>
    %11 = math.exp %10 : vector<49x512xf32>
    %cst_6 = arith.constant dense<0.000000e+00> : vector<512xf32>
    %12 = vector.multi_reduction <add>, %11, %cst_6 [0] : vector<49x512xf32> to vector<512xf32>
    %13 = vector.shape_cast %12 : vector<512xf32> to vector<1x512xf32>
    %14 = tpu.reciprocal %13 {approx = true} : vector<1x512xf32> -> vector<1x512xf32>
    %15 = vector.broadcast %14 : vector<1x512xf32> to vector<49x512xf32>
    %16 = arith.mulf %11, %15 : vector<49x512xf32>
    %c0_7 = arith.constant 0 : index
    %c0_8 = arith.constant 0 : index
    %17 = vector.load %arg11[%c0_7, %c0_8] : memref<49x24xf32, #tpu.memory_space<vmem>>, vector<49x24xf32>
    %cst_9 = arith.constant dense<0.000000e+00> : vector<512x24xf32>
    %18 = tpu.matmul %16, %17, %cst_9 {dimension_numbers = #tpu.dot_dimension_numbers<[0], [0], [1], [1], [0, 1, 1, 1], [], []>} : vector<49x512xf32>, vector<49x24xf32>, vector<512x24xf32> -> vector<512x24xf32>
    %c0_10 = arith.constant 0 : index
    %c0_11 = arith.constant 0 : index
    %c0_12 = arith.constant 0 : index
    %19 = vector.load %arg4[%c0_10, %c0_11, %c0_12] : memref<1x512x24xf32, #tpu.memory_space<vmem>>, vector<1x512x24xf32>
    %20 = vector.shape_cast %19 : vector<1x512x24xf32> to vector<512x24xf32>
    %21 = arith.addf %20, %18 : vector<512x24xf32>
    %c0_13 = arith.constant 0 : index
    %c0_14 = arith.constant 0 : index
    %c0_15 = arith.constant 0 : index
    %22 = vector.load %arg9[%c0_13, %c0_14, %c0_15] : memref<1x512x24xf32, #tpu.memory_space<vmem>>, vector<1x512x24xf32>
    %23 = vector.shape_cast %22 : vector<1x512x24xf32> to vector<512x24xf32>
    %24 = vector.shape_cast %21 : vector<512x24xf32> to vector<1x512x24xf32>
    tpu.vector_store %arg9[%c0_13, %c0_14, %c0_15], %24 {strides = array<i32>} : memref<1x512x24xf32, #tpu.memory_space<vmem>>, vector<1x512x24xf32>,
    return
  }
  func.func @transform_0(%arg0: i32, %arg1: i32) -> (i32, i32, i32) {
    %c0_i32 = arith.constant 0 : i32
    %c0_i32_0 = arith.constant 0 : i32
    %c0_i32_1 = arith.constant 0 : i32
    return %arg0, %c0_i32, %c0_i32_0 : i32, i32, i32
  }
  func.func @transform_1(%arg0: i32, %arg1: i32) -> (i32, i32, i32) {
    %c0_i32 = arith.constant 0 : i32
    %c0_i32_0 = arith.constant 0 : i32
    return %arg0, %c0_i32, %arg1 : i32, i32, i32
  }
  func.func @transform_2(%arg0: i32, %arg1: i32) -> (i32, i32, i32) {
    %c0_i32 = arith.constant 0 : i32
    %c0_i32_0 = arith.constant 0 : i32
    return %arg0, %arg1, %c0_i32 : i32, i32, i32
  }
  func.func @transform_3(%arg0: i32, %arg1: i32) -> (i32, i32) {
    %c0_i32 = arith.constant 0 : i32
    %c0_i32_0 = arith.constant 0 : i32
    %c0_i32_1 = arith.constant 0 : i32
    return %c0_i32, %c0_i32_0 : i32, i32
  }
  func.func @transform_4(%arg0: i32, %arg1: i32) -> (i32, i32) {
    %c0_i32 = arith.constant 0 : i32
    %c0_i32_0 = arith.constant 0 : i32
    %c0_i32_1 = arith.constant 0 : i32
    return %c0_i32, %c0_i32_0 : i32, i32
  }
  func.func @transform_5(%arg0: i32, %arg1: i32) -> (i32, i32) {
    %c0_i32 = arith.constant 0 : i32
    %c0_i32_0 = arith.constant 0 : i32
    %c0_i32_1 = arith.constant 0 : i32
    return %c0_i32, %c0_i32_0 : i32, i32
  }
  func.func @transform_6(%arg0: i32, %arg1: i32) -> (i32, i32) {
    %c0_i32 = arith.constant 0 : i32
    %c0_i32_0 = arith.constant 0 : i32
    %c0_i32_1 = arith.constant 0 : i32
    return %c0_i32, %c0_i32_0 : i32, i32
  }
  func.func @transform_7(%arg0: i32, %arg1: i32) -> (i32, i32, i32) {
    %c0_i32 = arith.constant 0 : i32
    %c0_i32_0 = arith.constant 0 : i32
    return %arg0, %arg1, %c0_i32 : i32, i32, i32
  }
}

</mosaic_0001>

<llo_original>
// kernel: tpu_custom_call.1
$region0: #{tpu_custom_call.1}
  #allocation0 [shape = 'u32[]', space=smem, size = 0x4, offset = 0x4, fixed_abs, tag = 'smem constant byte address 0x4 - core index']
  #allocation1 [shape = 'u32[144,128]{1,0:T(1,128)}', space=vmem, size = 0x12000, scoped, tag = 'internal scratch']
  #allocation2 [shape = 'f32[49,24]{1,0:T(8,128)}', space=vmem, size = 0x7000, scoped, tag = 'scratch operand']
  #allocation3 [shape = 'f32[49,24]{1,0:T(8,128)}', space=vmem, size = 0x7000, scoped, tag = 'scratch operand']
  %s0 = inlined_call_operand.vmem [shape: f32[2,49,768], index: 0, kind: input, shape index: {}]
  %s1 = inlined_call_operand.vmem [shape: f32[2,24,3136], index: 1, kind: input, shape index: {}]
  %s2 = inlined_call_operand.vmem [shape: f32[2,3136,24], index: 2, kind: input, shape index: {}]
  %s3 = inlined_call_operand.vmem [shape: f32[768,24], index: 3, kind: input, shape index: {}]
  %s4 = inlined_call_operand.vmem [shape: f32[1,24], index: 4, kind: input, shape index: {}]
  %s5 = inlined_call_operand.vmem [shape: f32[768,24], index: 5, kind: input, shape index: {}]
  %s6 = inlined_call_operand.vmem [shape: f32[1,24], index: 6, kind: input, shape index: {}]
  %s7 = inlined_call_operand.vmem [shape: f32[2,3136,24], index: 7, kind: output, shape index: {}]
  %s8 = sld [smem:[#allocation0]]
  $region179: #{tpu_custom_call.1} parent=0
    _
  %s10 = ssub.s32 1, %s8
  %s11 = scalar_select 0, %s10, %s8
  $region1: #{tpu_custom_call.1} parent=0
    #allocation4 [shape = 'u8[98304]{0}', space=vmem, size = 0x18000, scoped, tag = 'input window, operand 1']
    #allocation5 [shape = 'u8[524288]{0}', space=vmem, size = 0x80000, scoped, tag = 'output window, operand 0']
    loop: start=0, step=1, limit=16
    $region2: #{tpu_custom_call.1} parent=1 // loop_pre_header
      _
    $region3: #{tpu_custom_call.1} parent=1 // loop_header
      %s13 = sphi 0, %s17
      %p14 = scmp.ge.s32.totalorder %s13, 16
      %s20 = sphi 0, %s32
      %s21 = sphi 0, %s28
      %s22 = sphi 0, %s20
      %s23 = sphi 0, %s21
      %s24 = sphi 0, %s22
      %s25 = sphi 0, %s23
      %s35 = sphi 0, %s37
      %s38 = sphi 0, %s35
      %s39 = sphi 0, %s38
      %s55 = sphi 0, %s39
      %s63 = sphi 0, %s65
      %s66 = sphi 0, %s63
      %s67 = sphi 0, %s66
      %s83 = sphi 0, %s67
      %s91 = sphi 0, %s93
      %s94 = sphi 0, %s91
      %s95 = sphi 0, %s94
      %s111 = sphi 0, %s95
      %s115 = sphi 0, %s115
      %s117 = sphi 0, %s115
      %s118 = sphi 0, %s117
      %s132 = sphi 0, %s118
      %s136 = sphi 0, %s136
      %s138 = sphi 0, %s136
      %s139 = sphi 0, %s138
      %s153 = sphi 0, %s139
      %s157 = sphi 0, %s157
      %s159 = sphi 0, %s157
      %s160 = sphi 0, %s159
      %s174 = sphi 0, %s160
      %s178 = sphi 0, %s178
      %s180 = sphi 0, %s178
      %s181 = sphi 0, %s180
      %s195 = sphi 0, %s181
      %s203 = sphi 0, %s205
      %s206 = sphi 0, %s203
      %s207 = sphi 0, %s206
      %s223 = sphi 0, %s207
    $region4: #{tpu_custom_call.1} parent=1 // loop_header_branch
      %16 = sbr.rel (%p14) target = $region8
    $region5: #{tpu_custom_call.1} parent=1 // loop_body
      %s18 = ssub.s32 %s13, 1
      %s19 = ssub.s32 %s13, 2
      %s26 = sadd.s32 1, %s21
      %p27 = scmp.ge.s32.totalorder %s26, 7
      %s28 = scalar_select %p27, 0, %s26
      %s29 = sadd.s32 1, %s20
      %s30 = scalar_select %p27, %s29, %s20
      %p31 = scmp.ge.s32.totalorder %s30, 2
      %s32 = scalar_select %p31, 0, %s30
      %s33 = ssub.s32 %s20, %s32
      %p34 = scmp.eq.s32.totalorder %s33, 0
      %s36 = sadd.s32 %s35, 1
      %s37 = scalar_select %p34, %s35, %s36
      %p40 = pneg %p34
      %p41 = scmp.eq.s32.totalorder %s13, 13
      %p42 = por %p40, %p41
      %p43 = scmp.ne.s32.totalorder %s35, %s38
      %p44 = scmp.eq.s32.totalorder %s13, 0
      %p45 = por %p43, %p44
      %p46 = scmp.ne.s32.totalorder %s35, %s38
      %p47 = scmp.eq.s32.totalorder %s18, 13
      %p48 = por %p46, %p47
      %p49 = scmp.ne.s32.totalorder %s38, %s39
      %p50 = scmp.eq.s32.totalorder %s18, 0
      %p51 = por %p49, %p50
      %p52 = scmp.ne.s32.totalorder %s38, %s39
      %p53 = scmp.eq.s32.totalorder %s19, 13
      %p54 = por %p52, %p53
      %p56 = scmp.ne.s32.totalorder %s39, %s55
      %p57 = scmp.eq.s32.totalorder %s19, 0
      %p58 = por %p56, %p57
      %s59 = ssub.s32 %s20, %s32
      %s60 = ssub.s32 %s21, %s28
      %s61 = sor.u32 %s59, %s60
      %p62 = scmp.eq.s32.totalorder %s61, 0
      %s64 = sadd.s32 %s63, 1
      %s65 = scalar_select %p62, %s63, %s64
      %p68 = pneg %p62
      %p69 = scmp.eq.s32.totalorder %s13, 13
      %p70 = por %p68, %p69
      %p71 = scmp.ne.s32.totalorder %s63, %s66
      %p72 = scmp.eq.s32.totalorder %s13, 0
      %p73 = por %p71, %p72
      %p74 = scmp.ne.s32.totalorder %s63, %s66
      %p75 = scmp.eq.s32.totalorder %s18, 13
      %p76 = por %p74, %p75
      %p77 = scmp.ne.s32.totalorder %s66, %s67
      %p78 = scmp.eq.s32.totalorder %s18, 0
      %p79 = por %p77, %p78
      %p80 = scmp.ne.s32.totalorder %s66, %s67
      %p81 = scmp.eq.s32.totalorder %s19, 13
      %p82 = por %p80, %p81
      %p84 = scmp.ne.s32.totalorder %s67, %s83
      %p85 = scmp.eq.s32.totalorder %s19, 0
      %p86 = por %p84, %p85
      %s87 = ssub.s32 %s20, %s32
      %s88 = ssub.s32 %s21, %s28
      %s89 = sor.u32 %s87, %s88
      %p90 = scmp.eq.s32.totalorder %s89, 0
      %s92 = sadd.s32 %s91, 1
      %s93 = scalar_select %p90, %s91, %s92
      %p96 = pneg %p90
      %p97 = scmp.eq.s32.totalorder %s13, 13
      %p98 = por %p96, %p97
      %p99 = scmp.ne.s32.totalorder %s91, %s94
      %p100 = scmp.eq.s32.totalorder %s13, 0
      %p101 = por %p99, %p100
      %p102 = scmp.ne.s32.totalorder %s91, %s94
      %p103 = scmp.eq.s32.totalorder %s18, 13
      %p104 = por %p102, %p103
      %p105 = scmp.ne.s32.totalorder %s94, %s95
      %p106 = scmp.eq.s32.totalorder %s18, 0
      %p107 = por %p105, %p106
      %p108 = scmp.ne.s32.totalorder %s94, %s95
      %p109 = scmp.eq.s32.totalorder %s19, 13
      %p110 = por %p108, %p109
      %p112 = scmp.ne.s32.totalorder %s95, %s111
      %p113 = scmp.eq.s32.totalorder %s19, 0
      %p114 = por %p112, %p113
      %s116 = sadd.s32 %s115, 1
      %p119 = scmp.eq.s32.totalorder %s13, 13
      %p120 = scmp.ne.s32.totalorder %s115, %s117
      %p121 = scmp.eq.s32.totalorder %s13, 0
      %p122 = por %p120, %p121
      %p123 = scmp.ne.s32.totalorder %s115, %s117
      %p124 = scmp.eq.s32.totalorder %s18, 13
      %p125 = por %p123, %p124
      %p126 = scmp.ne.s32.totalorder %s117, %s118
      %p127 = scmp.eq.s32.totalorder %s18, 0
      %p128 = por %p126, %p127
      %p129 = scmp.ne.s32.totalorder %s117, %s118
      %p130 = scmp.eq.s32.totalorder %s19, 13
      %p131 = por %p129, %p130
      %p133 = scmp.ne.s32.totalorder %s118, %s132
      %p134 = scmp.eq.s32.totalorder %s19, 0
      %p135 = por %p133, %p134
      %s137 = sadd.s32 %s136, 1
      %p140 = scmp.eq.s32.totalorder %s13, 13
      %p141 = scmp.ne.s32.totalorder %s136, %s138
      %p142 = scmp.eq.s32.totalorder %s13, 0
      %p143 = por %p141, %p142
      %p144 = scmp.ne.s32.totalorder %s136, %s138
      %p145 = scmp.eq.s32.totalorder %s18, 13
      %p146 = por %p144, %p145
      %p147 = scmp.ne.s32.totalorder %s138, %s139
      %p148 = scmp.eq.s32.totalorder %s18, 0
      %p149 = por %p147, %p148
      %p150 = scmp.ne.s32.totalorder %s138, %s139
      %p151 = scmp.eq.s32.totalorder %s19, 13
      %p152 = por %p150, %p151
      %p154 = scmp.ne.s32.totalorder %s139, %s153
      %p155 = scmp.eq.s32.totalorder %s19, 0
      %p156 = por %p154, %p155
      %s158 = sadd.s32 %s157, 1
      %p161 = scmp.eq.s32.totalorder %s13, 13
      %p162 = scmp.ne.s32.totalorder %s157, %s159
      %p163 = scmp.eq.s32.totalorder %s13, 0
      %p164 = por %p162, %p163
      %p165 = scmp.ne.s32.totalorder %s157, %s159
      %p166 = scmp.eq.s32.totalorder %s18, 13
      %p167 = por %p165, %p166
      %p168 = scmp.ne.s32.totalorder %s159, %s160
      %p169 = scmp.eq.s32.totalorder %s18, 0
      %p170 = por %p168, %p169
      %p171 = scmp.ne.s32.totalorder %s159, %s160
      %p172 = scmp.eq.s32.totalorder %s19, 13
      %p173 = por %p171, %p172
      %p175 = scmp.ne.s32.totalorder %s160, %s174
      %p176 = scmp.eq.s32.totalorder %s19, 0
      %p177 = por %p175, %p176
      %s179 = sadd.s32 %s178, 1
      %p182 = scmp.eq.s32.totalorder %s13, 13
      %p183 = scmp.ne.s32.totalorder %s178, %s180
      %p184 = scmp.eq.s32.totalorder %s13, 0
      %p185 = por %p183, %p184
      %p186 = scmp.ne.s32.totalorder %s178, %s180
      %p187 = scmp.eq.s32.totalorder %s18, 13
      %p188 = por %p186, %p187
      %p189 = scmp.ne.s32.totalorder %s180, %s181
      %p190 = scmp.eq.s32.totalorder %s18, 0
      %p191 = por %p189, %p190
      %p192 = scmp.ne.s32.totalorder %s180, %s181
      %p193 = scmp.eq.s32.totalorder %s19, 13
      %p194 = por %p192, %p193
      %p196 = scmp.ne.s32.totalorder %s181, %s195
      %p197 = scmp.eq.s32.totalorder %s19, 0
      %p198 = por %p196, %p197
      %s199 = ssub.s32 %s20, %s32
      %s200 = ssub.s32 %s21, %s28
      %s201 = sor.u32 %s199, %s200
      %p202 = scmp.eq.s32.totalorder %s201, 0
      %s204 = sadd.s32 %s203, 1
      %s205 = scalar_select %p202, %s203, %s204
      %p208 = pneg %p202
      %p209 = scmp.eq.s32.totalorder %s13, 13
      %p210 = por %p208, %p209
      %p211 = scmp.ne.s32.totalorder %s203, %s206
      %p212 = scmp.eq.s32.totalorder %s13, 0
      %p213 = por %p211, %p212
      %p214 = scmp.ne.s32.totalorder %s203, %s206
      %p215 = scmp.eq.s32.totalorder %s18, 13
      %p216 = por %p214, %p215
      %p217 = scmp.ne.s32.totalorder %s206, %s207
      %p218 = scmp.eq.s32.totalorder %s18, 0
      %p219 = por %p217, %p218
      %p220 = scmp.ne.s32.totalorder %s206, %s207
      %p221 = scmp.eq.s32.totalorder %s19, 13
      %p222 = por %p220, %p221
      %p224 = scmp.ne.s32.totalorder %s207, %s223
      %p225 = scmp.eq.s32.totalorder %s19, 0
      %p226 = por %p224, %p225
      %p227 = scmp.le.s32.totalorder 1, %s13
      %p228 = scmp.lt.s32.totalorder %s13, 15
      %p229 = pnand %p227, %p228
      %p230 = pneg %p229
      // Predicated region
      $region9: #{tpu_custom_call.1} parent=5 // pred_check
        _
      $region10: #{tpu_custom_call.1} parent=5 // pred_check_branch
        %232 = sbr.rel (%p229) target = $region12
      $region11: #{tpu_custom_call.1} parent=5 // pred_region
        %s233 = ssub.s32 %s13, 1
        // Predicated region
        $region13: #{tpu_custom_call.1} parent=11 // pred_check
          %p234 = pneg %p128
        $region14: #{tpu_custom_call.1} parent=11 // pred_check_branch
          %236 = sbr.rel (%p234) target = $region16
        $region15: #{tpu_custom_call.1} parent=11 // pred_region
          _
        $region16: #{tpu_custom_call.1} parent=11 // pred_fallthru
          _
        // Predicated region
        $region17: #{tpu_custom_call.1} parent=11 // pred_check
          %p237 = pneg %p149
        $region18: #{tpu_custom_call.1} parent=11 // pred_check_branch
          %239 = sbr.rel (%p237) target = $region20
        $region19: #{tpu_custom_call.1} parent=11 // pred_region
          _
        $region20: #{tpu_custom_call.1} parent=11 // pred_fallthru
          _
        // Predicated region
        $region21: #{tpu_custom_call.1} parent=11 // pred_check
          %p240 = pneg %p170
        $region22: #{tpu_custom_call.1} parent=11 // pred_check_branch
          %242 = sbr.rel (%p240) target = $region24
        $region23: #{tpu_custom_call.1} parent=11 // pred_region
          _
        $region24: #{tpu_custom_call.1} parent=11 // pred_fallthru
          _
        // Predicated region
        $region25: #{tpu_custom_call.1} parent=11 // pred_check
          %p243 = pneg %p191
        $region26: #{tpu_custom_call.1} parent=11 // pred_check_branch
          %245 = sbr.rel (%p243) target = $region28
        $region27: #{tpu_custom_call.1} parent=11 // pred_region
          _
        $region28: #{tpu_custom_call.1} parent=11 // pred_fallthru
          _
      $region12: #{tpu_custom_call.1} parent=5 // pred_fallthru
        _
      %p246 = scmp.lt.s32.totalorder %s13, 14
      // Predicated region
      $region29: #{tpu_custom_call.1} parent=5 // pred_check
        %p247 = pneg %p246
      $region30: #{tpu_custom_call.1} parent=5 // pred_check_branch
        %249 = sbr.rel (%p247) target = $region32
      $region31: #{tpu_custom_call.1} parent=5 // pred_region
        // Predicated region
        $region33: #{tpu_custom_call.1} parent=31 // pred_check
          %p250 = pneg %p45
        $region34: #{tpu_custom_call.1} parent=31 // pred_check_branch
          %252 = sbr.rel (%p250) target = $region36
        $region35: #{tpu_custom_call.1} parent=31 // pred_region
          %p253 = scmp.lt.s32.totalorder %s20, 1
          %s254 = scalar_select %p253, %s20, 1
          %s255 = smul.addr %s254, 42
          %s256 = smul.addr %s255, 8
          %s257 = scalar_lea.vmem %s0, %s256
        $region36: #{tpu_custom_call.1} parent=31 // pred_fallthru
          _
        // Predicated region
        $region37: #{tpu_custom_call.1} parent=31 // pred_check
          %p258 = pneg %p73
        $region38: #{tpu_custom_call.1} parent=31 // pred_check_branch
          %260 = sbr.rel (%p258) target = $region40
        $region39: #{tpu_custom_call.1} parent=31 // pred_region
          %s261 = sand.u32 %s63, 1
          %s262 = sand.u32 %s63, 1
          %s263 = smul.addr %s262, 96
          %s264 = scalar_lea.vmem [#allocation4], %s263
          %s265 = smul.u32 4, %s21
          %s266 = ssub.s32 25, %s265
          %p267 = scmp.lt.s32.totalorder %s266, 4
          %s268 = scalar_select %p267, %s266, 4
          %s269 = smul.u32 384, %s268
          %p270 = scmp.ne.s32.totalorder 0, %s269
          %s271 = smul.addr %s20, 75
          %s272 = sadd.s32 %s265, %s271
          %s273 = smul.addr %s272, 8
          %s274 = scalar_lea.vmem %s1, %s273
          %s275 = smul.u32 %s268, 8
          // Predicated region
          $region41: #{tpu_custom_call.1} parent=39 // pred_check
            %p276 = pneg %p270
          $region42: #{tpu_custom_call.1} parent=39 // pred_check_branch
            %278 = sbr.rel (%p276) target = $region44
          $region43: #{tpu_custom_call.1} parent=39 // pred_region
            %p279 = scmp.lt.u32.totalorder %s275, 8
            %p280 = pneg %p279
            // Predicated region
            $region45: #{tpu_custom_call.1} parent=43 // pred_check
              _
            $region46: #{tpu_custom_call.1} parent=43 // pred_check_branch
              %282 = sbr.rel (%p279) target = $region48
            $region47: #{tpu_custom_call.1} parent=43 // pred_region
              %s302 = sand.u32 %s275, 7
              %p303 = scmp.eq.s32.totalorder %s302, 0
              // Predicated region
              $region60: #{tpu_custom_call.1} parent=47 // pred_check
                %p304 = pneg %p303
              $region61: #{tpu_custom_call.1} parent=47 // pred_check_branch
                %306 = sbr.rel (%p304) target = $region63
              $region62: #{tpu_custom_call.1} parent=47 // pred_region
                %s307 = sshrl.u32 %s275, 3
                %s308 = sdiv.u32.pop %s307, 24
                %s309 = srem.u32.pop %s307, 24
                // While loop
                $region64: #{tpu_custom_call.1} parent=62 // loop_pre_header
                  _
                $region65: #{tpu_custom_call.1} parent=62 // loop_header
                  %s313 = sphi 0, %s315
                  %p314 = scmp.ge.s32.totalorder %s313, %s308
                  %s318 = sphi 0, %s467
                  %s319 = sphi %s274, %s470
                  %s320 = sphi %s264, %s471
                $region66: #{tpu_custom_call.1} parent=62 // loop_header_branch
                  %317 = sbr.rel (%p314) target = $region70
                $region67: #{tpu_custom_call.1} parent=62 // loop_body
                  %v321 = vld [vmem:[%s319] sm:$0xff]
                  %322 = vst [vmem:[%s320] sm:$0xff] %v321
                  %v323 = vld [vmem:[%s319 + $0x8] sm:$0xff]
                  %324 = vst [vmem:[%s320 + $0x8] sm:$0xff] %v323
                  %v325 = vld [vmem:[%s319 + $0x10] sm:$0xff]
                  %326 = vst [vmem:[%s320 + $0x10] sm:$0xff] %v325
                  %v327 = vld [vmem:[%s319 + $0x18] sm:$0xff]
                  %328 = vst [vmem:[%s320 + $0x18] sm:$0xff] %v327
                  %v329 = vld [vmem:[%s319 + $0x20] sm:$0xff]
                  %330 = vst [vmem:[%s320 + $0x20] sm:$0xff] %v329
                  %v331 = vld [vmem:[%s319 + $0x28] sm:$0xff]
                  %332 = vst [vmem:[%s320 + $0x28] sm:$0xff] %v331
                  %v333 = vld [vmem:[%s319 + $0x30] sm:$0xff]
                  %334 = vst [vmem:[%s320 + $0x30] sm:$0xff] %v333
                  %v335 = vld [vmem:[%s319 + $0x38] sm:$0xff]
                  %336 = vst [vmem:[%s320 + $0x38] sm:$0xff] %v335
                  %v337 = vld [vmem:[%s319 + $0x40] sm:$0xff]
                  %338 = vst [vmem:[%s320 + $0x40] sm:$0xff] %v337
                  %v339 = vld [vmem:[%s319 + $0x48] sm:$0xff]
                  %340 = vst [vmem:[%s320 + $0x48] sm:$0xff] %v339
                  %v341 = vld [vmem:[%s319 + $0x50] sm:$0xff]
                  %342 = vst [vmem:[%s320 + $0x50] sm:$0xff] %v341
                  %v343 = vld [vmem:[%s319 + $0x58] sm:$0xff]
                  %344 = vst [vmem:[%s320 + $0x58] sm:$0xff] %v343
                  %v345 = vld [vmem:[%s319 + $0x60] sm:$0xff]
                  %346 = vst [vmem:[%s320 + $0x60] sm:$0xff] %v345
                  %v347 = vld [vmem:[%s319 + $0x68] sm:$0xff]
                  %348 = vst [vmem:[%s320 + $0x68] sm:$0xff] %v347
                  %v349 = vld [vmem:[%s319 + $0x70] sm:$0xff]
                  %350 = vst [vmem:[%s320 + $0x70] sm:$0xff] %v349
                  %v351 = vld [vmem:[%s319 + $0x78] sm:$0xff]
                  %352 = vst [vmem:[%s320 + $0x78] sm:$0xff] %v351
                  %v353 = vld [vmem:[%s319 + $0x80] sm:$0xff]
                  %354 = vst [vmem:[%s320 + $0x80] sm:$0xff] %v353
                  %v355 = vld [vmem:[%s319 + $0x88] sm:$0xff]
                  %356 = vst [vmem:[%s320 + $0x88] sm:$0xff] %v355
                  %v357 = vld [vmem:[%s319 + $0x90] sm:$0xff]
                  %358 = vst [vmem:[%s320 + $0x90] sm:$0xff] %v357
                  %v359 = vld [vmem:[%s319 + $0x98] sm:$0xff]
                  %360 = vst [vmem:[%s320 + $0x98] sm:$0xff] %v359
                  %v361 = vld [vmem:[%s319 + $0xa0] sm:$0xff]
                  %362 = vst [vmem:[%s320 + $0xa0] sm:$0xff] %v361
                  %v363 = vld [vmem:[%s319 + $0xa8] sm:$0xff]
                  %364 = vst [vmem:[%s320 + $0xa8] sm:$0xff] %v363
                  %v365 = vld [vmem:[%s319 + $0xb0] sm:$0xff]
                  %366 = vst [vmem:[%s320 + $0xb0] sm:$0xff] %v365
                  %v367 = vld [vmem:[%s319 + $0xb8] sm:$0xff]
                  %368 = vst [vmem:[%s320 + $0xb8] sm:$0xff] %v367
                  %v369 = vld [vmem:[%s319 + $0xc8] sm:$0xff]
                  %370 = vst [vmem:[%s320 + $0x20] sm:$0xff] %v369
                  %v371 = vld [vmem:[%s319 + $0xd0] sm:$0xff]
                  %372 = vst [vmem:[%s320 + $0x28] sm:$0xff] %v371
                  %v373 = vld [vmem:[%s319 + $0xd8] sm:$0xff]
                  %374 = vst [vmem:[%s320 + $0x30] sm:$0xff] %v373
                  %v375 = vld [vmem:[%s319 + $0xe0] sm:$0xff]
                  %376 = vst [vmem:[%s320 + $0x38] sm:$0xff] %v375
                  %v377 = vld [vmem:[%s319 + $0xe8] sm:$0xff]
                  %378 = vst [vmem:[%s320 + $0x40] sm:$0xff] %v377
                  %v379 = vld [vmem:[%s319 + $0xf0] sm:$0xff]
                  %380 = vst [vmem:[%s320 + $0x48] sm:$0xff] %v379
                  %v381 = vld [vmem:[%s319 + $0xf8] sm:$0xff]
                  %382 = vst [vmem:[%s320 + $0x50] sm:$0xff] %v381
                  %v383 = vld [vmem:[%s319 + $0x100] sm:$0xff]
                  %384 = vst [vmem:[%s320 + $0x58] sm:$0xff] %v383
                  %v385 = vld [vmem:[%s319 + $0x108] sm:$0xff]
                  %386 = vst [vmem:[%s320 + $0x60] sm:$0xff] %v385
                  %v387 = vld [vmem:[%s319 + $0x110] sm:$0xff]
                  %388 = vst [vmem:[%s320 + $0x68] sm:$0xff] %v387
                  %v389 = vld [vmem:[%s319 + $0x118] sm:$0xff]
                  %390 = vst [vmem:[%s320 + $0x70] sm:$0xff] %v389
                  %v391 = vld [vmem:[%s319 + $0x120] sm:$0xff]
                  %392 = vst [vmem:[%s320 + $0x78] sm:$0xff] %v391
                  %v393 = vld [vmem:[%s319 + $0x128] sm:$0xff]
                  %394 = vst [vmem:[%s320 + $0x80] sm:$0xff] %v393
                  %v395 = vld [vmem:[%s319 + $0x130] sm:$0xff]
                  %396 = vst [vmem:[%s320 + $0x88] sm:$0xff] %v395
                  %v397 = vld [vmem:[%s319 + $0x138] sm:$0xff]
                  %398 = vst [vmem:[%s320 + $0x90] sm:$0xff] %v397
                  %v399 = vld [vmem:[%s319 + $0x140] sm:$0xff]
                  %400 = vst [vmem:[%s320 + $0x98] sm:$0xff] %v399
                  %v401 = vld [vmem:[%s319 + $0x148] sm:$0xff]
                  %402 = vst [vmem:[%s320 + $0xa0] sm:$0xff] %v401
                  %v403 = vld [vmem:[%s319 + $0x150] sm:$0xff]
                  %404 = vst [vmem:[%s320 + $0xa8] sm:$0xff] %v403
                  %v405 = vld [vmem:[%s319 + $0x158] sm:$0xff]
                  %406 = vst [vmem:[%s320 + $0xb0] sm:$0xff] %v405
                  %v407 = vld [vmem:[%s319 + $0x160] sm:$0xff]
                  %408 = vst [vmem:[%s320 + $0xb8] sm:$0xff] %v407
                  %v409 = vld [vmem:[%s319 + $0x168] sm:$0xff]
                  %410 = vst [vmem:[%s320 + $0xc0] sm:$0xff] %v409
                  %v411 = vld [vmem:[%s319 + $0x170] sm:$0xff]
                  %412 = vst [vmem:[%s320 + $0xc8] sm:$0xff] %v411
                  %v413 = vld [vmem:[%s319 + $0x178] sm:$0xff]
                  %414 = vst [vmem:[%s320 + $0xd0] sm:$0xff] %v413
                  %v415 = vld [vmem:[%s319 + $0x180] sm:$0xff]
                  %416 = vst [vmem:[%s320 + $0xd8] sm:$0xff] %v415
                  %v417 = vld [vmem:[%s319 + $0x190] sm:$0xff]
                  %418 = vst [vmem:[%s320 + $0x40] sm:$0xff] %v417
                  %v419 = vld [vmem:[%s319 + $0x198] sm:$0xff]
                  %420 = vst [vmem:[%s320 + $0x48] sm:$0xff] %v419
                  %v421 = vld [vmem:[%s319 + $0x1a0] sm:$0xff]
                  %422 = vst [vmem:[%s320 + $0x50] sm:$0xff] %v421
                  %v423 = vld [vmem:[%s319 + $0x1a8] sm:$0xff]
                  %424 = vst [vmem:[%s320 + $0x58] sm:$0xff] %v423
                  %v425 = vld [vmem:[%s319 + $0x1b0] sm:$0xff]
                  %426 = vst [vmem:[%s320 + $0x60] sm:$0xff] %v425
                  %v427 = vld [vmem:[%s319 + $0x1b8] sm:$0xff]
                  %428 = vst [vmem:[%s320 + $0x68] sm:$0xff] %v427
                  %v429 = vld [vmem:[%s319 + $0x1c0] sm:$0xff]
                  %430 = vst [vmem:[%s320 + $0x70] sm:$0xff] %v429
                  %v431 = vld [vmem:[%s319 + $0x1c8] sm:$0xff]
                  %432 = vst [vmem:[%s320 + $0x78] sm:$0xff] %v431
                  %v433 = vld [vmem:[%s319 + $0x1d0] sm:$0xff]
                  %434 = vst [vmem:[%s320 + $0x80] sm:$0xff] %v433
                  %v435 = vld [vmem:[%s319 + $0x1d8] sm:$0xff]
                  %436 = vst [vmem:[%s320 + $0x88] sm:$0xff] %v435
                  %v437 = vld [vmem:[%s319 + $0x1e0] sm:$0xff]
                  %438 = vst [vmem:[%s320 + $0x90] sm:$0xff] %v437
                  %v439 = vld [vmem:[%s319 + $0x1e8] sm:$0xff]
                  %440 = vst [vmem:[%s320 + $0x98] sm:$0xff] %v439
                  %v441 = vld [vmem:[%s319 + $0x1f0] sm:$0xff]
                  %442 = vst [vmem:[%s320 + $0xa0] sm:$0xff] %v441
                  %v443 = vld [vmem:[%s319 + $0x1f8] sm:$0xff]
                  %444 = vst [vmem:[%s320 + $0xa8] sm:$0xff] %v443
                  %v445 = vld [vmem:[%s319 + $0x200] sm:$0xff]
                  %446 = vst [vmem:[%s320 + $0xb0] sm:$0xff] %v445
                  %v447 = vld [vmem:[%s319 + $0x208] sm:$0xff]
                  %448 = vst [vmem:[%s320 + $0xb8] sm:$0xff] %v447
                  %v449 = vld [vmem:[%s319 + $0x210] sm:$0xff]
                  %450 = vst [vmem:[%s320 + $0xc0] sm:$0xff] %v449
                  %v451 = vld [vmem:[%s319 + $0x218] sm:$0xff]
                  %452 = vst [vmem:[%s320 + $0xc8] sm:$0xff] %v451
                  %v453 = vld [vmem:[%s319 + $0x220] sm:$0xff]
                  %454 = vst [vmem:[%s320 + $0xd0] sm:$0xff] %v453
                  %v455 = vld [vmem:[%s319 + $0x228] sm:$0xff]
                  %456 = vst [vmem:[%s320 + $0xd8] sm:$0xff] %v455
                  %v457 = vld [vmem:[%s319 + $0x230] sm:$0xff]
                  %458 = vst [vmem:[%s320 + $0xe0] sm:$0xff] %v457
                  %v459 = vld [vmem:[%s319 + $0x238] sm:$0xff]
                  %460 = vst [vmem:[%s320 + $0xe8] sm:$0xff] %v459
                  %v461 = vld [vmem:[%s319 + $0x240] sm:$0xff]
                  %462 = vst [vmem:[%s320 + $0xf0] sm:$0xff] %v461
                  %v463 = vld [vmem:[%s319 + $0x248] sm:$0xff]
                  %464 = vst [vmem:[%s320 + $0xf8] sm:$0xff] %v463
                  %s465 = sadd.s32 1, %s318
                  %p466 = scmp.ge.s32.totalorder %s465, %s308
                  %s467 = scalar_select %p466, 0, %s465
                  %s468 = smul.u32 %s467, 192
                  %s469 = smul.u32 %s467, 192
                  %s470 = scalar_lea.vmem %s274, %s468
                  %s471 = scalar_lea.vmem %s264, %s469 [#allocation4]
                $region68: #{tpu_custom_call.1} parent=62 // loop_footer
                  %s315 = sadd.s32 %s313, 1
                $region69: #{tpu_custom_call.1} parent=62 // loop_footer_branch
                  %312 = sbr.rel target = $region65
                $region70: #{tpu_custom_call.1} parent=62 // loop_exit
                  _
                %s472 = sdiv.u32.pop %s307, 24
                %s473 = srem.u32.pop %s307, 24
                %s474 = smul.u32 %s472, 24
                %s475 = smul.u32 128, %s474
                %s476 = sshra.s32 %s475, 4
                %s477 = scalar_lea.vmem %s274, %s476
                %s478 = smul.u32 128, %s474
                %s479 = sshra.s32 %s478, 4
                %s480 = scalar_lea.vmem %s264, %s479 [#allocation4]
                // While loop
                $region71: #{tpu_custom_call.1} parent=62 // loop_pre_header
                  _
                $region72: #{tpu_custom_call.1} parent=62 // loop_header
                  %s484 = sphi 0, %s486
                  %p485 = scmp.ge.s32.totalorder %s484, %s473
                  %s489 = sphi 0, %s500
                  %s490 = sphi %s477, %s503
                  %s491 = sphi %s480, %s504
                $region73: #{tpu_custom_call.1} parent=62 // loop_header_branch
                  %488 = sbr.rel (%p485) target = $region77
                $region74: #{tpu_custom_call.1} parent=62 // loop_body
                  %v492 = vld [vmem:[%s490] sm:$0xff]
                  %493 = vst [vmem:[%s491] sm:$0xff] %v492
                  %v494 = vld [vmem:[%s490 + $0xc8] sm:$0xff]
                  %495 = vst [vmem:[%s491 + $0x20] sm:$0xff] %v494
                  %v496 = vld [vmem:[%s490 + $0x190] sm:$0xff]
                  %497 = vst [vmem:[%s491 + $0x40] sm:$0xff] %v496
                  %s498 = sadd.s32 1, %s489
                  %p499 = scmp.ge.s32.totalorder %s498, %s473
                  %s500 = scalar_select %p499, 0, %s498
                  %s501 = smul.u32 %s500, 8
                  %s502 = smul.u32 %s500, 8
                  %s503 = scalar_lea.vmem %s477, %s501
                  %s504 = scalar_lea.vmem %s480, %s502 [#allocation4]
                $region75: #{tpu_custom_call.1} parent=62 // loop_footer
                  %s486 = sadd.s32 %s484, 1
                $region76: #{tpu_custom_call.1} parent=62 // loop_footer_branch
                  %483 = sbr.rel target = $region72
                $region77: #{tpu_custom_call.1} parent=62 // loop_exit
                  _
              $region63: #{tpu_custom_call.1} parent=47 // pred_fallthru
                _
              %p505 = pneg %p303
              // Predicated region
              $region78: #{tpu_custom_call.1} parent=47 // pred_check
                _
              $region79: #{tpu_custom_call.1} parent=47 // pred_check_branch
                %507 = sbr.rel (%p303) target = $region81
              $region80: #{tpu_custom_call.1} parent=47 // pred_region
                %s508 = sand.u32 %s275, 7
                %s509 = ssub.s32 %s275, %s508
                %s510 = scalar_lea.vmem %s274, %s509
                %s511 = ssub.s32 %s275, %s508
                %s512 = scalar_lea.vmem %s264, %s511 [#allocation4]
                %s513 = sshrl.u32 %s275, 3
                %s514 = sdiv.u32.pop %s513, 24
                %s515 = srem.u32.pop %s513, 24
                // While loop
                $region82: #{tpu_custom_call.1} parent=80 // loop_pre_header
                  _
                $region83: #{tpu_custom_call.1} parent=80 // loop_header
                  %s519 = sphi 0, %s521
                  %p520 = scmp.ge.s32.totalorder %s519, %s514
                  %s524 = sphi 0, %s673
                  %s525 = sphi %s274, %s676
                  %s526 = sphi %s264, %s677
                $region84: #{tpu_custom_call.1} parent=80 // loop_header_branch
                  %523 = sbr.rel (%p520) target = $region88
                $region85: #{tpu_custom_call.1} parent=80 // loop_body
                  %v527 = vld [vmem:[%s525] sm:$0xff]
                  %528 = vst [vmem:[%s526] sm:$0xff] %v527
                  %v529 = vld [vmem:[%s525 + $0x8] sm:$0xff]
                  %530 = vst [vmem:[%s526 + $0x8] sm:$0xff] %v529
                  %v531 = vld [vmem:[%s525 + $0x10] sm:$0xff]
                  %532 = vst [vmem:[%s526 + $0x10] sm:$0xff] %v531
                  %v533 = vld [vmem:[%s525 + $0x18] sm:$0xff]
                  %534 = vst [vmem:[%s526 + $0x18] sm:$0xff] %v533
                  %v535 = vld [vmem:[%s525 + $0x20] sm:$0xff]
                  %536 = vst [vmem:[%s526 + $0x20] sm:$0xff] %v535
                  %v537 = vld [vmem:[%s525 + $0x28] sm:$0xff]
                  %538 = vst [vmem:[%s526 + $0x28] sm:$0xff] %v537
                  %v539 = vld [vmem:[%s525 + $0x30] sm:$0xff]
                  %540 = vst [vmem:[%s526 + $0x30] sm:$0xff] %v539
                  %v541 = vld [vmem:[%s525 + $0x38] sm:$0xff]
                  %542 = vst [vmem:[%s526 + $0x38] sm:$0xff] %v541
                  %v543 = vld [vmem:[%s525 + $0x40] sm:$0xff]
                  %544 = vst [vmem:[%s526 + $0x40] sm:$0xff] %v543
                  %v545 = vld [vmem:[%s525 + $0x48] sm:$0xff]
                  %546 = vst [vmem:[%s526 + $0x48] sm:$0xff] %v545
                  %v547 = vld [vmem:[%s525 + $0x50] sm:$0xff]
                  %548 = vst [vmem:[%s526 + $0x50] sm:$0xff] %v547
                  %v549 = vld [vmem:[%s525 + $0x58] sm:$0xff]
                  %550 = vst [vmem:[%s526 + $0x58] sm:$0xff] %v549
                  %v551 = vld [vmem:[%s525 + $0x60] sm:$0xff]
                  %552 = vst [vmem:[%s526 + $0x60] sm:$0xff] %v551
                  %v553 = vld [vmem:[%s525 + $0x68] sm:$0xff]
                  %554 = vst [vmem:[%s526 + $0x68] sm:$0xff] %v553
                  %v555 = vld [vmem:[%s525 + $0x70] sm:$0xff]
                  %556 = vst [vmem:[%s526 + $0x70] sm:$0xff] %v555
                  %v557 = vld [vmem:[%s525 + $0x78] sm:$0xff]
                  %558 = vst [vmem:[%s526 + $0x78] sm:$0xff] %v557
                  %v559 = vld [vmem:[%s525 + $0x80] sm:$0xff]
                  %560 = vst [vmem:[%s526 + $0x80] sm:$0xff] %v559
                  %v561 = vld [vmem:[%s525 + $0x88] sm:$0xff]
                  %562 = vst [vmem:[%s526 + $0x88] sm:$0xff] %v561
                  %v563 = vld [vmem:[%s525 + $0x90] sm:$0xff]
                  %564 = vst [vmem:[%s526 + $0x90] sm:$0xff] %v563
                  %v565 = vld [vmem:[%s525 + $0x98] sm:$0xff]
                  %566 = vst [vmem:[%s526 + $0x98] sm:$0xff] %v565
                  %v567 = vld [vmem:[%s525 + $0xa0] sm:$0xff]
                  %568 = vst [vmem:[%s526 + $0xa0] sm:$0xff] %v567
                  %v569 = vld [vmem:[%s525 + $0xa8] sm:$0xff]
                  %570 = vst [vmem:[%s526 + $0xa8] sm:$0xff] %v569
                  %v571 = vld [vmem:[%s525 + $0xb0] sm:$0xff]
                  %572 = vst [vmem:[%s526 + $0xb0] sm:$0xff] %v571
                  %v573 = vld [vmem:[%s525 + $0xb8] sm:$0xff]
                  %574 = vst [vmem:[%s526 + $0xb8] sm:$0xff] %v573
                  %v575 = vld [vmem:[%s525 + $0xc8] sm:$0xff]
                  %576 = vst [vmem:[%s526 + $0x20] sm:$0xff] %v575
                  %v577 = vld [vmem:[%s525 + $0xd0] sm:$0xff]
                  %578 = vst [vmem:[%s526 + $0x28] sm:$0xff] %v577
                  %v579 = vld [vmem:[%s525 + $0xd8] sm:$0xff]
                  %580 = vst [vmem:[%s526 + $0x30] sm:$0xff] %v579
                  %v581 = vld [vmem:[%s525 + $0xe0] sm:$0xff]
                  %582 = vst [vmem:[%s526 + $0x38] sm:$0xff] %v581
                  %v583 = vld [vmem:[%s525 + $0xe8] sm:$0xff]
                  %584 = vst [vmem:[%s526 + $0x40] sm:$0xff] %v583
                  %v585 = vld [vmem:[%s525 + $0xf0] sm:$0xff]
                  %586 = vst [vmem:[%s526 + $0x48] sm:$0xff] %v585
                  %v587 = vld [vmem:[%s525 + $0xf8] sm:$0xff]
                  %588 = vst [vmem:[%s526 + $0x50] sm:$0xff] %v587
                  %v589 = vld [vmem:[%s525 + $0x100] sm:$0xff]
                  %590 = vst [vmem:[%s526 + $0x58] sm:$0xff] %v589
                  %v591 = vld [vmem:[%s525 + $0x108] sm:$0xff]
                  %592 = vst [vmem:[%s526 + $0x60] sm:$0xff] %v591
                  %v593 = vld [vmem:[%s525 + $0x110] sm:$0xff]
                  %594 = vst [vmem:[%s526 + $0x68] sm:$0xff] %v593
                  %v595 = vld [vmem:[%s525 + $0x118] sm:$0xff]
                  %596 = vst [vmem:[%s526 + $0x70] sm:$0xff] %v595
                  %v597 = vld [vmem:[%s525 + $0x120] sm:$0xff]
                  %598 = vst [vmem:[%s526 + $0x78] sm:$0xff] %v597
                  %v599 = vld [vmem:[%s525 + $0x128] sm:$0xff]
                  %600 = vst [vmem:[%s526 + $0x80] sm:$0xff] %v599
                  %v601 = vld [vmem:[%s525 + $0x130] sm:$0xff]
                  %602 = vst [vmem:[%s526 + $0x88] sm:$0xff] %v601
                  %v603 = vld [vmem:[%s525 + $0x138] sm:$0xff]
                  %604 = vst [vmem:[%s526 + $0x90] sm:$0xff] %v603
                  %v605 = vld [vmem:[%s525 + $0x140] sm:$0xff]
                  %606 = vst [vmem:[%s526 + $0x98] sm:$0xff] %v605
                  %v607 = vld [vmem:[%s525 + $0x148] sm:$0xff]
                  %608 = vst [vmem:[%s526 + $0xa0] sm:$0xff] %v607
                  %v609 = vld [vmem:[%s525 + $0x150] sm:$0xff]
                  %610 = vst [vmem:[%s526 + $0xa8] sm:$0xff] %v609
                  %v611 = vld [vmem:[%s525 + $0x158] sm:$0xff]
                  %612 = vst [vmem:[%s526 + $0xb0] sm:$0xff] %v611
                  %v613 = vld [vmem:[%s525 + $0x160] sm:$0xff]
                  %614 = vst [vmem:[%s526 + $0xb8] sm:$0xff] %v613
                  %v615 = vld [vmem:[%s525 + $0x168] sm:$0xff]
                  %616 = vst [vmem:[%s526 + $0xc0] sm:$0xff] %v615
                  %v617 = vld [vmem:[%s525 + $0x170] sm:$0xff]
                  %618 = vst [vmem:[%s526 + $0xc8] sm:$0xff] %v617
                  %v619 = vld [vmem:[%s525 + $0x178] sm:$0xff]
                  %620 = vst [vmem:[%s526 + $0xd0] sm:$0xff] %v619
                  %v621 = vld [vmem:[%s525 + $0x180] sm:$0xff]
                  %622 = vst [vmem:[%s526 + $0xd8] sm:$0xff] %v621
                  %v623 = vld [vmem:[%s525 + $0x190] sm:$0xff]
                  %624 = vst [vmem:[%s526 + $0x40] sm:$0xff] %v623
                  %v625 = vld [vmem:[%s525 + $0x198] sm:$0xff]
                  %626 = vst [vmem:[%s526 + $0x48] sm:$0xff] %v625
                  %v627 = vld [vmem:[%s525 + $0x1a0] sm:$0xff]
                  %628 = vst [vmem:[%s526 + $0x50] sm:$0xff] %v627
                  %v629 = vld [vmem:[%s525 + $0x1a8] sm:$0xff]
                  %630 = vst [vmem:[%s526 + $0x58] sm:$0xff] %v629
                  %v631 = vld [vmem:[%s525 + $0x1b0] sm:$0xff]
                  %632 = vst [vmem:[%s526 + $0x60] sm:$0xff] %v631
                  %v633 = vld [vmem:[%s525 + $0x1b8] sm:$0xff]
                  %634 = vst [vmem:[%s526 + $0x68] sm:$0xff] %v633
                  %v635 = vld [vmem:[%s525 + $0x1c0] sm:$0xff]
                  %636 = vst [vmem:[%s526 + $0x70] sm:$0xff] %v635
                  %v637 = vld [vmem:[%s525 + $0x1c8] sm:$0xff]
                  %638 = vst [vmem:[%s526 + $0x78] sm:$0xff] %v637
                  %v639 = vld [vmem:[%s525 + $0x1d0] sm:$0xff]
                  %640 = vst [vmem:[%s526 + $0x80] sm:$0xff] %v639
                  %v641 = vld [vmem:[%s525 + $0x1d8] sm:$0xff]
                  %642 = vst [vmem:[%s526 + $0x88] sm:$0xff] %v641
                  %v643 = vld [vmem:[%s525 + $0x1e0] sm:$0xff]
                  %644 = vst [vmem:[%s526 + $0x90] sm:$0xff] %v643
                  %v645 = vld [vmem:[%s525 + $0x1e8] sm:$0xff]
                  %646 = vst [vmem:[%s526 + $0x98] sm:$0xff] %v645
                  %v647 = vld [vmem:[%s525 + $0x1f0] sm:$0xff]
                  %648 = vst [vmem:[%s526 + $0xa0] sm:$0xff] %v647
                  %v649 = vld [vmem:[%s525 + $0x1f8] sm:$0xff]
                  %650 = vst [vmem:[%s526 + $0xa8] sm:$0xff] %v649
                  %v651 = vld [vmem:[%s525 + $0x200] sm:$0xff]
                  %652 = vst [vmem:[%s526 + $0xb0] sm:$0xff] %v651
                  %v653 = vld [vmem:[%s525 + $0x208] sm:$0xff]
                  %654 = vst [vmem:[%s526 + $0xb8] sm:$0xff] %v653
                  %v655 = vld [vmem:[%s525 + $0x210] sm:$0xff]
                  %656 = vst [vmem:[%s526 + $0xc0] sm:$0xff] %v655
                  %v657 = vld [vmem:[%s525 + $0x218] sm:$0xff]
                  %658 = vst [vmem:[%s526 + $0xc8] sm:$0xff] %v657
                  %v659 = vld [vmem:[%s525 + $0x220] sm:$0xff]
                  %660 = vst [vmem:[%s526 + $0xd0] sm:$0xff] %v659
                  %v661 = vld [vmem:[%s525 + $0x228] sm:$0xff]
                  %662 = vst [vmem:[%s526 + $0xd8] sm:$0xff] %v661
                  %v663 = vld [vmem:[%s525 + $0x230] sm:$0xff]
                  %664 = vst [vmem:[%s526 + $0xe0] sm:$0xff] %v663
                  %v665 = vld [vmem:[%s525 + $0x238] sm:$0xff]
                  %666 = vst [vmem:[%s526 + $0xe8] sm:$0xff] %v665
                  %v667 = vld [vmem:[%s525 + $0x240] sm:$0xff]
                  %668 = vst [vmem:[%s526 + $0xf0] sm:$0xff] %v667
                  %v669 = vld [vmem:[%s525 + $0x248] sm:$0xff]
                  %670 = vst [vmem:[%s526 + $0xf8] sm:$0xff] %v669
                  %s671 = sadd.s32 1, %s524
                  %p672 = scmp.ge.s32.totalorder %s671, %s514
                  %s673 = scalar_select %p672, 0, %s671
                  %s674 = smul.u32 %s673, 192
                  %s675 = smul.u32 %s673, 192
                  %s676 = scalar_lea.vmem %s274, %s674
                  %s677 = scalar_lea.vmem %s264, %s675 [#allocation4]
                $region86: #{tpu_custom_call.1} parent=80 // loop_footer
                  %s521 = sadd.s32 %s519, 1
                $region87: #{tpu_custom_call.1} parent=80 // loop_footer_branch
                  %518 = sbr.rel target = $region83
                $region88: #{tpu_custom_call.1} parent=80 // loop_exit
                  _
                %s678 = sdiv.u32.pop %s513, 24
                %s679 = srem.u32.pop %s513, 24
                %s680 = smul.u32 %s678, 24
                %s681 = smul.u32 128, %s680
                %s682 = sshra.s32 %s681, 4
                %s683 = scalar_lea.vmem %s274, %s682
                %s684 = smul.u32 128, %s680
                %s685 = sshra.s32 %s684, 4
                %s686 = scalar_lea.vmem %s264, %s685 [#allocation4]
                // While loop
                $region89: #{tpu_custom_call.1} parent=80 // loop_pre_header
                  _
                $region90: #{tpu_custom_call.1} parent=80 // loop_header
                  %s690 = sphi 0, %s692
                  %p691 = scmp.ge.s32.totalorder %s690, %s679
                  %s695 = sphi 0, %s706
                  %s696 = sphi %s683, %s709
                  %s697 = sphi %s686, %s710
                $region91: #{tpu_custom_call.1} parent=80 // loop_header_branch
                  %694 = sbr.rel (%p691) target = $region95
                $region92: #{tpu_custom_call.1} parent=80 // loop_body
                  %v698 = vld [vmem:[%s696] sm:$0xff]
                  %699 = vst [vmem:[%s697] sm:$0xff] %v698
                  %v700 = vld [vmem:[%s696 + $0xc8] sm:$0xff]
                  %701 = vst [vmem:[%s697 + $0x20] sm:$0xff] %v700
                  %v702 = vld [vmem:[%s696 + $0x190] sm:$0xff]
                  %703 = vst [vmem:[%s697 + $0x40] sm:$0xff] %v702
                  %s704 = sadd.s32 1, %s695
                  %p705 = scmp.ge.s32.totalorder %s704, %s679
                  %s706 = scalar_select %p705, 0, %s704
                  %s707 = smul.u32 %s706, 8
                  %s708 = smul.u32 %s706, 8
                  %s709 = scalar_lea.vmem %s683, %s707
                  %s710 = scalar_lea.vmem %s686, %s708 [#allocation4]
                $region93: #{tpu_custom_call.1} parent=80 // loop_footer
                  %s692 = sadd.s32 %s690, 1
                $region94: #{tpu_custom_call.1} parent=80 // loop_footer_branch
                  %689 = sbr.rel target = $region90
                $region95: #{tpu_custom_call.1} parent=80 // loop_exit
                  _
                %s711 = sshll.u32 1, %s508
                %s712 = ssub.s32 %s711, 1
                loop: start=0, step=1, limit=1
                $region96: #{tpu_custom_call.1} parent=80 // loop_pre_header
                  _
                $region97: #{tpu_custom_call.1} parent=80 // loop_header
                  %s714 = sphi 0, %s718
                  %p715 = scmp.ge.s32.totalorder %s714, 1
                  %s719 = sphi %s510, %s510
                  %s720 = sphi %s512, %s512
                $region98: #{tpu_custom_call.1} parent=80 // loop_header_branch
                  %717 = sbr.rel (%p715) target = $region102
                $region99: #{tpu_custom_call.1} parent=80 // loop_body
                  %v721 = vld [vmem:[%s719] sm:%s712]
                  %722 = vst [vmem:[%s720] sm:%s712] %v721
                  %v723 = vld [vmem:[%s719 + $0xc8] sm:%s712]
                  %724 = vst [vmem:[%s720 + $0x20] sm:%s712] %v723
                  %v725 = vld [vmem:[%s719 + $0x190] sm:%s712]
                  %726 = vst [vmem:[%s720 + $0x40] sm:%s712] %v725
                $region100: #{tpu_custom_call.1} parent=80 // loop_footer
                  %s718 = sadd.s32 1, %s714
                $region101: #{tpu_custom_call.1} parent=80 // loop_footer_branch
                  %713 = sbr.rel target = $region97
                $region102: #{tpu_custom_call.1} parent=80 // loop_exit
                  _
              $region81: #{tpu_custom_call.1} parent=47 // pred_fallthru
                _
            $region48: #{tpu_custom_call.1} parent=43 // pred_fallthru
              _
            // Predicated region
            $region49: #{tpu_custom_call.1} parent=43 // pred_check
              %p283 = pneg %p279
            $region50: #{tpu_custom_call.1} parent=43 // pred_check_branch
              %285 = sbr.rel (%p283) target = $region52
            $region51: #{tpu_custom_call.1} parent=43 // pred_region
              %s286 = sshll.u32 1, %s275
              %s287 = ssub.s32 %s286, 1
              loop: start=0, step=1, limit=1
              $region53: #{tpu_custom_call.1} parent=51 // loop_pre_header
                _
              $region54: #{tpu_custom_call.1} parent=51 // loop_header
                %s289 = sphi 0, %s293
                %p290 = scmp.ge.s32.totalorder %s289, 1
                %s294 = sphi %s274, %s274
                %s295 = sphi %s264, %s264
              $region55: #{tpu_custom_call.1} parent=51 // loop_header_branch
                %292 = sbr.rel (%p290) target = $region59
              $region56: #{tpu_custom_call.1} parent=51 // loop_body
                %v296 = vld [vmem:[%s294] sm:%s287]
                %297 = vst [vmem:[%s295] sm:%s287] %v296
                %v298 = vld [vmem:[%s294 + $0xc8] sm:%s287]
                %299 = vst [vmem:[%s295 + $0x20] sm:%s287] %v298
                %v300 = vld [vmem:[%s294 + $0x190] sm:%s287]
                %301 = vst [vmem:[%s295 + $0x40] sm:%s287] %v300
              $region57: #{tpu_custom_call.1} parent=51 // loop_footer
                %s293 = sadd.s32 1, %s289
              $region58: #{tpu_custom_call.1} parent=51 // loop_footer_branch
                %288 = sbr.rel target = $region54
              $region59: #{tpu_custom_call.1} parent=51 // loop_exit
                _
            $region52: #{tpu_custom_call.1} parent=43 // pred_fallthru
              _
          $region44: #{tpu_custom_call.1} parent=39 // pred_fallthru
            _
          %727 = vnop
        $region40: #{tpu_custom_call.1} parent=31 // pred_fallthru
          _
        // Predicated region
        $region103: #{tpu_custom_call.1} parent=31 // pred_check
          %p728 = pneg %p101
        $region104: #{tpu_custom_call.1} parent=31 // pred_check_branch
          %730 = sbr.rel (%p728) target = $region106
        $region105: #{tpu_custom_call.1} parent=31 // pred_region
          %s731 = smul.u32 64, %s21
          %s732 = ssub.s32 392, %s731
          %p733 = scmp.lt.s32.totalorder %s732, 64
          %s734 = scalar_select %p733, %s732, 64
          %s735 = smul.u32 128, %s734
          %p736 = scmp.lt.s32.totalorder %s20, 1
          %s737 = scalar_select %p736, %s20, 1
          %p738 = scmp.lt.s32.totalorder %s731, 391
          %s739 = scalar_select %p738, %s731, 391
          %s740 = smul.addr %s737, 392
          %s741 = sadd.s32 %s739, %s740
          %s742 = smul.addr %s741, 8
          %s743 = scalar_lea.vmem %s2, %s742
          %s744 = smul.u32 64, %s21
          %s745 = ssub.s32 392, %s744
          %p746 = scmp.lt.s32.totalorder %s745, 64
          %s747 = scalar_select %p746, %s745, 64
          %s748 = smul.u32 128, %s747
        $region106: #{tpu_custom_call.1} parent=31 // pred_fallthru
          _
      $region32: #{tpu_custom_call.1} parent=5 // pred_fallthru
        _
      %p749 = scmp.le.s32.totalorder 1, %s13
      %p750 = scmp.lt.s32.totalorder %s13, 15
      %p751 = pnand %p749, %p750
      %p752 = pneg %p751
      // Predicated region
      $region107: #{tpu_custom_call.1} parent=5 // pred_check
        _
      $region108: #{tpu_custom_call.1} parent=5 // pred_check_branch
        %754 = sbr.rel (%p751) target = $region110
      $region109: #{tpu_custom_call.1} parent=5 // pred_region
        %s755 = ssub.s32 %s13, 1
        %s756 = sand.u32 %s66, 1
        %s757 = sand.u32 %s66, 1
        %s758 = smul.addr %s757, 96
        %s759 = scalar_lea.vmem [#allocation4], %s758
        // Predicated region
        $region111: #{tpu_custom_call.1} parent=109 // pred_check
          %p760 = pneg %p79
        $region112: #{tpu_custom_call.1} parent=109 // pred_check_branch
          %762 = sbr.rel (%p760) target = $region114
        $region113: #{tpu_custom_call.1} parent=109 // pred_region
          _
        $region114: #{tpu_custom_call.1} parent=109 // pred_fallthru
          _
        %p763 = scmp.lt.s32.totalorder %s22, 1
        %s764 = scalar_select %p763, %s22, 1
        %s765 = smul.addr %s764, 42
        %s766 = smul.addr %s765, 8
        %s767 = scalar_lea.vmem %s0, %s766
        %p768 = pneg %p51
        %p769 = pneg %p48
        %s770 = sand.u32 %s66, 1
        %s771 = sand.u32 %s66, 1
        %s772 = smul.addr %s771, 96
        %s773 = scalar_lea.vmem [#allocation4], %s772
        %p774 = pneg %p79
        %p775 = pneg %p76
        %s776 = smul.u32 64, %s23
        %s777 = ssub.s32 392, %s776
        %p778 = scmp.lt.s32.totalorder %s777, 64
        %s779 = scalar_select %p778, %s777, 64
        %s780 = smul.u32 128, %s779
        %p781 = scmp.lt.s32.totalorder %s22, 1
        %s782 = scalar_select %p781, %s22, 1
        %p783 = scmp.lt.s32.totalorder %s776, 391
        %s784 = scalar_select %p783, %s776, 391
        %s785 = smul.addr %s782, 392
        %s786 = sadd.s32 %s784, %s785
        %s787 = smul.addr %s786, 8
        %s788 = scalar_lea.vmem %s2, %s787
        %p789 = pneg %p107
        %p790 = pneg %p104
        %p791 = pneg %p128
        %p792 = pneg %p125
        %p793 = pneg %p149
        %p794 = pneg %p146
        %p795 = pneg %p170
        %p796 = pneg %p167
        %p797 = pneg %p191
        %p798 = pneg %p188
        %p799 = pneg %p219
        %p800 = pneg %p216
        %s801 = sand.u32 %s206, 1
        %s802 = sand.u32 %s206, 1
        %s803 = smul.addr %s802, 512
        %s804 = scalar_lea.vmem [#allocation5], %s803
        %p805 = scmp.lt.s32.totalorder %s22, 1
        %s806 = scalar_select %p805, %s22, 1
        %s807 = smul.addr %s806, 42
        %s808 = smul.addr %s807, 8
        %s809 = scalar_lea.vmem %s0, %s808
        %s810 = smul.u32 4, %s23
        %s811 = ssub.s32 25, %s810
        %p812 = scmp.lt.s32.totalorder %s811, 4
        %s813 = scalar_select %p812, %s811, 4
        %s814 = smul.u32 384, %s813
        %s815 = smul.u32 64, %s23
        %s816 = ssub.s32 392, %s815
        %p817 = scmp.lt.s32.totalorder %s816, 64
        %s818 = scalar_select %p817, %s816, 64
        %s819 = smul.u32 128, %s818
        %p820 = scmp.lt.s32.totalorder %s22, 1
        %s821 = scalar_select %p820, %s22, 1
        %p822 = scmp.lt.s32.totalorder %s815, 391
        %s823 = scalar_select %p822, %s815, 391
        %s824 = smul.addr %s821, 392
        %s825 = sadd.s32 %s823, %s824
        %s826 = smul.addr %s825, 8
        %s827 = scalar_lea.vmem %s2, %s826
        %s828 = smul.u32 64, %s23
        %s829 = ssub.s32 392, %s828
        %p830 = scmp.lt.s32.totalorder %s829, 64
        %s831 = scalar_select %p830, %s829, 64
        %s832 = smul.u32 128, %s831
        %s833 = smul.u32 64, %s23
        %s834 = ssub.s32 392, %s833
        %p835 = scmp.lt.s32.totalorder %s834, 64
        %s836 = scalar_select %p835, %s834, 64
        %s837 = smul.u32 128, %s836
        %p838 = scmp.eq.s32.totalorder %s23, 0
        // Predicated region
        $region115: #{tpu_custom_call.1} parent=109 // pred_check
          %p839 = pneg %p838
        $region116: #{tpu_custom_call.1} parent=109 // pred_check_branch
          %841 = sbr.rel (%p839) target = $region118
        $region117: #{tpu_custom_call.1} parent=109 // pred_region
          %v842 = vld [vmem:[%s809] sm:$0xff]
          %v843 = vld [vmem:[%s809 + $0x8] sm:$0xff]
          %v844 = vld [vmem:[%s809 + $0x10] sm:$0xff]
          %v845 = vld [vmem:[%s809 + $0x18] sm:$0xff]
          %v846 = vld [vmem:[%s809 + $0x20] sm:$0xff]
          %v847 = vld [vmem:[%s809 + $0x28] sm:$0xff]
          %v848 = vld [vmem:[%s809 + $0x30] sm:$0xff]
          %v849 = vld [vmem:[%s809 + $0x38] sm:$0xff]
          %v850 = vld [vmem:[%s809 + $0x40] sm:$0xff]
          %v851 = vld [vmem:[%s809 + $0x48] sm:$0xff]
          %v852 = vld [vmem:[%s809 + $0x50] sm:$0xff]
          %v853 = vld [vmem:[%s809 + $0x58] sm:$0xff]
          %v854 = vld [vmem:[%s809 + $0x60] sm:$0xff]
          %v855 = vld [vmem:[%s809 + $0x68] sm:$0xff]
          %v856 = vld [vmem:[%s809 + $0x70] sm:$0xff]
          %v857 = vld [vmem:[%s809 + $0x78] sm:$0xff]
          %v858 = vld [vmem:[%s809 + $0x80] sm:$0xff]
          %v859 = vld [vmem:[%s809 + $0x88] sm:$0xff]
          %v860 = vld [vmem:[%s809 + $0x90] sm:$0xff]
          %v861 = vld [vmem:[%s809 + $0x98] sm:$0xff]
          %v862 = vld [vmem:[%s809 + $0xa0] sm:$0xff]
          %v863 = vld [vmem:[%s809 + $0xa8] sm:$0xff]
          %v864 = vld [vmem:[%s809 + $0xb0] sm:$0xff]
          %v865 = vld [vmem:[%s809 + $0xb8] sm:$0xff]
          %v866 = vld [vmem:[%s809 + $0xc0] sm:$0xff]
          %v867 = vld [vmem:[%s809 + $0xc8] sm:$0xff]
          %v868 = vld [vmem:[%s809 + $0xd0] sm:$0xff]
          %v869 = vld [vmem:[%s809 + $0xd8] sm:$0xff]
          %v870 = vld [vmem:[%s809 + $0xe0] sm:$0xff]
          %v871 = vld [vmem:[%s809 + $0xe8] sm:$0xff]
          %v872 = vld [vmem:[%s809 + $0xf0] sm:$0xff]
          %v873 = vld [vmem:[%s809 + $0xf8] sm:$0xff]
          %v874 = vld [vmem:[%s809 + $0x100] sm:$0xff]
          %v875 = vld [vmem:[%s809 + $0x108] sm:$0xff]
          %v876 = vld [vmem:[%s809 + $0x110] sm:$0xff]
          %v877 = vld [vmem:[%s809 + $0x118] sm:$0xff]
          %v878 = vld [vmem:[%s809 + $0x120] sm:$0x1]
          %v879 = vld [vmem:[%s809 + $0x128] sm:$0x1]
          %v880 = vld [vmem:[%s809 + $0x130] sm:$0x1]
          %v881 = vld [vmem:[%s809 + $0x138] sm:$0x1]
          %v882 = vld [vmem:[%s809 + $0x140] sm:$0x1]
          %v883 = vld [vmem:[%s809 + $0x148] sm:$0x1]
          %v884 = vld [vmem:[%s3] sm:$0xff]
          %v885 = vld [vmem:[%s3 + $0x8] sm:$0xff]
          %v886 = vld [vmem:[%s3 + $0x10] sm:$0xff]
          %v887 = vld [vmem:[%s3 + $0x18] sm:$0xff]
          %v888 = vld [vmem:[%s3 + $0x20] sm:$0xff]
          %v889 = vld [vmem:[%s3 + $0x28] sm:$0xff]
          %v890 = vld [vmem:[%s3 + $0x30] sm:$0xff]
          %v891 = vld [vmem:[%s3 + $0x38] sm:$0xff]
          %v892 = vld [vmem:[%s3 + $0x40] sm:$0xff]
          %v893 = vld [vmem:[%s3 + $0x48] sm:$0xff]
          %v894 = vld [vmem:[%s3 + $0x50] sm:$0xff]
          %v895 = vld [vmem:[%s3 + $0x58] sm:$0xff]
          %v896 = vld [vmem:[%s3 + $0x60] sm:$0xff]
          %v897 = vld [vmem:[%s3 + $0x68] sm:$0xff]
          %v898 = vld [vmem:[%s3 + $0x70] sm:$0xff]
          %v899 = vld [vmem:[%s3 + $0x78] sm:$0xff]
          %v900 = vld [vmem:[%s3 + $0x80] sm:$0xff]
          %v901 = vld [vmem:[%s3 + $0x88] sm:$0xff]
          %v902 = vld [vmem:[%s3 + $0x90] sm:$0xff]
          %v903 = vld [vmem:[%s3 + $0x98] sm:$0xff]
          %v904 = vld [vmem:[%s3 + $0xa0] sm:$0xff]
          %v905 = vld [vmem:[%s3 + $0xa8] sm:$0xff]
          %v906 = vld [vmem:[%s3 + $0xb0] sm:$0xff]
          %v907 = vld [vmem:[%s3 + $0xb8] sm:$0xff]
          %v908 = vld [vmem:[%s3 + $0xc0] sm:$0xff]
          %v909 = vld [vmem:[%s3 + $0xc8] sm:$0xff]
          %v910 = vld [vmem:[%s3 + $0xd0] sm:$0xff]
          %v911 = vld [vmem:[%s3 + $0xd8] sm:$0xff]
          %v912 = vld [vmem:[%s3 + $0xe0] sm:$0xff]
          %v913 = vld [vmem:[%s3 + $0xe8] sm:$0xff]
          %v914 = vld [vmem:[%s3 + $0xf0] sm:$0xff]
          %v915 = vld [vmem:[%s3 + $0xf8] sm:$0xff]
          %v916 = vld [vmem:[%s3 + $0x100] sm:$0xff]
          %v917 = vld [vmem:[%s3 + $0x108] sm:$0xff]
          %v918 = vld [vmem:[%s3 + $0x110] sm:$0xff]
          %v919 = vld [vmem:[%s3 + $0x118] sm:$0xff]
          %v920 = vld [vmem:[%s3 + $0x120] sm:$0xff]
          %v921 = vld [vmem:[%s3 + $0x128] sm:$0xff]
          %v922 = vld [vmem:[%s3 + $0x130] sm:$0xff]
          %v923 = vld [vmem:[%s3 + $0x138] sm:$0xff]
          %v924 = vld [vmem:[%s3 + $0x140] sm:$0xff]
          %v925 = vld [vmem:[%s3 + $0x148] sm:$0xff]
          %v926 = vld [vmem:[%s3 + $0x150] sm:$0xff]
          %v927 = vld [vmem:[%s3 + $0x158] sm:$0xff]
          %v928 = vld [vmem:[%s3 + $0x160] sm:$0xff]
          %v929 = vld [vmem:[%s3 + $0x168] sm:$0xff]
          %v930 = vld [vmem:[%s3 + $0x170] sm:$0xff]
          %v931 = vld [vmem:[%s3 + $0x178] sm:$0xff]
          %v932 = vld [vmem:[%s3 + $0x180] sm:$0xff]
          %v933 = vld [vmem:[%s3 + $0x188] sm:$0xff]
          %v934 = vld [vmem:[%s3 + $0x190] sm:$0xff]
          %v935 = vld [vmem:[%s3 + $0x198] sm:$0xff]
          %v936 = vld [vmem:[%s3 + $0x1a0] sm:$0xff]
          %v937 = vld [vmem:[%s3 + $0x1a8] sm:$0xff]
          %v938 = vld [vmem:[%s3 + $0x1b0] sm:$0xff]
          %v939 = vld [vmem:[%s3 + $0x1b8] sm:$0xff]
          %v940 = vld [vmem:[%s3 + $0x1c0] sm:$0xff]
          %v941 = vld [vmem:[%s3 + $0x1c8] sm:$0xff]
          %v942 = vld [vmem:[%s3 + $0x1d0] sm:$0xff]
          %v943 = vld [vmem:[%s3 + $0x1d8] sm:$0xff]
          %v944 = vld [vmem:[%s3 + $0x1e0] sm:$0xff]
          %v945 = vld [vmem:[%s3 + $0x1e8] sm:$0xff]
          %v946 = vld [vmem:[%s3 + $0x1f0] sm:$0xff]
          %v947 = vld [vmem:[%s3 + $0x1f8] sm:$0xff]
          %v948 = vld [vmem:[%s3 + $0x200] sm:$0xff]
          %v949 = vld [vmem:[%s3 + $0x208] sm:$0xff]
          %v950 = vld [vmem:[%s3 + $0x210] sm:$0xff]
          %v951 = vld [vmem:[%s3 + $0x218] sm:$0xff]
          %v952 = vld [vmem:[%s3 + $0x220] sm:$0xff]
          %v953 = vld [vmem:[%s3 + $0x228] sm:$0xff]
          %v954 = vld [vmem:[%s3 + $0x230] sm:$0xff]
          %v955 = vld [vmem:[%s3 + $0x238] sm:$0xff]
          %v956 = vld [vmem:[%s3 + $0x240] sm:$0xff]
          %v957 = vld [vmem:[%s3 + $0x248] sm:$0xff]
          %v958 = vld [vmem:[%s3 + $0x250] sm:$0xff]
          %v959 = vld [vmem:[%s3 + $0x258] sm:$0xff]
          %v960 = vld [vmem:[%s3 + $0x260] sm:$0xff]
          %v961 = vld [vmem:[%s3 + $0x268] sm:$0xff]
          %v962 = vld [vmem:[%s3 + $0x270] sm:$0xff]
          %v963 = vld [vmem:[%s3 + $0x278] sm:$0xff]
          %v964 = vld [vmem:[%s3 + $0x280] sm:$0xff]
          %v965 = vld [vmem:[%s3 + $0x288] sm:$0xff]
          %v966 = vld [vmem:[%s3 + $0x290] sm:$0xff]
          %v967 = vld [vmem:[%s3 + $0x298] sm:$0xff]
          %v968 = vld [vmem:[%s3 + $0x2a0] sm:$0xff]
          %v969 = vld [vmem:[%s3 + $0x2a8] sm:$0xff]
          %v970 = vld [vmem:[%s3 + $0x2b0] sm:$0xff]
          %v971 = vld [vmem:[%s3 + $0x2b8] sm:$0xff]
          %v972 = vld [vmem:[%s3 + $0x2c0] sm:$0xff]
          %v973 = vld [vmem:[%s3 + $0x2c8] sm:$0xff]
          %v974 = vld [vmem:[%s3 + $0x2d0] sm:$0xff]
          %v975 = vld [vmem:[%s3 + $0x2d8] sm:$0xff]
          %v976 = vld [vmem:[%s3 + $0x2e0] sm:$0xff]
          %v977 = vld [vmem:[%s3 + $0x2e8] sm:$0xff]
          %v978 = vld [vmem:[%s3 + $0x2f0] sm:$0xff]
          %v979 = vld [vmem:[%s3 + $0x2f8] sm:$0xff]
          %v980 = vld [vmem:[%s4] sm:$0x1]
          %v982 = vlaneseq
          %v983 = vshrl.u32 %v982, 7
          %v984 = vsub.s32 0, %v983
          %v985 = vrot.slane %v980, %v984
          %987 = vmatprep.subr.mxu0 0.0
          %988 = vmatpush1.msra.mxu0 %v899
          %989 = vmatprep.subr.mxu0 0.0
          %990 = vmatpush1.msra.mxu0 %v898
          %991 = vmatprep.subr.mxu0 0.0
          %992 = vmatpush1.msra.mxu0 %v897
          %993 = vmatprep.subr.mxu0 0.0
          %994 = vmatpush1.msra.mxu0 %v896
          %995 = vmatprep.subr.mxu0 0.0
          %996 = vmatpush1.msra.mxu0 %v895
          %997 = vmatprep.subr.mxu0 0.0
          %998 = vmatpush1.msra.mxu0 %v894
          %999 = vmatprep.subr.mxu0 0.0
          %1000 = vmatpush1.msra.mxu0 %v893
          %1001 = vmatprep.subr.mxu0 0.0
          %1002 = vmatpush1.msra.mxu0 %v892
          %1003 = vmatprep.subr.mxu0 0.0
          %1004 = vmatpush1.msra.mxu0 %v891
          %1005 = vmatprep.subr.mxu0 0.0
          %1006 = vmatpush1.msra.mxu0 %v890
          %1007 = vmatprep.subr.mxu0 0.0
          %1008 = vmatpush1.msra.mxu0 %v889
          %1009 = vmatprep.subr.mxu0 0.0
          %1010 = vmatpush1.msra.mxu0 %v888
          %1011 = vmatprep.subr.mxu0 0.0
          %1012 = vmatpush1.msra.mxu0 %v887
          %1013 = vmatprep.subr.mxu0 0.0
          %1014 = vmatpush1.msra.mxu0 %v886
          %1015 = vmatprep.subr.mxu0 0.0
          %1016 = vmatpush1.msra.mxu0 %v885
          %1017 = vmatprep.subr.mxu0 0.0
          %1018 = vmatpush1.msra.mxu0 %v884
          %1019 = vmatprep.subr.mxu0 0.0
          %1020 = vmatpush2.msra.mxu0 %v915
          %1021 = vmatprep.subr.mxu0 0.0
          %1022 = vmatpush2.msra.mxu0 %v914
          %1023 = vmatprep.subr.mxu0 0.0
          %1024 = vmatpush2.msra.mxu0 %v913
          %1025 = vmatprep.subr.mxu0 0.0
          %1026 = vmatpush2.msra.mxu0 %v912
          %1027 = vmatprep.subr.mxu0 0.0
          %1028 = vmatpush2.msra.mxu0 %v911
          %1029 = vmatprep.subr.mxu0 0.0
          %1030 = vmatpush2.msra.mxu0 %v910
          %1031 = vmatprep.subr.mxu0 0.0
          %1032 = vmatpush2.msra.mxu0 %v909
          %1033 = vmatprep.subr.mxu0 0.0
          %1034 = vmatpush2.msra.mxu0 %v908
          %1035 = vmatprep.subr.mxu0 0.0
          %1036 = vmatpush2.msra.mxu0 %v907
          %1037 = vmatprep.subr.mxu0 0.0
          %1038 = vmatpush2.msra.mxu0 %v906
          %1039 = vmatprep.subr.mxu0 0.0
          %1040 = vmatpush2.msra.mxu0 %v905
          %1041 = vmatprep.subr.mxu0 0.0
          %1042 = vmatpush2.msra.mxu0 %v904
          %1043 = vmatprep.subr.mxu0 0.0
          %1044 = vmatpush2.msra.mxu0 %v903
          %1045 = vmatprep.subr.mxu0 0.0
          %1046 = vmatpush2.msra.mxu0 %v902
          %1047 = vmatprep.subr.mxu0 0.0
          %1048 = vmatpush2.msra.mxu0 %v901
          %1049 = vmatprep.subr.mxu0 0.0
          %1050 = vmatpush2.msra.mxu0 %v900
          %1051 = vmatprep.mubr.f32.mxu0 %v843
          %1052 = vmatmul.mubr.f32.gmra.mxu0 %v842
          %v1053 = vpop.f32.mrf.mxu0
          %v1054 = vadd.f32 %v985, %v1053
          %v1055 = vpop.f32.mrf.mxu0
          %1056 = vmatprep.mubr.f32.mxu0 %v849
          %1057 = vmatmul.mubr.f32.gmra.mxu0 %v848
          %v1058 = vpop.f32.mrf.mxu0
          %v1059 = vadd.f32 %v985, %v1058
          %v1060 = vpop.f32.mrf.mxu0
          %1061 = vmatprep.mubr.f32.mxu0 %v855
          %1062 = vmatmul.mubr.f32.gmra.mxu0 %v854
          %v1063 = vpop.f32.mrf.mxu0
          %v1064 = vadd.f32 %v985, %v1063
          %v1065 = vpop.f32.mrf.mxu0
          %1066 = vmatprep.mubr.f32.mxu0 %v861
          %1067 = vmatmul.mubr.f32.gmra.mxu0 %v860
          %v1068 = vpop.f32.mrf.mxu0
          %v1069 = vadd.f32 %v985, %v1068
          %v1070 = vpop.f32.mrf.mxu0
          %1071 = vmatprep.mubr.f32.mxu0 %v867
          %1072 = vmatmul.mubr.f32.gmra.mxu0 %v866
          %v1073 = vpop.f32.mrf.mxu0
          %v1074 = vadd.f32 %v985, %v1073
          %v1075 = vpop.f32.mrf.mxu0
          %1076 = vmatprep.mubr.f32.mxu0 %v873
          %1077 = vmatmul.mubr.f32.gmra.mxu0 %v872
          %v1078 = vpop.f32.mrf.mxu0
          %v1079 = vadd.f32 %v985, %v1078
          %v1080 = vpop.f32.mrf.mxu0
          %1081 = vmatprep.mubr.f32.mxu0 %v879
          %1082 = vmatmul.mubr.f32.gmra.mxu0 %v878
          %v1083 = vpop.f32.mrf.mxu0
          %v1084 = vadd.f32 %v985, %v1083
          %v1085 = vpop.f32.mrf.mxu0
          %1086 = vdwg.mxu0
          %1087 = vmatprep.subr.mxu0 0.0
          %1088 = vmatpush1.msra.mxu0 %v931
          %1089 = vmatprep.subr.mxu0 0.0
          %1090 = vmatpush1.msra.mxu0 %v930
          %1091 = vmatprep.subr.mxu0 0.0
          %1092 = vmatpush1.msra.mxu0 %v929
          %1093 = vmatprep.subr.mxu0 0.0
          %1094 = vmatpush1.msra.mxu0 %v928
          %1095 = vmatprep.subr.mxu0 0.0
          %1096 = vmatpush1.msra.mxu0 %v927
          %1097 = vmatprep.subr.mxu0 0.0
          %1098 = vmatpush1.msra.mxu0 %v926
          %1099 = vmatprep.subr.mxu0 0.0
          %1100 = vmatpush1.msra.mxu0 %v925
          %1101 = vmatprep.subr.mxu0 0.0
          %1102 = vmatpush1.msra.mxu0 %v924
          %1103 = vmatprep.subr.mxu0 0.0
          %1104 = vmatpush1.msra.mxu0 %v923
          %1105 = vmatprep.subr.mxu0 0.0
          %1106 = vmatpush1.msra.mxu0 %v922
          %1107 = vmatprep.subr.mxu0 0.0
          %1108 = vmatpush1.msra.mxu0 %v921
          %1109 = vmatprep.subr.mxu0 0.0
          %1110 = vmatpush1.msra.mxu0 %v920
          %1111 = vmatprep.subr.mxu0 0.0
          %1112 = vmatpush1.msra.mxu0 %v919
          %1113 = vmatprep.subr.mxu0 0.0
          %1114 = vmatpush1.msra.mxu0 %v918
          %1115 = vmatprep.subr.mxu0 0.0
          %1116 = vmatpush1.msra.mxu0 %v917
          %1117 = vmatprep.subr.mxu0 0.0
          %1118 = vmatpush1.msra.mxu0 %v916
          %1119 = vmatprep.subr.mxu0 0.0
          %1120 = vmatpush2.msra.mxu0 %v947
          %1121 = vmatprep.subr.mxu0 0.0
          %1122 = vmatpush2.msra.mxu0 %v946
          %1123 = vmatprep.subr.mxu0 0.0
          %1124 = vmatpush2.msra.mxu0 %v945
          %1125 = vmatprep.subr.mxu0 0.0
          %1126 = vmatpush2.msra.mxu0 %v944
          %1127 = vmatprep.subr.mxu0 0.0
          %1128 = vmatpush2.msra.mxu0 %v943
          %1129 = vmatprep.subr.mxu0 0.0
          %1130 = vmatpush2.msra.mxu0 %v942
          %1131 = vmatprep.subr.mxu0 0.0
          %1132 = vmatpush2.msra.mxu0 %v941
          %1133 = vmatprep.subr.mxu0 0.0
          %1134 = vmatpush2.msra.mxu0 %v940
          %1135 = vmatprep.subr.mxu0 0.0
          %1136 = vmatpush2.msra.mxu0 %v939
          %1137 = vmatprep.subr.mxu0 0.0
          %1138 = vmatpush2.msra.mxu0 %v938
          %1139 = vmatprep.subr.mxu0 0.0
          %1140 = vmatpush2.msra.mxu0 %v937
          %1141 = vmatprep.subr.mxu0 0.0
          %1142 = vmatpush2.msra.mxu0 %v936
          %1143 = vmatprep.subr.mxu0 0.0
          %1144 = vmatpush2.msra.mxu0 %v935
          %1145 = vmatprep.subr.mxu0 0.0
          %1146 = vmatpush2.msra.mxu0 %v934
          %1147 = vmatprep.subr.mxu0 0.0
          %1148 = vmatpush2.msra.mxu0 %v933
          %1149 = vmatprep.subr.mxu0 0.0
          %1150 = vmatpush2.msra.mxu0 %v932
          %1151 = vmatprep.mubr.f32.mxu0 %v845
          %1152 = vmatmul.mubr.f32.gmra.mxu0 %v844
          %v1153 = vpop.f32.mrf.mxu0
          %v1154 = vadd.f32 %v1054, %v1153
          %v1155 = vpop.f32.mrf.mxu0
          %1156 = vmatprep.mubr.f32.mxu0 %v851
          %1157 = vmatmul.mubr.f32.gmra.mxu0 %v850
          %v1158 = vpop.f32.mrf.mxu0
          %v1159 = vadd.f32 %v1059, %v1158
          %v1160 = vpop.f32.mrf.mxu0
          %1161 = vmatprep.mubr.f32.mxu0 %v857
          %1162 = vmatmul.mubr.f32.gmra.mxu0 %v856
          %v1163 = vpop.f32.mrf.mxu0
          %v1164 = vadd.f32 %v1064, %v1163
          %v1165 = vpop.f32.mrf.mxu0
          %1166 = vmatprep.mubr.f32.mxu0 %v863
          %1167 = vmatmul.mubr.f32.gmra.mxu0 %v862
          %v1168 = vpop.f32.mrf.mxu0
          %v1169 = vadd.f32 %v1069, %v1168
          %v1170 = vpop.f32.mrf.mxu0
          %1171 = vmatprep.mubr.f32.mxu0 %v869
          %1172 = vmatmul.mubr.f32.gmra.mxu0 %v868
          %v1173 = vpop.f32.mrf.mxu0
          %v1174 = vadd.f32 %v1074, %v1173
          %v1175 = vpop.f32.mrf.mxu0
          %1176 = vmatprep.mubr.f32.mxu0 %v875
          %1177 = vmatmul.mubr.f32.gmra.mxu0 %v874
          %v1178 = vpop.f32.mrf.mxu0
          %v1179 = vadd.f32 %v1079, %v1178
          %v1180 = vpop.f32.mrf.mxu0
          %1181 = vmatprep.mubr.f32.mxu0 %v881
          %1182 = vmatmul.mubr.f32.gmra.mxu0 %v880
          %v1183 = vpop.f32.mrf.mxu0
          %v1184 = vadd.f32 %v1084, %v1183
          %v1185 = vpop.f32.mrf.mxu0
          %1186 = vdwg.mxu0
          %1187 = vmatprep.subr.mxu0 0.0
          %1188 = vmatpush1.msra.mxu0 %v963
          %1189 = vmatprep.subr.mxu0 0.0
          %1190 = vmatpush1.msra.mxu0 %v962
          %1191 = vmatprep.subr.mxu0 0.0
          %1192 = vmatpush1.msra.mxu0 %v961
          %1193 = vmatprep.subr.mxu0 0.0
          %1194 = vmatpush1.msra.mxu0 %v960
          %1195 = vmatprep.subr.mxu0 0.0
          %1196 = vmatpush1.msra.mxu0 %v959
          %1197 = vmatprep.subr.mxu0 0.0
          %1198 = vmatpush1.msra.mxu0 %v958
          %1199 = vmatprep.subr.mxu0 0.0
          %1200 = vmatpush1.msra.mxu0 %v957
          %1201 = vmatprep.subr.mxu0 0.0
          %1202 = vmatpush1.msra.mxu0 %v956
          %1203 = vmatprep.subr.mxu0 0.0
          %1204 = vmatpush1.msra.mxu0 %v955
          %1205 = vmatprep.subr.mxu0 0.0
          %1206 = vmatpush1.msra.mxu0 %v954
          %1207 = vmatprep.subr.mxu0 0.0
          %1208 = vmatpush1.msra.mxu0 %v953
          %1209 = vmatprep.subr.mxu0 0.0
          %1210 = vmatpush1.msra.mxu0 %v952
          %1211 = vmatprep.subr.mxu0 0.0
          %1212 = vmatpush1.msra.mxu0 %v951
          %1213 = vmatprep.subr.mxu0 0.0
          %1214 = vmatpush1.msra.mxu0 %v950
          %1215 = vmatprep.subr.mxu0 0.0
          %1216 = vmatpush1.msra.mxu0 %v949
          %1217 = vmatprep.subr.mxu0 0.0
          %1218 = vmatpush1.msra.mxu0 %v948
          %1219 = vmatprep.subr.mxu0 0.0
          %1220 = vmatpush2.msra.mxu0 %v979
          %1221 = vmatprep.subr.mxu0 0.0
          %1222 = vmatpush2.msra.mxu0 %v978
          %1223 = vmatprep.subr.mxu0 0.0
          %1224 = vmatpush2.msra.mxu0 %v977
          %1225 = vmatprep.subr.mxu0 0.0
          %1226 = vmatpush2.msra.mxu0 %v976
          %1227 = vmatprep.subr.mxu0 0.0
          %1228 = vmatpush2.msra.mxu0 %v975
          %1229 = vmatprep.subr.mxu0 0.0
          %1230 = vmatpush2.msra.mxu0 %v974
          %1231 = vmatprep.subr.mxu0 0.0
          %1232 = vmatpush2.msra.mxu0 %v973
          %1233 = vmatprep.subr.mxu0 0.0
          %1234 = vmatpush2.msra.mxu0 %v972
          %1235 = vmatprep.subr.mxu0 0.0
          %1236 = vmatpush2.msra.mxu0 %v971
          %1237 = vmatprep.subr.mxu0 0.0
          %1238 = vmatpush2.msra.mxu0 %v970
          %1239 = vmatprep.subr.mxu0 0.0
          %1240 = vmatpush2.msra.mxu0 %v969
          %1241 = vmatprep.subr.mxu0 0.0
          %1242 = vmatpush2.msra.mxu0 %v968
          %1243 = vmatprep.subr.mxu0 0.0
          %1244 = vmatpush2.msra.mxu0 %v967
          %1245 = vmatprep.subr.mxu0 0.0
          %1246 = vmatpush2.msra.mxu0 %v966
          %1247 = vmatprep.subr.mxu0 0.0
          %1248 = vmatpush2.msra.mxu0 %v965
          %1249 = vmatprep.subr.mxu0 0.0
          %1250 = vmatpush2.msra.mxu0 %v964
          %1251 = vmatprep.mubr.f32.mxu0 %v847
          %1252 = vmatmul.mubr.f32.gmra.mxu0 %v846
          %v1253 = vpop.f32.mrf.mxu0
          %v1254 = vadd.f32 %v1154, %v1253
          %v1255 = vpop.f32.mrf.mxu0
          %1256 = vmatprep.mubr.f32.mxu0 %v853
          %1257 = vmatmul.mubr.f32.gmra.mxu0 %v852
          %v1258 = vpop.f32.mrf.mxu0
          %v1259 = vadd.f32 %v1159, %v1258
          %v1260 = vpop.f32.mrf.mxu0
          %1261 = vmatprep.mubr.f32.mxu0 %v859
          %1262 = vmatmul.mubr.f32.gmra.mxu0 %v858
          %v1263 = vpop.f32.mrf.mxu0
          %v1264 = vadd.f32 %v1164, %v1263
          %v1265 = vpop.f32.mrf.mxu0
          %1266 = vmatprep.mubr.f32.mxu0 %v865
          %1267 = vmatmul.mubr.f32.gmra.mxu0 %v864
          %v1268 = vpop.f32.mrf.mxu0
          %v1269 = vadd.f32 %v1169, %v1268
          %v1270 = vpop.f32.mrf.mxu0
          %1271 = vmatprep.mubr.f32.mxu0 %v871
          %1272 = vmatmul.mubr.f32.gmra.mxu0 %v870
          %v1273 = vpop.f32.mrf.mxu0
          %v1274 = vadd.f32 %v1174, %v1273
          %v1275 = vpop.f32.mrf.mxu0
          %1276 = vmatprep.mubr.f32.mxu0 %v877
          %1277 = vmatmul.mubr.f32.gmra.mxu0 %v876
          %v1278 = vpop.f32.mrf.mxu0
          %v1279 = vadd.f32 %v1179, %v1278
          %v1280 = vpop.f32.mrf.mxu0
          %1281 = vmatprep.mubr.f32.mxu0 %v883
          %1282 = vmatmul.mubr.f32.gmra.mxu0 %v882
          %v1283 = vpop.f32.mrf.mxu0
          %v1284 = vadd.f32 %v1184, %v1283
          %v1285 = vpop.f32.mrf.mxu0
          %1286 = vdwg.mxu0
          %v1287 = vld [vmem:[%s5] sm:$0xff]
          %v1288 = vld [vmem:[%s5 + $0x8] sm:$0xff]
          %v1289 = vld [vmem:[%s5 + $0x10] sm:$0xff]
          %v1290 = vld [vmem:[%s5 + $0x18] sm:$0xff]
          %v1291 = vld [vmem:[%s5 + $0x20] sm:$0xff]
          %v1292 = vld [vmem:[%s5 + $0x28] sm:$0xff]
          %v1293 = vld [vmem:[%s5 + $0x30] sm:$0xff]
          %v1294 = vld [vmem:[%s5 + $0x38] sm:$0xff]
          %v1295 = vld [vmem:[%s5 + $0x40] sm:$0xff]
          %v1296 = vld [vmem:[%s5 + $0x48] sm:$0xff]
          %v1297 = vld [vmem:[%s5 + $0x50] sm:$0xff]
          %v1298 = vld [vmem:[%s5 + $0x58] sm:$0xff]
          %v1299 = vld [vmem:[%s5 + $0x60] sm:$0xff]
          %v1300 = vld [vmem:[%s5 + $0x68] sm:$0xff]
          %v1301 = vld [vmem:[%s5 + $0x70] sm:$0xff]
          %v1302 = vld [vmem:[%s5 + $0x78] sm:$0xff]
          %v1303 = vld [vmem:[%s5 + $0x80] sm:$0xff]
          %v1304 = vld [vmem:[%s5 + $0x88] sm:$0xff]
          %v1305 = vld [vmem:[%s5 + $0x90] sm:$0xff]
          %v1306 = vld [vmem:[%s5 + $0x98] sm:$0xff]
          %v1307 = vld [vmem:[%s5 + $0xa0] sm:$0xff]
          %v1308 = vld [vmem:[%s5 + $0xa8] sm:$0xff]
          %v1309 = vld [vmem:[%s5 + $0xb0] sm:$0xff]
          %v1310 = vld [vmem:[%s5 + $0xb8] sm:$0xff]
          %v1311 = vld [vmem:[%s5 + $0xc0] sm:$0xff]
          %v1312 = vld [vmem:[%s5 + $0xc8] sm:$0xff]
          %v1313 = vld [vmem:[%s5 + $0xd0] sm:$0xff]
          %v1314 = vld [vmem:[%s5 + $0xd8] sm:$0xff]
          %v1315 = vld [vmem:[%s5 + $0xe0] sm:$0xff]
          %v1316 = vld [vmem:[%s5 + $0xe8] sm:$0xff]
          %v1317 = vld [vmem:[%s5 + $0xf0] sm:$0xff]
          %v1318 = vld [vmem:[%s5 + $0xf8] sm:$0xff]
          %v1319 = vld [vmem:[%s5 + $0x100] sm:$0xff]
          %v1320 = vld [vmem:[%s5 + $0x108] sm:$0xff]
          %v1321 = vld [vmem:[%s5 + $0x110] sm:$0xff]
          %v1322 = vld [vmem:[%s5 + $0x118] sm:$0xff]
          %v1323 = vld [vmem:[%s5 + $0x120] sm:$0xff]
          %v1324 = vld [vmem:[%s5 + $0x128] sm:$0xff]
          %v1325 = vld [vmem:[%s5 + $0x130] sm:$0xff]
          %v1326 = vld [vmem:[%s5 + $0x138] sm:$0xff]
          %v1327 = vld [vmem:[%s5 + $0x140] sm:$0xff]
          %v1328 = vld [vmem:[%s5 + $0x148] sm:$0xff]
          %v1329 = vld [vmem:[%s5 + $0x150] sm:$0xff]
          %v1330 = vld [vmem:[%s5 + $0x158] sm:$0xff]
          %v1331 = vld [vmem:[%s5 + $0x160] sm:$0xff]
          %v1332 = vld [vmem:[%s5 + $0x168] sm:$0xff]
          %v1333 = vld [vmem:[%s5 + $0x170] sm:$0xff]
          %v1334 = vld [vmem:[%s5 + $0x178] sm:$0xff]
          %v1335 = vld [vmem:[%s5 + $0x180] sm:$0xff]
          %v1336 = vld [vmem:[%s5 + $0x188] sm:$0xff]
          %v1337 = vld [vmem:[%s5 + $0x190] sm:$0xff]
          %v1338 = vld [vmem:[%s5 + $0x198] sm:$0xff]
          %v1339 = vld [vmem:[%s5 + $0x1a0] sm:$0xff]
          %v1340 = vld [vmem:[%s5 + $0x1a8] sm:$0xff]
          %v1341 = vld [vmem:[%s5 + $0x1b0] sm:$0xff]
          %v1342 = vld [vmem:[%s5 + $0x1b8] sm:$0xff]
          %v1343 = vld [vmem:[%s5 + $0x1c0] sm:$0xff]
          %v1344 = vld [vmem:[%s5 + $0x1c8] sm:$0xff]
          %v1345 = vld [vmem:[%s5 + $0x1d0] sm:$0xff]
          %v1346 = vld [vmem:[%s5 + $0x1d8] sm:$0xff]
          %v1347 = vld [vmem:[%s5 + $0x1e0] sm:$0xff]
          %v1348 = vld [vmem:[%s5 + $0x1e8] sm:$0xff]
          %v1349 = vld [vmem:[%s5 + $0x1f0] sm:$0xff]
          %v1350 = vld [vmem:[%s5 + $0x1f8] sm:$0xff]
          %v1351 = vld [vmem:[%s5 + $0x200] sm:$0xff]
          %v1352 = vld [vmem:[%s5 + $0x208] sm:$0xff]
          %v1353 = vld [vmem:[%s5 + $0x210] sm:$0xff]
          %v1354 = vld [vmem:[%s5 + $0x218] sm:$0xff]
          %v1355 = vld [vmem:[%s5 + $0x220] sm:$0xff]
          %v1356 = vld [vmem:[%s5 + $0x228] sm:$0xff]
          %v1357 = vld [vmem:[%s5 + $0x230] sm:$0xff]
          %v1358 = vld [vmem:[%s5 + $0x238] sm:$0xff]
          %v1359 = vld [vmem:[%s5 + $0x240] sm:$0xff]
          %v1360 = vld [vmem:[%s5 + $0x248] sm:$0xff]
          %v1361 = vld [vmem:[%s5 + $0x250] sm:$0xff]
          %v1362 = vld [vmem:[%s5 + $0x258] sm:$0xff]
          %v1363 = vld [vmem:[%s5 + $0x260] sm:$0xff]
          %v1364 = vld [vmem:[%s5 + $0x268] sm:$0xff]
          %v1365 = vld [vmem:[%s5 + $0x270] sm:$0xff]
          %v1366 = vld [vmem:[%s5 + $0x278] sm:$0xff]
          %v1367 = vld [vmem:[%s5 + $0x280] sm:$0xff]
          %v1368 = vld [vmem:[%s5 + $0x288] sm:$0xff]
          %v1369 = vld [vmem:[%s5 + $0x290] sm:$0xff]
          %v1370 = vld [vmem:[%s5 + $0x298] sm:$0xff]
          %v1371 = vld [vmem:[%s5 + $0x2a0] sm:$0xff]
          %v1372 = vld [vmem:[%s5 + $0x2a8] sm:$0xff]
          %v1373 = vld [vmem:[%s5 + $0x2b0] sm:$0xff]
          %v1374 = vld [vmem:[%s5 + $0x2b8] sm:$0xff]
          %v1375 = vld [vmem:[%s5 + $0x2c0] sm:$0xff]
          %v1376 = vld [vmem:[%s5 + $0x2c8] sm:$0xff]
          %v1377 = vld [vmem:[%s5 + $0x2d0] sm:$0xff]
          %v1378 = vld [vmem:[%s5 + $0x2d8] sm:$0xff]
          %v1379 = vld [vmem:[%s5 + $0x2e0] sm:$0xff]
          %v1380 = vld [vmem:[%s5 + $0x2e8] sm:$0xff]
          %v1381 = vld [vmem:[%s5 + $0x2f0] sm:$0xff]
          %v1382 = vld [vmem:[%s5 + $0x2f8] sm:$0xff]
          %v1383 = vld [vmem:[%s6] sm:$0x1]
          %v1385 = vlaneseq
          %v1386 = vshrl.u32 %v1385, 7
          %v1387 = vsub.s32 0, %v1386
          %v1388 = vrot.slane %v1383, %v1387
          %1390 = vmatprep.subr.mxu0 0.0
          %1391 = vmatpush1.msra.mxu0 %v1302
          %1392 = vmatprep.subr.mxu0 0.0
          %1393 = vmatpush1.msra.mxu0 %v1301
          %1394 = vmatprep.subr.mxu0 0.0
          %1395 = vmatpush1.msra.mxu0 %v1300
          %1396 = vmatprep.subr.mxu0 0.0
          %1397 = vmatpush1.msra.mxu0 %v1299
          %1398 = vmatprep.subr.mxu0 0.0
          %1399 = vmatpush1.msra.mxu0 %v1298
          %1400 = vmatprep.subr.mxu0 0.0
          %1401 = vmatpush1.msra.mxu0 %v1297
          %1402 = vmatprep.subr.mxu0 0.0
          %1403 = vmatpush1.msra.mxu0 %v1296
          %1404 = vmatprep.subr.mxu0 0.0
          %1405 = vmatpush1.msra.mxu0 %v1295
          %1406 = vmatprep.subr.mxu0 0.0
          %1407 = vmatpush1.msra.mxu0 %v1294
          %1408 = vmatprep.subr.mxu0 0.0
          %1409 = vmatpush1.msra.mxu0 %v1293
          %1410 = vmatprep.subr.mxu0 0.0
          %1411 = vmatpush1.msra.mxu0 %v1292
          %1412 = vmatprep.subr.mxu0 0.0
          %1413 = vmatpush1.msra.mxu0 %v1291
          %1414 = vmatprep.subr.mxu0 0.0
          %1415 = vmatpush1.msra.mxu0 %v1290
          %1416 = vmatprep.subr.mxu0 0.0
          %1417 = vmatpush1.msra.mxu0 %v1289
          %1418 = vmatprep.subr.mxu0 0.0
          %1419 = vmatpush1.msra.mxu0 %v1288
          %1420 = vmatprep.subr.mxu0 0.0
          %1421 = vmatpush1.msra.mxu0 %v1287
          %1422 = vmatprep.subr.mxu0 0.0
          %1423 = vmatpush2.msra.mxu0 %v1318
          %1424 = vmatprep.subr.mxu0 0.0
          %1425 = vmatpush2.msra.mxu0 %v1317
          %1426 = vmatprep.subr.mxu0 0.0
          %1427 = vmatpush2.msra.mxu0 %v1316
          %1428 = vmatprep.subr.mxu0 0.0
          %1429 = vmatpush2.msra.mxu0 %v1315
          %1430 = vmatprep.subr.mxu0 0.0
          %1431 = vmatpush2.msra.mxu0 %v1314
          %1432 = vmatprep.subr.mxu0 0.0
          %1433 = vmatpush2.msra.mxu0 %v1313
          %1434 = vmatprep.subr.mxu0 0.0
          %1435 = vmatpush2.msra.mxu0 %v1312
          %1436 = vmatprep.subr.mxu0 0.0
          %1437 = vmatpush2.msra.mxu0 %v1311
          %1438 = vmatprep.subr.mxu0 0.0
          %1439 = vmatpush2.msra.mxu0 %v1310
          %1440 = vmatprep.subr.mxu0 0.0
          %1441 = vmatpush2.msra.mxu0 %v1309
          %1442 = vmatprep.subr.mxu0 0.0
          %1443 = vmatpush2.msra.mxu0 %v1308
          %1444 = vmatprep.subr.mxu0 0.0
          %1445 = vmatpush2.msra.mxu0 %v1307
          %1446 = vmatprep.subr.mxu0 0.0
          %1447 = vmatpush2.msra.mxu0 %v1306
          %1448 = vmatprep.subr.mxu0 0.0
          %1449 = vmatpush2.msra.mxu0 %v1305
          %1450 = vmatprep.subr.mxu0 0.0
          %1451 = vmatpush2.msra.mxu0 %v1304
          %1452 = vmatprep.subr.mxu0 0.0
          %1453 = vmatpush2.msra.mxu0 %v1303
          %1454 = vmatprep.mubr.f32.mxu0 %v843
          %1455 = vmatmul.mubr.f32.gmra.mxu0 %v842
          %v1456 = vpop.f32.mrf.mxu0
          %v1457 = vadd.f32 %v1388, %v1456
          %v1458 = vpop.f32.mrf.mxu0
          %1459 = vmatprep.mubr.f32.mxu0 %v849
          %1460 = vmatmul.mubr.f32.gmra.mxu0 %v848
          %v1461 = vpop.f32.mrf.mxu0
          %v1462 = vadd.f32 %v1388, %v1461
          %v1463 = vpop.f32.mrf.mxu0
          %1464 = vmatprep.mubr.f32.mxu0 %v855
          %1465 = vmatmul.mubr.f32.gmra.mxu0 %v854
          %v1466 = vpop.f32.mrf.mxu0
          %v1467 = vadd.f32 %v1388, %v1466
          %v1468 = vpop.f32.mrf.mxu0
          %1469 = vmatprep.mubr.f32.mxu0 %v861
          %1470 = vmatmul.mubr.f32.gmra.mxu0 %v860
          %v1471 = vpop.f32.mrf.mxu0
          %v1472 = vadd.f32 %v1388, %v1471
          %v1473 = vpop.f32.mrf.mxu0
          %1474 = vmatprep.mubr.f32.mxu0 %v867
          %1475 = vmatmul.mubr.f32.gmra.mxu0 %v866
          %v1476 = vpop.f32.mrf.mxu0
          %v1477 = vadd.f32 %v1388, %v1476
          %v1478 = vpop.f32.mrf.mxu0
          %1479 = vmatprep.mubr.f32.mxu0 %v873
          %1480 = vmatmul.mubr.f32.gmra.mxu0 %v872
          %v1481 = vpop.f32.mrf.mxu0
          %v1482 = vadd.f32 %v1388, %v1481
          %v1483 = vpop.f32.mrf.mxu0
          %1484 = vmatprep.mubr.f32.mxu0 %v879
          %1485 = vmatmul.mubr.f32.gmra.mxu0 %v878
          %v1486 = vpop.f32.mrf.mxu0
          %v1487 = vadd.f32 %v1388, %v1486
          %v1488 = vpop.f32.mrf.mxu0
          %1489 = vdwg.mxu0
          %1490 = vmatprep.subr.mxu0 0.0
          %1491 = vmatpush1.msra.mxu0 %v1334
          %1492 = vmatprep.subr.mxu0 0.0
          %1493 = vmatpush1.msra.mxu0 %v1333
          %1494 = vmatprep.subr.mxu0 0.0
          %1495 = vmatpush1.msra.mxu0 %v1332
          %1496 = vmatprep.subr.mxu0 0.0
          %1497 = vmatpush1.msra.mxu0 %v1331
          %1498 = vmatprep.subr.mxu0 0.0
          %1499 = vmatpush1.msra.mxu0 %v1330
          %1500 = vmatprep.subr.mxu0 0.0
          %1501 = vmatpush1.msra.mxu0 %v1329
          %1502 = vmatprep.subr.mxu0 0.0
          %1503 = vmatpush1.msra.mxu0 %v1328
          %1504 = vmatprep.subr.mxu0 0.0
          %1505 = vmatpush1.msra.mxu0 %v1327
          %1506 = vmatprep.subr.mxu0 0.0
          %1507 = vmatpush1.msra.mxu0 %v1326
          %1508 = vmatprep.subr.mxu0 0.0
          %1509 = vmatpush1.msra.mxu0 %v1325
          %1510 = vmatprep.subr.mxu0 0.0
          %1511 = vmatpush1.msra.mxu0 %v1324
          %1512 = vmatprep.subr.mxu0 0.0
          %1513 = vmatpush1.msra.mxu0 %v1323
          %1514 = vmatprep.subr.mxu0 0.0
          %1515 = vmatpush1.msra.mxu0 %v1322
          %1516 = vmatprep.subr.mxu0 0.0
          %1517 = vmatpush1.msra.mxu0 %v1321
          %1518 = vmatprep.subr.mxu0 0.0
          %1519 = vmatpush1.msra.mxu0 %v1320
          %1520 = vmatprep.subr.mxu0 0.0
          %1521 = vmatpush1.msra.mxu0 %v1319
          %1522 = vmatprep.subr.mxu0 0.0
          %1523 = vmatpush2.msra.mxu0 %v1350
          %1524 = vmatprep.subr.mxu0 0.0
          %1525 = vmatpush2.msra.mxu0 %v1349
          %1526 = vmatprep.subr.mxu0 0.0
          %1527 = vmatpush2.msra.mxu0 %v1348
          %1528 = vmatprep.subr.mxu0 0.0
          %1529 = vmatpush2.msra.mxu0 %v1347
          %1530 = vmatprep.subr.mxu0 0.0
          %1531 = vmatpush2.msra.mxu0 %v1346
          %1532 = vmatprep.subr.mxu0 0.0
          %1533 = vmatpush2.msra.mxu0 %v1345
          %1534 = vmatprep.subr.mxu0 0.0
          %1535 = vmatpush2.msra.mxu0 %v1344
          %1536 = vmatprep.subr.mxu0 0.0
          %1537 = vmatpush2.msra.mxu0 %v1343
          %1538 = vmatprep.subr.mxu0 0.0
          %1539 = vmatpush2.msra.mxu0 %v1342
          %1540 = vmatprep.subr.mxu0 0.0
          %1541 = vmatpush2.msra.mxu0 %v1341
          %1542 = vmatprep.subr.mxu0 0.0
          %1543 = vmatpush2.msra.mxu0 %v1340
          %1544 = vmatprep.subr.mxu0 0.0
          %1545 = vmatpush2.msra.mxu0 %v1339
          %1546 = vmatprep.subr.mxu0 0.0
          %1547 = vmatpush2.msra.mxu0 %v1338
          %1548 = vmatprep.subr.mxu0 0.0
          %1549 = vmatpush2.msra.mxu0 %v1337
          %1550 = vmatprep.subr.mxu0 0.0
          %1551 = vmatpush2.msra.mxu0 %v1336
          %1552 = vmatprep.subr.mxu0 0.0
          %1553 = vmatpush2.msra.mxu0 %v1335
          %1554 = vmatprep.mubr.f32.mxu0 %v845
          %1555 = vmatmul.mubr.f32.gmra.mxu0 %v844
          %v1556 = vpop.f32.mrf.mxu0
          %v1557 = vadd.f32 %v1457, %v1556
          %v1558 = vpop.f32.mrf.mxu0
          %1559 = vmatprep.mubr.f32.mxu0 %v851
          %1560 = vmatmul.mubr.f32.gmra.mxu0 %v850
          %v1561 = vpop.f32.mrf.mxu0
          %v1562 = vadd.f32 %v1462, %v1561
          %v1563 = vpop.f32.mrf.mxu0
          %1564 = vmatprep.mubr.f32.mxu0 %v857
          %1565 = vmatmul.mubr.f32.gmra.mxu0 %v856
          %v1566 = vpop.f32.mrf.mxu0
          %v1567 = vadd.f32 %v1467, %v1566
          %v1568 = vpop.f32.mrf.mxu0
          %1569 = vmatprep.mubr.f32.mxu0 %v863
          %1570 = vmatmul.mubr.f32.gmra.mxu0 %v862
          %v1571 = vpop.f32.mrf.mxu0
          %v1572 = vadd.f32 %v1472, %v1571
          %v1573 = vpop.f32.mrf.mxu0
          %1574 = vmatprep.mubr.f32.mxu0 %v869
          %1575 = vmatmul.mubr.f32.gmra.mxu0 %v868
          %v1576 = vpop.f32.mrf.mxu0
          %v1577 = vadd.f32 %v1477, %v1576
          %v1578 = vpop.f32.mrf.mxu0
          %1579 = vmatprep.mubr.f32.mxu0 %v875
          %1580 = vmatmul.mubr.f32.gmra.mxu0 %v874
          %v1581 = vpop.f32.mrf.mxu0
          %v1582 = vadd.f32 %v1482, %v1581
          %v1583 = vpop.f32.mrf.mxu0
          %1584 = vmatprep.mubr.f32.mxu0 %v881
          %1585 = vmatmul.mubr.f32.gmra.mxu0 %v880
          %v1586 = vpop.f32.mrf.mxu0
          %v1587 = vadd.f32 %v1487, %v1586
          %v1588 = vpop.f32.mrf.mxu0
          %1589 = vdwg.mxu0
          %1590 = vmatprep.subr.mxu0 0.0
          %1591 = vmatpush1.msra.mxu0 %v1366
          %1592 = vmatprep.subr.mxu0 0.0
          %1593 = vmatpush1.msra.mxu0 %v1365
          %1594 = vmatprep.subr.mxu0 0.0
          %1595 = vmatpush1.msra.mxu0 %v1364
          %1596 = vmatprep.subr.mxu0 0.0
          %1597 = vmatpush1.msra.mxu0 %v1363
          %1598 = vmatprep.subr.mxu0 0.0
          %1599 = vmatpush1.msra.mxu0 %v1362
          %1600 = vmatprep.subr.mxu0 0.0
          %1601 = vmatpush1.msra.mxu0 %v1361
          %1602 = vmatprep.subr.mxu0 0.0
          %1603 = vmatpush1.msra.mxu0 %v1360
          %1604 = vmatprep.subr.mxu0 0.0
          %1605 = vmatpush1.msra.mxu0 %v1359
          %1606 = vmatprep.subr.mxu0 0.0
          %1607 = vmatpush1.msra.mxu0 %v1358
          %1608 = vmatprep.subr.mxu0 0.0
          %1609 = vmatpush1.msra.mxu0 %v1357
          %1610 = vmatprep.subr.mxu0 0.0
          %1611 = vmatpush1.msra.mxu0 %v1356
          %1612 = vmatprep.subr.mxu0 0.0
          %1613 = vmatpush1.msra.mxu0 %v1355
          %1614 = vmatprep.subr.mxu0 0.0
          %1615 = vmatpush1.msra.mxu0 %v1354
          %1616 = vmatprep.subr.mxu0 0.0
          %1617 = vmatpush1.msra.mxu0 %v1353
          %1618 = vmatprep.subr.mxu0 0.0
          %1619 = vmatpush1.msra.mxu0 %v1352
          %1620 = vmatprep.subr.mxu0 0.0
          %1621 = vmatpush1.msra.mxu0 %v1351
          %1622 = vmatprep.subr.mxu0 0.0
          %1623 = vmatpush2.msra.mxu0 %v1382
          %1624 = vmatprep.subr.mxu0 0.0
          %1625 = vmatpush2.msra.mxu0 %v1381
          %1626 = vmatprep.subr.mxu0 0.0
          %1627 = vmatpush2.msra.mxu0 %v1380
          %1628 = vmatprep.subr.mxu0 0.0
          %1629 = vmatpush2.msra.mxu0 %v1379
          %1630 = vmatprep.subr.mxu0 0.0
          %1631 = vmatpush2.msra.mxu0 %v1378
          %1632 = vmatprep.subr.mxu0 0.0
          %1633 = vmatpush2.msra.mxu0 %v1377
          %1634 = vmatprep.subr.mxu0 0.0
          %1635 = vmatpush2.msra.mxu0 %v1376
          %1636 = vmatprep.subr.mxu0 0.0
          %1637 = vmatpush2.msra.mxu0 %v1375
          %1638 = vmatprep.subr.mxu0 0.0
          %1639 = vmatpush2.msra.mxu0 %v1374
          %1640 = vmatprep.subr.mxu0 0.0
          %1641 = vmatpush2.msra.mxu0 %v1373
          %1642 = vmatprep.subr.mxu0 0.0
          %1643 = vmatpush2.msra.mxu0 %v1372
          %1644 = vmatprep.subr.mxu0 0.0
          %1645 = vmatpush2.msra.mxu0 %v1371
          %1646 = vmatprep.subr.mxu0 0.0
          %1647 = vmatpush2.msra.mxu0 %v1370
          %1648 = vmatprep.subr.mxu0 0.0
          %1649 = vmatpush2.msra.mxu0 %v1369
          %1650 = vmatprep.subr.mxu0 0.0
          %1651 = vmatpush2.msra.mxu0 %v1368
          %1652 = vmatprep.subr.mxu0 0.0
          %1653 = vmatpush2.msra.mxu0 %v1367
          %1654 = vmatprep.mubr.f32.mxu0 %v847
          %1655 = vmatmul.mubr.f32.gmra.mxu0 %v846
          %v1656 = vpop.f32.mrf.mxu0
          %v1657 = vadd.f32 %v1557, %v1656
          %v1658 = vpop.f32.mrf.mxu0
          %1659 = vmatprep.mubr.f32.mxu0 %v853
          %1660 = vmatmul.mubr.f32.gmra.mxu0 %v852
          %v1661 = vpop.f32.mrf.mxu0
          %v1662 = vadd.f32 %v1562, %v1661
          %v1663 = vpop.f32.mrf.mxu0
          %1664 = vmatprep.mubr.f32.mxu0 %v859
          %1665 = vmatmul.mubr.f32.gmra.mxu0 %v858
          %v1666 = vpop.f32.mrf.mxu0
          %v1667 = vadd.f32 %v1567, %v1666
          %v1668 = vpop.f32.mrf.mxu0
          %1669 = vmatprep.mubr.f32.mxu0 %v865
          %1670 = vmatmul.mubr.f32.gmra.mxu0 %v864
          %v1671 = vpop.f32.mrf.mxu0
          %v1672 = vadd.f32 %v1572, %v1671
          %v1673 = vpop.f32.mrf.mxu0
          %1674 = vmatprep.mubr.f32.mxu0 %v871
          %1675 = vmatmul.mubr.f32.gmra.mxu0 %v870
          %v1676 = vpop.f32.mrf.mxu0
          %v1677 = vadd.f32 %v1577, %v1676
          %v1678 = vpop.f32.mrf.mxu0
          %1679 = vmatprep.mubr.f32.mxu0 %v877
          %1680 = vmatmul.mubr.f32.gmra.mxu0 %v876
          %v1681 = vpop.f32.mrf.mxu0
          %v1682 = vadd.f32 %v1582, %v1681
          %v1683 = vpop.f32.mrf.mxu0
          %1684 = vmatprep.mubr.f32.mxu0 %v883
          %1685 = vmatmul.mubr.f32.gmra.mxu0 %v882
          %v1686 = vpop.f32.mrf.mxu0
          %v1687 = vadd.f32 %v1587, %v1686
          %v1688 = vpop.f32.mrf.mxu0
          %1689 = vdwg.mxu0
          %v1690 = vmul.f32 %v1254, 0.20412415
          %v1691 = vmul.f32 %v1259, 0.20412415
          %v1692 = vmul.f32 %v1264, 0.20412415
          %v1693 = vmul.f32 %v1269, 0.20412415
          %v1694 = vmul.f32 %v1274, 0.20412415
          %v1695 = vmul.f32 %v1279, 0.20412415
          %v1696 = vmul.f32 %v1284, 0.20412415
          %vm1697 = vcmask 195584
          %1698 = vst.msk [vmem:[#allocation2] sm:$0xff] %vm1697, %v1690
          %1699 = vst.msk [vmem:[#allocation2 + $0x8] sm:$0xff] %vm1697, %v1691
          %1700 = vst.msk [vmem:[#allocation2 + $0x10] sm:$0xff] %vm1697, %v1692
          %1701 = vst.msk [vmem:[#allocation2 + $0x18] sm:$0xff] %vm1697, %v1693
          %1702 = vst.msk [vmem:[#allocation2 + $0x20] sm:$0xff] %vm1697, %v1694
          %1703 = vst.msk [vmem:[#allocation2 + $0x28] sm:$0xff] %vm1697, %v1695
          %vm1704 = vcmask 188416
          %1705 = vst.msk [vmem:[#allocation2 + $0x30] sm:$0x1] %vm1704, %v1696
          %1706 = vst.msk [vmem:[#allocation3] sm:$0xff] %vm1697, %v1657
          %1707 = vst.msk [vmem:[#allocation3 + $0x8] sm:$0xff] %vm1697, %v1662
          %1708 = vst.msk [vmem:[#allocation3 + $0x10] sm:$0xff] %vm1697, %v1667
          %1709 = vst.msk [vmem:[#allocation3 + $0x18] sm:$0xff] %vm1697, %v1672
          %1710 = vst.msk [vmem:[#allocation3 + $0x20] sm:$0xff] %vm1697, %v1677
          %1711 = vst.msk [vmem:[#allocation3 + $0x28] sm:$0xff] %vm1697, %v1682
          %1712 = vst.msk [vmem:[#allocation3 + $0x30] sm:$0x1] %vm1704, %v1687
        $region118: #{tpu_custom_call.1} parent=109 // pred_fallthru
          _
        %v1713 = vld [vmem:[%s759] sm:$0xff]
        %v1714 = vld [vmem:[%s759 + $0x8] sm:$0xff]
        %v1715 = vld [vmem:[%s759 + $0x10] sm:$0xff]
        %v1716 = vld [vmem:[%s759 + $0x18] sm:$0xff]
        %v1717 = vld [vmem:[%s759 + $0x20] sm:$0xff]
        %v1718 = vld [vmem:[%s759 + $0x28] sm:$0xff]
        %v1719 = vld [vmem:[%s759 + $0x30] sm:$0xff]
        %v1720 = vld [vmem:[%s759 + $0x38] sm:$0xff]
        %v1721 = vld [vmem:[%s759 + $0x40] sm:$0xff]
        %v1722 = vld [vmem:[%s759 + $0x48] sm:$0xff]
        %v1723 = vld [vmem:[%s759 + $0x50] sm:$0xff]
        %v1724 = vld [vmem:[%s759 + $0x58] sm:$0xff]
        %v1725 = vld [vmem:[#allocation2] sm:$0xff]
        %v1726 = vld [vmem:[#allocation2 + $0x8] sm:$0xff]
        %v1727 = vld [vmem:[#allocation2 + $0x10] sm:$0xff]
        %v1728 = vld [vmem:[#allocation2 + $0x18] sm:$0xff]
        %v1729 = vld [vmem:[#allocation2 + $0x20] sm:$0xff]
        %v1730 = vld [vmem:[#allocation2 + $0x28] sm:$0xff]
        %v1731 = vld [vmem:[#allocation2 + $0x30] sm:$0x1]
        %vm1732 = vcmask 195584
        %v1734 = vsel %vm1732, %v1725, 0
        %v1737 = vsel %vm1732, %v1726, 0
        %v1740 = vsel %vm1732, %v1727, 0
        %v1743 = vsel %vm1732, %v1728, 0
        %v1746 = vsel %vm1732, %v1729, 0
        %v1749 = vsel %vm1732, %v1730, 0
        %v1752 = vsel %vm1732, %v1731, 0
        %1754 = vmatprep.subr.mxu0 0.0
        %1755 = vmatpush1.msra.mxu0 0.0
        %1756 = vmatprep.subr.mxu0 0.0
        %1757 = vmatpush1.msra.mxu0 0.0
        %1758 = vmatprep.subr.mxu0 0.0
        %1759 = vmatpush1.msra.mxu0 0.0
        %1760 = vmatprep.subr.mxu0 0.0
        %1761 = vmatpush1.msra.mxu0 0.0
        %1762 = vmatprep.subr.mxu0 0.0
        %1763 = vmatpush1.msra.mxu0 0.0
        %1764 = vmatprep.subr.mxu0 0.0
        %1765 = vmatpush1.msra.mxu0 0.0
        %1766 = vmatprep.subr.mxu0 0.0
        %1767 = vmatpush1.msra.mxu0 0.0
        %1768 = vmatprep.subr.mxu0 0.0
        %1769 = vmatpush1.msra.mxu0 0.0
        %1770 = vmatprep.subr.mxu0 0.0
        %1771 = vmatpush1.msra.mxu0 0.0
        %1772 = vmatprep.subr.mxu0 0.0
        %1773 = vmatpush1.msra.mxu0 0.0
        %1774 = vmatprep.subr.mxu0 0.0
        %1775 = vmatpush1.msra.mxu0 0.0
        %1776 = vmatprep.subr.mxu0 0.0
        %1777 = vmatpush1.msra.mxu0 0.0
        %1778 = vmatprep.subr.mxu0 0.0
        %1779 = vmatpush1.msra.mxu0 0.0
        %1780 = vmatprep.subr.mxu0 %v1722
        %1781 = vmatpush1.msra.mxu0 %v1721
        %1782 = vmatprep.subr.mxu0 %v1718
        %1783 = vmatpush1.msra.mxu0 %v1717
        %1784 = vmatprep.subr.mxu0 %v1714
        %1785 = vmatpush1.msra.mxu0 %v1713
        %1786 = vmatprep.subr.mxu0 0.0
        %1787 = vmatpush2.msra.mxu0 0.0
        %1788 = vmatprep.subr.mxu0 0.0
        %1789 = vmatpush2.msra.mxu0 0.0
        %1790 = vmatprep.subr.mxu0 0.0
        %1791 = vmatpush2.msra.mxu0 0.0
        %1792 = vmatprep.subr.mxu0 0.0
        %1793 = vmatpush2.msra.mxu0 0.0
        %1794 = vmatprep.subr.mxu0 0.0
        %1795 = vmatpush2.msra.mxu0 0.0
        %1796 = vmatprep.subr.mxu0 0.0
        %1797 = vmatpush2.msra.mxu0 0.0
        %1798 = vmatprep.subr.mxu0 0.0
        %1799 = vmatpush2.msra.mxu0 0.0
        %1800 = vmatprep.subr.mxu0 0.0
        %1801 = vmatpush2.msra.mxu0 0.0
        %1802 = vmatprep.subr.mxu0 0.0
        %1803 = vmatpush2.msra.mxu0 0.0
        %1804 = vmatprep.subr.mxu0 0.0
        %1805 = vmatpush2.msra.mxu0 0.0
        %1806 = vmatprep.subr.mxu0 0.0
        %1807 = vmatpush2.msra.mxu0 0.0
        %1808 = vmatprep.subr.mxu0 0.0
        %1809 = vmatpush2.msra.mxu0 0.0
        %1810 = vmatprep.subr.mxu0 0.0
        %1811 = vmatpush2.msra.mxu0 0.0
        %1812 = vmatprep.subr.mxu0 0.0
        %1813 = vmatpush2.msra.mxu0 0.0
        %1814 = vmatprep.subr.mxu0 0.0
        %1815 = vmatpush2.msra.mxu0 0.0
        %1816 = vmatprep.subr.mxu0 0.0
        %1817 = vmatpush2.msra.mxu0 0.0
        %1818 = vmatprep.mubr.f32.mxu0 0.0
        %1819 = vmatmul.mubr.f32.gmra.mxu0 %v1734
        %v1820 = vpop.f32.mrf.mxu0
        %v1821 = vadd.f32 0.0, %v1820
        %v1822 = vpop.f32.mrf.mxu0
        %v1823 = vadd.f32 0.0, %v1822
        %1824 = vmatprep.mubr.f32.mxu0 0.0
        %1825 = vmatmul.mubr.f32.gmra.mxu0 %v1737
        %v1826 = vpop.f32.mrf.mxu0
        %v1827 = vadd.f32 0.0, %v1826
        %v1828 = vpop.f32.mrf.mxu0
        %v1829 = vadd.f32 0.0, %v1828
        %1830 = vmatprep.mubr.f32.mxu0 0.0
        %1831 = vmatmul.mubr.f32.gmra.mxu0 %v1740
        %v1832 = vpop.f32.mrf.mxu0
        %v1833 = vadd.f32 0.0, %v1832
        %v1834 = vpop.f32.mrf.mxu0
        %v1835 = vadd.f32 0.0, %v1834
        %1836 = vmatprep.mubr.f32.mxu0 0.0
        %1837 = vmatmul.mubr.f32.gmra.mxu0 %v1743
        %v1838 = vpop.f32.mrf.mxu0
        %v1839 = vadd.f32 0.0, %v1838
        %v1840 = vpop.f32.mrf.mxu0
        %v1841 = vadd.f32 0.0, %v1840
        %1842 = vmatprep.mubr.f32.mxu0 0.0
        %1843 = vmatmul.mubr.f32.gmra.mxu0 %v1746
        %v1844 = vpop.f32.mrf.mxu0
        %v1845 = vadd.f32 0.0, %v1844
        %v1846 = vpop.f32.mrf.mxu0
        %v1847 = vadd.f32 0.0, %v1846
        %1848 = vmatprep.mubr.f32.mxu0 0.0
        %1849 = vmatmul.mubr.f32.gmra.mxu0 %v1749
        %v1850 = vpop.f32.mrf.mxu0
        %v1851 = vadd.f32 0.0, %v1850
        %v1852 = vpop.f32.mrf.mxu0
        %v1853 = vadd.f32 0.0, %v1852
        %1854 = vmatprep.mubr.f32.mxu0 0.0
        %1855 = vmatmul.mubr.f32.gmra.mxu0 %v1752
        %v1856 = vpop.f32.mrf.mxu0
        %v1857 = vadd.f32 0.0, %v1856
        %v1858 = vpop.f32.mrf.mxu0
        %v1859 = vadd.f32 0.0, %v1858
        %1860 = vdwg.mxu0
        %1861 = vmatprep.subr.mxu0 0.0
        %1862 = vmatpush1.msra.mxu0 0.0
        %1863 = vmatprep.subr.mxu0 0.0
        %1864 = vmatpush1.msra.mxu0 0.0
        %1865 = vmatprep.subr.mxu0 0.0
        %1866 = vmatpush1.msra.mxu0 0.0
        %1867 = vmatprep.subr.mxu0 0.0
        %1868 = vmatpush1.msra.mxu0 0.0
        %1869 = vmatprep.subr.mxu0 0.0
        %1870 = vmatpush1.msra.mxu0 0.0
        %1871 = vmatprep.subr.mxu0 0.0
        %1872 = vmatpush1.msra.mxu0 0.0
        %1873 = vmatprep.subr.mxu0 0.0
        %1874 = vmatpush1.msra.mxu0 0.0
        %1875 = vmatprep.subr.mxu0 0.0
        %1876 = vmatpush1.msra.mxu0 0.0
        %1877 = vmatprep.subr.mxu0 0.0
        %1878 = vmatpush1.msra.mxu0 0.0
        %1879 = vmatprep.subr.mxu0 0.0
        %1880 = vmatpush1.msra.mxu0 0.0
        %1881 = vmatprep.subr.mxu0 0.0
        %1882 = vmatpush1.msra.mxu0 0.0
        %1883 = vmatprep.subr.mxu0 0.0
        %1884 = vmatpush1.msra.mxu0 0.0
        %1885 = vmatprep.subr.mxu0 0.0
        %1886 = vmatpush1.msra.mxu0 0.0
        %1887 = vmatprep.subr.mxu0 %v1724
        %1888 = vmatpush1.msra.mxu0 %v1723
        %1889 = vmatprep.subr.mxu0 %v1720
        %1890 = vmatpush1.msra.mxu0 %v1719
        %1891 = vmatprep.subr.mxu0 %v1716
        %1892 = vmatpush1.msra.mxu0 %v1715
        %1893 = vmatprep.subr.mxu0 0.0
        %1894 = vmatpush2.msra.mxu0 0.0
        %1895 = vmatprep.subr.mxu0 0.0
        %1896 = vmatpush2.msra.mxu0 0.0
        %1897 = vmatprep.subr.mxu0 0.0
        %1898 = vmatpush2.msra.mxu0 0.0
        %1899 = vmatprep.subr.mxu0 0.0
        %1900 = vmatpush2.msra.mxu0 0.0
        %1901 = vmatprep.subr.mxu0 0.0
        %1902 = vmatpush2.msra.mxu0 0.0
        %1903 = vmatprep.subr.mxu0 0.0
        %1904 = vmatpush2.msra.mxu0 0.0
        %1905 = vmatprep.subr.mxu0 0.0
        %1906 = vmatpush2.msra.mxu0 0.0
        %1907 = vmatprep.subr.mxu0 0.0
        %1908 = vmatpush2.msra.mxu0 0.0
        %1909 = vmatprep.subr.mxu0 0.0
        %1910 = vmatpush2.msra.mxu0 0.0
        %1911 = vmatprep.subr.mxu0 0.0
        %1912 = vmatpush2.msra.mxu0 0.0
        %1913 = vmatprep.subr.mxu0 0.0
        %1914 = vmatpush2.msra.mxu0 0.0
        %1915 = vmatprep.subr.mxu0 0.0
        %1916 = vmatpush2.msra.mxu0 0.0
        %1917 = vmatprep.subr.mxu0 0.0
        %1918 = vmatpush2.msra.mxu0 0.0
        %1919 = vmatprep.subr.mxu0 0.0
        %1920 = vmatpush2.msra.mxu0 0.0
        %1921 = vmatprep.subr.mxu0 0.0
        %1922 = vmatpush2.msra.mxu0 0.0
        %1923 = vmatprep.subr.mxu0 0.0
        %1924 = vmatpush2.msra.mxu0 0.0
        %1925 = vmatprep.mubr.f32.mxu0 0.0
        %1926 = vmatmul.mubr.f32.gmra.mxu0 %v1734
        %v1927 = vpop.f32.mrf.mxu0
        %v1928 = vadd.f32 0.0, %v1927
        %v1929 = vpop.f32.mrf.mxu0
        %v1930 = vadd.f32 0.0, %v1929
        %1931 = vmatprep.mubr.f32.mxu0 0.0
        %1932 = vmatmul.mubr.f32.gmra.mxu0 %v1737
        %v1933 = vpop.f32.mrf.mxu0
        %v1934 = vadd.f32 0.0, %v1933
        %v1935 = vpop.f32.mrf.mxu0
        %v1936 = vadd.f32 0.0, %v1935
        %1937 = vmatprep.mubr.f32.mxu0 0.0
        %1938 = vmatmul.mubr.f32.gmra.mxu0 %v1740
        %v1939 = vpop.f32.mrf.mxu0
        %v1940 = vadd.f32 0.0, %v1939
        %v1941 = vpop.f32.mrf.mxu0
        %v1942 = vadd.f32 0.0, %v1941
        %1943 = vmatprep.mubr.f32.mxu0 0.0
        %1944 = vmatmul.mubr.f32.gmra.mxu0 %v1743
        %v1945 = vpop.f32.mrf.mxu0
        %v1946 = vadd.f32 0.0, %v1945
        %v1947 = vpop.f32.mrf.mxu0
        %v1948 = vadd.f32 0.0, %v1947
        %1949 = vmatprep.mubr.f32.mxu0 0.0
        %1950 = vmatmul.mubr.f32.gmra.mxu0 %v1746
        %v1951 = vpop.f32.mrf.mxu0
        %v1952 = vadd.f32 0.0, %v1951
        %v1953 = vpop.f32.mrf.mxu0
        %v1954 = vadd.f32 0.0, %v1953
        %1955 = vmatprep.mubr.f32.mxu0 0.0
        %1956 = vmatmul.mubr.f32.gmra.mxu0 %v1749
        %v1957 = vpop.f32.mrf.mxu0
        %v1958 = vadd.f32 0.0, %v1957
        %v1959 = vpop.f32.mrf.mxu0
        %v1960 = vadd.f32 0.0, %v1959
        %1961 = vmatprep.mubr.f32.mxu0 0.0
        %1962 = vmatmul.mubr.f32.gmra.mxu0 %v1752
        %v1963 = vpop.f32.mrf.mxu0
        %v1964 = vadd.f32 0.0, %v1963
        %v1965 = vpop.f32.mrf.mxu0
        %v1966 = vadd.f32 0.0, %v1965
        %1967 = vdwg.mxu0
        %v1968 = vmax.f32 %v1821, %v1827
        %v1969 = vmax.f32 %v1968, %v1833
        %v1970 = vmax.f32 %v1969, %v1839
        %v1971 = vmax.f32 %v1970, %v1845
        %v1972 = vmax.f32 %v1971, %v1851
        %vm1973 = vcmask 1040384
        %v1974 = vsel %vm1973, %v1857, -inf
        %v1975 = vmax.f32 %v1972, %v1974
        %v1976 = vrot.slane %v1975, 4
        %v1977 = vmax.f32 %v1975, %v1976
        %v1978 = vrot.slane %v1977, 2
        %v1979 = vmax.f32 %v1977, %v1978
        %v1980 = vrot.slane %v1979, 1
        %v1981 = vmax.f32 %v1979, %v1980
        %v1982 = vmax.f32 %v1823, %v1829
        %v1983 = vmax.f32 %v1982, %v1835
        %v1984 = vmax.f32 %v1983, %v1841
        %v1985 = vmax.f32 %v1984, %v1847
        %v1986 = vmax.f32 %v1985, %v1853
        %v1987 = vsel %vm1973, %v1859, -inf
        %v1988 = vmax.f32 %v1986, %v1987
        %v1989 = vrot.slane %v1988, 4
        %v1990 = vmax.f32 %v1988, %v1989
        %v1991 = vrot.slane %v1990, 2
        %v1992 = vmax.f32 %v1990, %v1991
        %v1993 = vrot.slane %v1992, 1
        %v1994 = vmax.f32 %v1992, %v1993
        %v1995 = vmax.f32 %v1928, %v1934
        %v1996 = vmax.f32 %v1995, %v1940
        %v1997 = vmax.f32 %v1996, %v1946
        %v1998 = vmax.f32 %v1997, %v1952
        %v1999 = vmax.f32 %v1998, %v1958
        %v2000 = vsel %vm1973, %v1964, -inf
        %v2001 = vmax.f32 %v1999, %v2000
        %v2002 = vrot.slane %v2001, 4
        %v2003 = vmax.f32 %v2001, %v2002
        %v2004 = vrot.slane %v2003, 2
        %v2005 = vmax.f32 %v2003, %v2004
        %v2006 = vrot.slane %v2005, 1
        %v2007 = vmax.f32 %v2005, %v2006
        %v2008 = vmax.f32 %v1930, %v1936
        %v2009 = vmax.f32 %v2008, %v1942
        %v2010 = vmax.f32 %v2009, %v1948
        %v2011 = vmax.f32 %v2010, %v1954
        %v2012 = vmax.f32 %v2011, %v1960
        %v2013 = vsel %vm1973, %v1966, -inf
        %v2014 = vmax.f32 %v2012, %v2013
        %v2015 = vrot.slane %v2014, 4
        %v2016 = vmax.f32 %v2014, %v2015
        %v2017 = vrot.slane %v2016, 2
        %v2018 = vmax.f32 %v2016, %v2017
        %v2019 = vrot.slane %v2018, 1
        %v2020 = vmax.f32 %v2018, %v2019
        %v2021 = vsub.f32 %v1821, %v1981
        %v2022 = vsub.f32 %v1823, %v1994
        %v2023 = vsub.f32 %v1928, %v2007
        %v2024 = vsub.f32 %v1930, %v2020
        %v2025 = vsub.f32 %v1827, %v1981
        %v2026 = vsub.f32 %v1829, %v1994
        %v2027 = vsub.f32 %v1934, %v2007
        %v2028 = vsub.f32 %v1936, %v2020
        %v2029 = vsub.f32 %v1833, %v1981
        %v2030 = vsub.f32 %v1835, %v1994
        %v2031 = vsub.f32 %v1940, %v2007
        %v2032 = vsub.f32 %v1942, %v2020
        %v2033 = vsub.f32 %v1839, %v1981
        %v2034 = vsub.f32 %v1841, %v1994
        %v2035 = vsub.f32 %v1946, %v2007
        %v2036 = vsub.f32 %v1948, %v2020
        %v2037 = vsub.f32 %v1845, %v1981
        %v2038 = vsub.f32 %v1847, %v1994
        %v2039 = vsub.f32 %v1952, %v2007
        %v2040 = vsub.f32 %v1954, %v2020
        %v2041 = vsub.f32 %v1851, %v1981
        %v2042 = vsub.f32 %v1853, %v1994
        %v2043 = vsub.f32 %v1958, %v2007
        %v2044 = vsub.f32 %v1960, %v2020
        %v2045 = vsub.f32 %v1857, %v1981
        %v2046 = vsub.f32 %v1859, %v1994
        %v2047 = vsub.f32 %v1964, %v2007
        %v2048 = vsub.f32 %v1966, %v2020
        %v2049 = vmul.f32 %v2021, 1.442695
        %v2050 = vpow.pop %v2049
        %v2051 = vmul.f32 %v2022, 1.442695
        %v2052 = vpow.pop %v2051
        %v2053 = vmul.f32 %v2023, 1.442695
        %v2054 = vpow.pop %v2053
        %v2055 = vmul.f32 %v2024, 1.442695
        %v2056 = vpow.pop %v2055
        %v2057 = vmul.f32 %v2025, 1.442695
        %v2058 = vpow.pop %v2057
        %v2059 = vmul.f32 %v2026, 1.442695
        %v2060 = vpow.pop %v2059
        %v2061 = vmul.f32 %v2027, 1.442695
        %v2062 = vpow.pop %v2061
        %v2063 = vmul.f32 %v2028, 1.442695
        %v2064 = vpow.pop %v2063
        %v2065 = vmul.f32 %v2029, 1.442695
        %v2066 = vpow.pop %v2065
        %v2067 = vmul.f32 %v2030, 1.442695
        %v2068 = vpow.pop %v2067
        %v2069 = vmul.f32 %v2031, 1.442695
        %v2070 = vpow.pop %v2069
        %v2071 = vmul.f32 %v2032, 1.442695
        %v2072 = vpow.pop %v2071
        %v2073 = vmul.f32 %v2033, 1.442695
        %v2074 = vpow.pop %v2073
        %v2075 = vmul.f32 %v2034, 1.442695
        %v2076 = vpow.pop %v2075
        %v2077 = vmul.f32 %v2035, 1.442695
        %v2078 = vpow.pop %v2077
        %v2079 = vmul.f32 %v2036, 1.442695
        %v2080 = vpow.pop %v2079
        %v2081 = vmul.f32 %v2037, 1.442695
        %v2082 = vpow.pop %v2081
        %v2083 = vmul.f32 %v2038, 1.442695
        %v2084 = vpow.pop %v2083
        %v2085 = vmul.f32 %v2039, 1.442695
        %v2086 = vpow.pop %v2085
        %v2087 = vmul.f32 %v2040, 1.442695
        %v2088 = vpow.pop %v2087
        %v2089 = vmul.f32 %v2041, 1.442695
        %v2090 = vpow.pop %v2089
        %v2091 = vmul.f32 %v2042, 1.442695
        %v2092 = vpow.pop %v2091
        %v2093 = vmul.f32 %v2043, 1.442695
        %v2094 = vpow.pop %v2093
        %v2095 = vmul.f32 %v2044, 1.442695
        %v2096 = vpow.pop %v2095
        %v2097 = vmul.f32 %v2045, 1.442695
        %v2098 = vpow.pop %v2097
        %v2099 = vmul.f32 %v2046, 1.442695
        %v2100 = vpow.pop %v2099
        %v2101 = vmul.f32 %v2047, 1.442695
        %v2102 = vpow.pop %v2101
        %v2103 = vmul.f32 %v2048, 1.442695
        %v2104 = vpow.pop %v2103
        %v2105 = vadd.f32 %v2050, %v2058
        %v2106 = vadd.f32 %v2105, %v2066
        %v2107 = vadd.f32 %v2106, %v2074
        %v2108 = vadd.f32 %v2107, %v2082
        %v2109 = vadd.f32 %v2108, %v2090
        %v2110 = vsel %vm1973, %v2098, 0.0
        %v2111 = vadd.f32 %v2109, %v2110
        %v2112 = vrot.slane %v2111, 4
        %v2113 = vadd.f32 %v2111, %v2112
        %v2114 = vrot.slane %v2113, 2
        %v2115 = vadd.f32 %v2113, %v2114
        %v2116 = vrot.slane %v2115, 1
        %v2117 = vadd.f32 %v2115, %v2116
        %v2118 = vadd.f32 %v2052, %v2060
        %v2119 = vadd.f32 %v2118, %v2068
        %v2120 = vadd.f32 %v2119, %v2076
        %v2121 = vadd.f32 %v2120, %v2084
        %v2122 = vadd.f32 %v2121, %v2092
        %v2123 = vsel %vm1973, %v2100, 0.0
        %v2124 = vadd.f32 %v2122, %v2123
        %v2125 = vrot.slane %v2124, 4
        %v2126 = vadd.f32 %v2124, %v2125
        %v2127 = vrot.slane %v2126, 2
        %v2128 = vadd.f32 %v2126, %v2127
        %v2129 = vrot.slane %v2128, 1
        %v2130 = vadd.f32 %v2128, %v2129
        %v2131 = vadd.f32 %v2054, %v2062
        %v2132 = vadd.f32 %v2131, %v2070
        %v2133 = vadd.f32 %v2132, %v2078
        %v2134 = vadd.f32 %v2133, %v2086
        %v2135 = vadd.f32 %v2134, %v2094
        %v2136 = vsel %vm1973, %v2102, 0.0
        %v2137 = vadd.f32 %v2135, %v2136
        %v2138 = vrot.slane %v2137, 4
        %v2139 = vadd.f32 %v2137, %v2138
        %v2140 = vrot.slane %v2139, 2
        %v2141 = vadd.f32 %v2139, %v2140
        %v2142 = vrot.slane %v2141, 1
        %v2143 = vadd.f32 %v2141, %v2142
        %v2144 = vadd.f32 %v2056, %v2064
        %v2145 = vadd.f32 %v2144, %v2072
        %v2146 = vadd.f32 %v2145, %v2080
        %v2147 = vadd.f32 %v2146, %v2088
        %v2148 = vadd.f32 %v2147, %v2096
        %v2149 = vsel %vm1973, %v2104, 0.0
        %v2150 = vadd.f32 %v2148, %v2149
        %v2151 = vrot.slane %v2150, 4
        %v2152 = vadd.f32 %v2150, %v2151
        %v2153 = vrot.slane %v2152, 2
        %v2154 = vadd.f32 %v2152, %v2153
        %v2155 = vrot.slane %v2154, 1
        %v2156 = vadd.f32 %v2154, %v2155
        %v2157 = vrcp.pop %v2117
        %v2158 = vrcp.pop %v2130
        %v2159 = vrcp.pop %v2143
        %v2160 = vrcp.pop %v2156
        %v2161 = vmul.f32 %v2050, %v2157
        %v2162 = vmul.f32 %v2052, %v2158
        %v2163 = vmul.f32 %v2054, %v2159
        %v2164 = vmul.f32 %v2056, %v2160
        %v2165 = vmul.f32 %v2058, %v2157
        %v2166 = vmul.f32 %v2060, %v2158
        %v2167 = vmul.f32 %v2062, %v2159
        %v2168 = vmul.f32 %v2064, %v2160
        %v2169 = vmul.f32 %v2066, %v2157
        %v2170 = vmul.f32 %v2068, %v2158
        %v2171 = vmul.f32 %v2070, %v2159
        %v2172 = vmul.f32 %v2072, %v2160
        %v2173 = vmul.f32 %v2074, %v2157
        %v2174 = vmul.f32 %v2076, %v2158
        %v2175 = vmul.f32 %v2078, %v2159
        %v2176 = vmul.f32 %v2080, %v2160
        %v2177 = vmul.f32 %v2082, %v2157
        %v2178 = vmul.f32 %v2084, %v2158
        %v2179 = vmul.f32 %v2086, %v2159
        %v2180 = vmul.f32 %v2088, %v2160
        %v2181 = vmul.f32 %v2090, %v2157
        %v2182 = vmul.f32 %v2092, %v2158
        %v2183 = vmul.f32 %v2094, %v2159
        %v2184 = vmul.f32 %v2096, %v2160
        %v2185 = vmul.f32 %v2098, %v2157
        %v2186 = vmul.f32 %v2100, %v2158
        %v2187 = vmul.f32 %v2102, %v2159
        %v2188 = vmul.f32 %v2104, %v2160
        %v2189 = vld [vmem:[#allocation3] sm:$0xff]
        %v2190 = vld [vmem:[#allocation3 + $0x8] sm:$0xff]
        %v2191 = vld [vmem:[#allocation3 + $0x10] sm:$0xff]
        %v2192 = vld [vmem:[#allocation3 + $0x18] sm:$0xff]
        %v2193 = vld [vmem:[#allocation3 + $0x20] sm:$0xff]
        %v2194 = vld [vmem:[#allocation3 + $0x28] sm:$0xff]
        %v2195 = vld [vmem:[#allocation3 + $0x30] sm:$0x1]
        %2196 = vxpose.xlu0.b32.start [1/16] %v2161, 128
        %2197 = vxpose.xlu0.b32.cont [2/16] %v2165, 128
        %2198 = vxpose.xlu0.b32.cont [3/16] %v2169, 128
        %2199 = vxpose.xlu0.b32.cont [4/16] %v2173, 128
        %2200 = vxpose.xlu0.b32.cont [5/16] %v2177, 128
        %2201 = vxpose.xlu0.b32.cont [6/16] %v2181, 128
        %2202 = vxpose.xlu0.b32.cont [7/16] %v2185, 128
        %2203 = vxpose.xlu0.b32.cont [8/16] 0.0, 128
        %2204 = vxpose.xlu0.b32.cont [9/16] 0.0, 128
        %2205 = vxpose.xlu0.b32.cont [10/16] 0.0, 128
        %2206 = vxpose.xlu0.b32.cont [11/16] 0.0, 128
        %2207 = vxpose.xlu0.b32.cont [12/16] 0.0, 128
        %2208 = vxpose.xlu0.b32.cont [13/16] 0.0, 128
        %2209 = vxpose.xlu0.b32.cont [14/16] 0.0, 128
        %2210 = vxpose.xlu0.b32.cont [15/16] 0.0, 128
        %2211 = vxpose.xlu0.b32.end [16/16] 0.0, 128
        %v2212 = vpop.trf.xlu0
        %v2213 = vpop.trf.xlu0
        %v2214 = vpop.trf.xlu0
        %v2215 = vpop.trf.xlu0
        %v2216 = vpop.trf.xlu0
        %v2217 = vpop.trf.xlu0
        %v2218 = vpop.trf.xlu0
        %v2219 = vpop.trf.xlu0
        %v2220 = vpop.trf.xlu0
        %v2221 = vpop.trf.xlu0
        %v2222 = vpop.trf.xlu0
        %v2223 = vpop.trf.xlu0
        %v2224 = vpop.trf.xlu0
        %v2225 = vpop.trf.xlu0
        %v2226 = vpop.trf.xlu0
        %v2227 = vpop.trf.xlu0
        %2228 = vxpose.xlu0.b32.start [1/16] %v2162, 128
        %2229 = vxpose.xlu0.b32.cont [2/16] %v2166, 128
        %2230 = vxpose.xlu0.b32.cont [3/16] %v2170, 128
        %2231 = vxpose.xlu0.b32.cont [4/16] %v2174, 128
        %2232 = vxpose.xlu0.b32.cont [5/16] %v2178, 128
        %2233 = vxpose.xlu0.b32.cont [6/16] %v2182, 128
        %2234 = vxpose.xlu0.b32.cont [7/16] %v2186, 128
        %2235 = vxpose.xlu0.b32.cont [8/16] 0.0, 128
        %2236 = vxpose.xlu0.b32.cont [9/16] 0.0, 128
        %2237 = vxpose.xlu0.b32.cont [10/16] 0.0, 128
        %2238 = vxpose.xlu0.b32.cont [11/16] 0.0, 128
        %2239 = vxpose.xlu0.b32.cont [12/16] 0.0, 128
        %2240 = vxpose.xlu0.b32.cont [13/16] 0.0, 128
        %2241 = vxpose.xlu0.b32.cont [14/16] 0.0, 128
        %2242 = vxpose.xlu0.b32.cont [15/16] 0.0, 128
        %2243 = vxpose.xlu0.b32.end [16/16] 0.0, 128
        %v2244 = vpop.trf.xlu0
        %v2245 = vpop.trf.xlu0
        %v2246 = vpop.trf.xlu0
        %v2247 = vpop.trf.xlu0
        %v2248 = vpop.trf.xlu0
        %v2249 = vpop.trf.xlu0
        %v2250 = vpop.trf.xlu0
        %v2251 = vpop.trf.xlu0
        %v2252 = vpop.trf.xlu0
        %v2253 = vpop.trf.xlu0
        %v2254 = vpop.trf.xlu0
        %v2255 = vpop.trf.xlu0
        %v2256 = vpop.trf.xlu0
        %v2257 = vpop.trf.xlu0
        %v2258 = vpop.trf.xlu0
        %v2259 = vpop.trf.xlu0
        %2260 = vxpose.xlu0.b32.start [1/16] %v2163, 128
        %2261 = vxpose.xlu0.b32.cont [2/16] %v2167, 128
        %2262 = vxpose.xlu0.b32.cont [3/16] %v2171, 128
        %2263 = vxpose.xlu0.b32.cont [4/16] %v2175, 128
        %2264 = vxpose.xlu0.b32.cont [5/16] %v2179, 128
        %2265 = vxpose.xlu0.b32.cont [6/16] %v2183, 128
        %2266 = vxpose.xlu0.b32.cont [7/16] %v2187, 128
        %2267 = vxpose.xlu0.b32.cont [8/16] 0.0, 128
        %2268 = vxpose.xlu0.b32.cont [9/16] 0.0, 128
        %2269 = vxpose.xlu0.b32.cont [10/16] 0.0, 128
        %2270 = vxpose.xlu0.b32.cont [11/16] 0.0, 128
        %2271 = vxpose.xlu0.b32.cont [12/16] 0.0, 128
        %2272 = vxpose.xlu0.b32.cont [13/16] 0.0, 128
        %2273 = vxpose.xlu0.b32.cont [14/16] 0.0, 128
        %2274 = vxpose.xlu0.b32.cont [15/16] 0.0, 128
        %2275 = vxpose.xlu0.b32.end [16/16] 0.0, 128
        %v2276 = vpop.trf.xlu0
        %v2277 = vpop.trf.xlu0
        %v2278 = vpop.trf.xlu0
        %v2279 = vpop.trf.xlu0
        %v2280 = vpop.trf.xlu0
        %v2281 = vpop.trf.xlu0
        %v2282 = vpop.trf.xlu0
        %v2283 = vpop.trf.xlu0
        %v2284 = vpop.trf.xlu0
        %v2285 = vpop.trf.xlu0
        %v2286 = vpop.trf.xlu0
        %v2287 = vpop.trf.xlu0
        %v2288 = vpop.trf.xlu0
        %v2289 = vpop.trf.xlu0
        %v2290 = vpop.trf.xlu0
        %v2291 = vpop.trf.xlu0
        %2292 = vxpose.xlu0.b32.start [1/16] %v2164, 128
        %2293 = vxpose.xlu0.b32.cont [2/16] %v2168, 128
        %2294 = vxpose.xlu0.b32.cont [3/16] %v2172, 128
        %2295 = vxpose.xlu0.b32.cont [4/16] %v2176, 128
        %2296 = vxpose.xlu0.b32.cont [5/16] %v2180, 128
        %2297 = vxpose.xlu0.b32.cont [6/16] %v2184, 128
        %2298 = vxpose.xlu0.b32.cont [7/16] %v2188, 128
        %2299 = vxpose.xlu0.b32.cont [8/16] 0.0, 128
        %2300 = vxpose.xlu0.b32.cont [9/16] 0.0, 128
        %2301 = vxpose.xlu0.b32.cont [10/16] 0.0, 128
        %2302 = vxpose.xlu0.b32.cont [11/16] 0.0, 128
        %2303 = vxpose.xlu0.b32.cont [12/16] 0.0, 128
        %2304 = vxpose.xlu0.b32.cont [13/16] 0.0, 128
        %2305 = vxpose.xlu0.b32.cont [14/16] 0.0, 128
        %2306 = vxpose.xlu0.b32.cont [15/16] 0.0, 128
        %2307 = vxpose.xlu0.b32.end [16/16] 0.0, 128
        %v2308 = vpop.trf.xlu0
        %v2309 = vpop.trf.xlu0
        %v2310 = vpop.trf.xlu0
        %v2311 = vpop.trf.xlu0
        %v2312 = vpop.trf.xlu0
        %v2313 = vpop.trf.xlu0
        %v2314 = vpop.trf.xlu0
        %v2315 = vpop.trf.xlu0
        %v2316 = vpop.trf.xlu0
        %v2317 = vpop.trf.xlu0
        %v2318 = vpop.trf.xlu0
        %v2319 = vpop.trf.xlu0
        %v2320 = vpop.trf.xlu0
        %v2321 = vpop.trf.xlu0
        %v2322 = vpop.trf.xlu0
        %v2323 = vpop.trf.xlu0
        %vm2324 = vcmask 400384
        %v2326 = vsel %vm2324, %v2212, 0
        %v2329 = vsel %vm2324, %v2213, 0
        %v2332 = vsel %vm2324, %v2214, 0
        %v2335 = vsel %vm2324, %v2215, 0
        %v2338 = vsel %vm2324, %v2216, 0
        %v2341 = vsel %vm2324, %v2217, 0
        %v2344 = vsel %vm2324, %v2218, 0
        %v2347 = vsel %vm2324, %v2219, 0
        %v2350 = vsel %vm2324, %v2220, 0
        %v2353 = vsel %vm2324, %v2221, 0
        %v2356 = vsel %vm2324, %v2222, 0
        %v2359 = vsel %vm2324, %v2223, 0
        %v2362 = vsel %vm2324, %v2224, 0
        %v2365 = vsel %vm2324, %v2225, 0
        %v2368 = vsel %vm2324, %v2226, 0
        %v2371 = vsel %vm2324, %v2227, 0
        %v2374 = vsel %vm2324, %v2244, 0
        %v2377 = vsel %vm2324, %v2245, 0
        %v2380 = vsel %vm2324, %v2246, 0
        %v2383 = vsel %vm2324, %v2247, 0
        %v2386 = vsel %vm2324, %v2248, 0
        %v2389 = vsel %vm2324, %v2249, 0
        %v2392 = vsel %vm2324, %v2250, 0
        %v2395 = vsel %vm2324, %v2251, 0
        %v2398 = vsel %vm2324, %v2252, 0
        %v2401 = vsel %vm2324, %v2253, 0
        %v2404 = vsel %vm2324, %v2254, 0
        %v2407 = vsel %vm2324, %v2255, 0
        %v2410 = vsel %vm2324, %v2256, 0
        %v2413 = vsel %vm2324, %v2257, 0
        %v2416 = vsel %vm2324, %v2258, 0
        %v2419 = vsel %vm2324, %v2259, 0
        %v2422 = vsel %vm2324, %v2276, 0
        %v2425 = vsel %vm2324, %v2277, 0
        %v2428 = vsel %vm2324, %v2278, 0
        %v2431 = vsel %vm2324, %v2279, 0
        %v2434 = vsel %vm2324, %v2280, 0
        %v2437 = vsel %vm2324, %v2281, 0
        %v2440 = vsel %vm2324, %v2282, 0
        %v2443 = vsel %vm2324, %v2283, 0
        %v2446 = vsel %vm2324, %v2284, 0
        %v2449 = vsel %vm2324, %v2285, 0
        %v2452 = vsel %vm2324, %v2286, 0
        %v2455 = vsel %vm2324, %v2287, 0
        %v2458 = vsel %vm2324, %v2288, 0
        %v2461 = vsel %vm2324, %v2289, 0
        %v2464 = vsel %vm2324, %v2290, 0
        %v2467 = vsel %vm2324, %v2291, 0
        %v2470 = vsel %vm2324, %v2308, 0
        %v2473 = vsel %vm2324, %v2309, 0
        %v2476 = vsel %vm2324, %v2310, 0
        %v2479 = vsel %vm2324, %v2311, 0
        %v2482 = vsel %vm2324, %v2312, 0
        %v2485 = vsel %vm2324, %v2313, 0
        %v2488 = vsel %vm2324, %v2314, 0
        %v2491 = vsel %vm2324, %v2315, 0
        %v2494 = vsel %vm2324, %v2316, 0
        %v2497 = vsel %vm2324, %v2317, 0
        %v2500 = vsel %vm2324, %v2318, 0
        %v2503 = vsel %vm2324, %v2319, 0
        %v2506 = vsel %vm2324, %v2320, 0
        %v2509 = vsel %vm2324, %v2321, 0
        %v2512 = vsel %vm2324, %v2322, 0
        %v2515 = vsel %vm2324, %v2323, 0
        %v2518 = vsel %vm1973, %v2195, 0
        %2520 = vmatprep.subr.mxu0 0.0
        %2521 = vmatpush1.msra.mxu0 0.0
        %2522 = vmatprep.subr.mxu0 0.0
        %2523 = vmatpush1.msra.mxu0 0.0
        %2524 = vmatprep.subr.mxu0 0.0
        %2525 = vmatpush1.msra.mxu0 0.0
        %2526 = vmatprep.subr.mxu0 0.0
        %2527 = vmatpush1.msra.mxu0 0.0
        %2528 = vmatprep.subr.mxu0 0.0
        %2529 = vmatpush1.msra.mxu0 0.0
        %2530 = vmatprep.subr.mxu0 0.0
        %2531 = vmatpush1.msra.mxu0 0.0
        %2532 = vmatprep.subr.mxu0 0.0
        %2533 = vmatpush1.msra.mxu0 0.0
        %2534 = vmatprep.subr.mxu0 0.0
        %2535 = vmatpush1.msra.mxu0 0.0
        %2536 = vmatprep.subr.mxu0 0.0
        %2537 = vmatpush1.msra.mxu0 0.0
        %2538 = vmatprep.subr.mxu0 0.0
        %2539 = vmatpush1.msra.mxu0 %v2518
        %2540 = vmatprep.subr.mxu0 0.0
        %2541 = vmatpush1.msra.mxu0 %v2194
        %2542 = vmatprep.subr.mxu0 0.0
        %2543 = vmatpush1.msra.mxu0 %v2193
        %2544 = vmatprep.subr.mxu0 0.0
        %2545 = vmatpush1.msra.mxu0 %v2192
        %2546 = vmatprep.subr.mxu0 0.0
        %2547 = vmatpush1.msra.mxu0 %v2191
        %2548 = vmatprep.subr.mxu0 0.0
        %2549 = vmatpush1.msra.mxu0 %v2190
        %2550 = vmatprep.subr.mxu0 0.0
        %2551 = vmatpush1.msra.mxu0 %v2189
        %2552 = vmatprep.subr.mxu0 0.0
        %2553 = vmatpush2.msra.mxu0 0.0
        %2554 = vmatprep.subr.mxu0 0.0
        %2555 = vmatpush2.msra.mxu0 0.0
        %2556 = vmatprep.subr.mxu0 0.0
        %2557 = vmatpush2.msra.mxu0 0.0
        %2558 = vmatprep.subr.mxu0 0.0
        %2559 = vmatpush2.msra.mxu0 0.0
        %2560 = vmatprep.subr.mxu0 0.0
        %2561 = vmatpush2.msra.mxu0 0.0
        %2562 = vmatprep.subr.mxu0 0.0
        %2563 = vmatpush2.msra.mxu0 0.0
        %2564 = vmatprep.subr.mxu0 0.0
        %2565 = vmatpush2.msra.mxu0 0.0
        %2566 = vmatprep.subr.mxu0 0.0
        %2567 = vmatpush2.msra.mxu0 0.0
        %2568 = vmatprep.subr.mxu0 0.0
        %2569 = vmatpush2.msra.mxu0 0.0
        %2570 = vmatprep.subr.mxu0 0.0
        %2571 = vmatpush2.msra.mxu0 0.0
        %2572 = vmatprep.subr.mxu0 0.0
        %2573 = vmatpush2.msra.mxu0 0.0
        %2574 = vmatprep.subr.mxu0 0.0
        %2575 = vmatpush2.msra.mxu0 0.0
        %2576 = vmatprep.subr.mxu0 0.0
        %2577 = vmatpush2.msra.mxu0 0.0
        %2578 = vmatprep.subr.mxu0 0.0
        %2579 = vmatpush2.msra.mxu0 0.0
        %2580 = vmatprep.subr.mxu0 0.0
        %2581 = vmatpush2.msra.mxu0 0.0
        %2582 = vmatprep.subr.mxu0 0.0
        %2583 = vmatpush2.msra.mxu0 0.0
        %2584 = vmatprep.mubr.f32.mxu0 0.0
        %2585 = vmatmul.mubr.f32.gmra.mxu0 %v2326
        %v2586 = vpop.f32.mrf.mxu0
        %v2587 = vadd.f32 0.0, %v2586
        %v2588 = vpop.f32.mrf.mxu0
        %2589 = vmatprep.mubr.f32.mxu0 0.0
        %2590 = vmatmul.mubr.f32.gmra.mxu0 %v2329
        %v2591 = vpop.f32.mrf.mxu0
        %v2592 = vadd.f32 0.0, %v2591
        %v2593 = vpop.f32.mrf.mxu0
        %2594 = vmatprep.mubr.f32.mxu0 0.0
        %2595 = vmatmul.mubr.f32.gmra.mxu0 %v2332
        %v2596 = vpop.f32.mrf.mxu0
        %v2597 = vadd.f32 0.0, %v2596
        %v2598 = vpop.f32.mrf.mxu0
        %2599 = vmatprep.mubr.f32.mxu0 0.0
        %2600 = vmatmul.mubr.f32.gmra.mxu0 %v2335
        %v2601 = vpop.f32.mrf.mxu0
        %v2602 = vadd.f32 0.0, %v2601
        %v2603 = vpop.f32.mrf.mxu0
        %2604 = vmatprep.mubr.f32.mxu0 0.0
        %2605 = vmatmul.mubr.f32.gmra.mxu0 %v2338
        %v2606 = vpop.f32.mrf.mxu0
        %v2607 = vadd.f32 0.0, %v2606
        %v2608 = vpop.f32.mrf.mxu0
        %2609 = vmatprep.mubr.f32.mxu0 0.0
        %2610 = vmatmul.mubr.f32.gmra.mxu0 %v2341
        %v2611 = vpop.f32.mrf.mxu0
        %v2612 = vadd.f32 0.0, %v2611
        %v2613 = vpop.f32.mrf.mxu0
        %2614 = vmatprep.mubr.f32.mxu0 0.0
        %2615 = vmatmul.mubr.f32.gmra.mxu0 %v2344
        %v2616 = vpop.f32.mrf.mxu0
        %v2617 = vadd.f32 0.0, %v2616
        %v2618 = vpop.f32.mrf.mxu0
        %2619 = vmatprep.mubr.f32.mxu0 0.0
        %2620 = vmatmul.mubr.f32.gmra.mxu0 %v2347
        %v2621 = vpop.f32.mrf.mxu0
        %v2622 = vadd.f32 0.0, %v2621
        %v2623 = vpop.f32.mrf.mxu0
        %2624 = vmatprep.mubr.f32.mxu0 0.0
        %2625 = vmatmul.mubr.f32.gmra.mxu0 %v2350
        %v2626 = vpop.f32.mrf.mxu0
        %v2627 = vadd.f32 0.0, %v2626
        %v2628 = vpop.f32.mrf.mxu0
        %2629 = vmatprep.mubr.f32.mxu0 0.0
        %2630 = vmatmul.mubr.f32.gmra.mxu0 %v2353
        %v2631 = vpop.f32.mrf.mxu0
        %v2632 = vadd.f32 0.0, %v2631
        %v2633 = vpop.f32.mrf.mxu0
        %2634 = vmatprep.mubr.f32.mxu0 0.0
        %2635 = vmatmul.mubr.f32.gmra.mxu0 %v2356
        %v2636 = vpop.f32.mrf.mxu0
        %v2637 = vadd.f32 0.0, %v2636
        %v2638 = vpop.f32.mrf.mxu0
        %2639 = vmatprep.mubr.f32.mxu0 0.0
        %2640 = vmatmul.mubr.f32.gmra.mxu0 %v2359
        %v2641 = vpop.f32.mrf.mxu0
        %v2642 = vadd.f32 0.0, %v2641
        %v2643 = vpop.f32.mrf.mxu0
        %2644 = vmatprep.mubr.f32.mxu0 0.0
        %2645 = vmatmul.mubr.f32.gmra.mxu0 %v2362
        %v2646 = vpop.f32.mrf.mxu0
        %v2647 = vadd.f32 0.0, %v2646
        %v2648 = vpop.f32.mrf.mxu0
        %2649 = vmatprep.mubr.f32.mxu0 0.0
        %2650 = vmatmul.mubr.f32.gmra.mxu0 %v2365
        %v2651 = vpop.f32.mrf.mxu0
        %v2652 = vadd.f32 0.0, %v2651
        %v2653 = vpop.f32.mrf.mxu0
        %2654 = vmatprep.mubr.f32.mxu0 0.0
        %2655 = vmatmul.mubr.f32.gmra.mxu0 %v2368
        %v2656 = vpop.f32.mrf.mxu0
        %v2657 = vadd.f32 0.0, %v2656
        %v2658 = vpop.f32.mrf.mxu0
        %2659 = vmatprep.mubr.f32.mxu0 0.0
        %2660 = vmatmul.mubr.f32.gmra.mxu0 %v2371
        %v2661 = vpop.f32.mrf.mxu0
        %v2662 = vadd.f32 0.0, %v2661
        %v2663 = vpop.f32.mrf.mxu0
        %2664 = vmatprep.mubr.f32.mxu0 0.0
        %2665 = vmatmul.mubr.f32.gmra.mxu0 %v2374
        %v2666 = vpop.f32.mrf.mxu0
        %v2667 = vadd.f32 0.0, %v2666
        %v2668 = vpop.f32.mrf.mxu0
        %2669 = vmatprep.mubr.f32.mxu0 0.0
        %2670 = vmatmul.mubr.f32.gmra.mxu0 %v2377
        %v2671 = vpop.f32.mrf.mxu0
        %v2672 = vadd.f32 0.0, %v2671
        %v2673 = vpop.f32.mrf.mxu0
        %2674 = vmatprep.mubr.f32.mxu0 0.0
        %2675 = vmatmul.mubr.f32.gmra.mxu0 %v2380
        %v2676 = vpop.f32.mrf.mxu0
        %v2677 = vadd.f32 0.0, %v2676
        %v2678 = vpop.f32.mrf.mxu0
        %2679 = vmatprep.mubr.f32.mxu0 0.0
        %2680 = vmatmul.mubr.f32.gmra.mxu0 %v2383
        %v2681 = vpop.f32.mrf.mxu0
        %v2682 = vadd.f32 0.0, %v2681
        %v2683 = vpop.f32.mrf.mxu0
        %2684 = vmatprep.mubr.f32.mxu0 0.0
        %2685 = vmatmul.mubr.f32.gmra.mxu0 %v2386
        %v2686 = vpop.f32.mrf.mxu0
        %v2687 = vadd.f32 0.0, %v2686
        %v2688 = vpop.f32.mrf.mxu0
        %2689 = vmatprep.mubr.f32.mxu0 0.0
        %2690 = vmatmul.mubr.f32.gmra.mxu0 %v2389
        %v2691 = vpop.f32.mrf.mxu0
        %v2692 = vadd.f32 0.0, %v2691
        %v2693 = vpop.f32.mrf.mxu0
        %2694 = vmatprep.mubr.f32.mxu0 0.0
        %2695 = vmatmul.mubr.f32.gmra.mxu0 %v2392
        %v2696 = vpop.f32.mrf.mxu0
        %v2697 = vadd.f32 0.0, %v2696
        %v2698 = vpop.f32.mrf.mxu0
        %2699 = vmatprep.mubr.f32.mxu0 0.0
        %2700 = vmatmul.mubr.f32.gmra.mxu0 %v2395
        %v2701 = vpop.f32.mrf.mxu0
        %v2702 = vadd.f32 0.0, %v2701
        %v2703 = vpop.f32.mrf.mxu0
        %2704 = vmatprep.mubr.f32.mxu0 0.0
        %2705 = vmatmul.mubr.f32.gmra.mxu0 %v2398
        %v2706 = vpop.f32.mrf.mxu0
        %v2707 = vadd.f32 0.0, %v2706
        %v2708 = vpop.f32.mrf.mxu0
        %2709 = vmatprep.mubr.f32.mxu0 0.0
        %2710 = vmatmul.mubr.f32.gmra.mxu0 %v2401
        %v2711 = vpop.f32.mrf.mxu0
        %v2712 = vadd.f32 0.0, %v2711
        %v2713 = vpop.f32.mrf.mxu0
        %2714 = vmatprep.mubr.f32.mxu0 0.0
        %2715 = vmatmul.mubr.f32.gmra.mxu0 %v2404
        %v2716 = vpop.f32.mrf.mxu0
        %v2717 = vadd.f32 0.0, %v2716
        %v2718 = vpop.f32.mrf.mxu0
        %2719 = vmatprep.mubr.f32.mxu0 0.0
        %2720 = vmatmul.mubr.f32.gmra.mxu0 %v2407
        %v2721 = vpop.f32.mrf.mxu0
        %v2722 = vadd.f32 0.0, %v2721
        %v2723 = vpop.f32.mrf.mxu0
        %2724 = vmatprep.mubr.f32.mxu0 0.0
        %2725 = vmatmul.mubr.f32.gmra.mxu0 %v2410
        %v2726 = vpop.f32.mrf.mxu0
        %v2727 = vadd.f32 0.0, %v2726
        %v2728 = vpop.f32.mrf.mxu0
        %2729 = vmatprep.mubr.f32.mxu0 0.0
        %2730 = vmatmul.mubr.f32.gmra.mxu0 %v2413
        %v2731 = vpop.f32.mrf.mxu0
        %v2732 = vadd.f32 0.0, %v2731
        %v2733 = vpop.f32.mrf.mxu0
        %2734 = vmatprep.mubr.f32.mxu0 0.0
        %2735 = vmatmul.mubr.f32.gmra.mxu0 %v2416
        %v2736 = vpop.f32.mrf.mxu0
        %v2737 = vadd.f32 0.0, %v2736
        %v2738 = vpop.f32.mrf.mxu0
        %2739 = vmatprep.mubr.f32.mxu0 0.0
        %2740 = vmatmul.mubr.f32.gmra.mxu0 %v2419
        %v2741 = vpop.f32.mrf.mxu0
        %v2742 = vadd.f32 0.0, %v2741
        %v2743 = vpop.f32.mrf.mxu0
        %2744 = vmatprep.mubr.f32.mxu0 0.0
        %2745 = vmatmul.mubr.f32.gmra.mxu0 %v2422
        %v2746 = vpop.f32.mrf.mxu0
        %v2747 = vadd.f32 0.0, %v2746
        %v2748 = vpop.f32.mrf.mxu0
        %2749 = vmatprep.mubr.f32.mxu0 0.0
        %2750 = vmatmul.mubr.f32.gmra.mxu0 %v2425
        %v2751 = vpop.f32.mrf.mxu0
        %v2752 = vadd.f32 0.0, %v2751
        %v2753 = vpop.f32.mrf.mxu0
        %2754 = vmatprep.mubr.f32.mxu0 0.0
        %2755 = vmatmul.mubr.f32.gmra.mxu0 %v2428
        %v2756 = vpop.f32.mrf.mxu0
        %v2757 = vadd.f32 0.0, %v2756
        %v2758 = vpop.f32.mrf.mxu0
        %2759 = vmatprep.mubr.f32.mxu0 0.0
        %2760 = vmatmul.mubr.f32.gmra.mxu0 %v2431
        %v2761 = vpop.f32.mrf.mxu0
        %v2762 = vadd.f32 0.0, %v2761
        %v2763 = vpop.f32.mrf.mxu0
        %2764 = vmatprep.mubr.f32.mxu0 0.0
        %2765 = vmatmul.mubr.f32.gmra.mxu0 %v2434
        %v2766 = vpop.f32.mrf.mxu0
        %v2767 = vadd.f32 0.0, %v2766
        %v2768 = vpop.f32.mrf.mxu0
        %2769 = vmatprep.mubr.f32.mxu0 0.0
        %2770 = vmatmul.mubr.f32.gmra.mxu0 %v2437
        %v2771 = vpop.f32.mrf.mxu0
        %v2772 = vadd.f32 0.0, %v2771
        %v2773 = vpop.f32.mrf.mxu0
        %2774 = vmatprep.mubr.f32.mxu0 0.0
        %2775 = vmatmul.mubr.f32.gmra.mxu0 %v2440
        %v2776 = vpop.f32.mrf.mxu0
        %v2777 = vadd.f32 0.0, %v2776
        %v2778 = vpop.f32.mrf.mxu0
        %2779 = vmatprep.mubr.f32.mxu0 0.0
        %2780 = vmatmul.mubr.f32.gmra.mxu0 %v2443
        %v2781 = vpop.f32.mrf.mxu0
        %v2782 = vadd.f32 0.0, %v2781
        %v2783 = vpop.f32.mrf.mxu0
        %2784 = vmatprep.mubr.f32.mxu0 0.0
        %2785 = vmatmul.mubr.f32.gmra.mxu0 %v2446
        %v2786 = vpop.f32.mrf.mxu0
        %v2787 = vadd.f32 0.0, %v2786
        %v2788 = vpop.f32.mrf.mxu0
        %2789 = vmatprep.mubr.f32.mxu0 0.0
        %2790 = vmatmul.mubr.f32.gmra.mxu0 %v2449
        %v2791 = vpop.f32.mrf.mxu0
        %v2792 = vadd.f32 0.0, %v2791
        %v2793 = vpop.f32.mrf.mxu0
        %2794 = vmatprep.mubr.f32.mxu0 0.0
        %2795 = vmatmul.mubr.f32.gmra.mxu0 %v2452
        %v2796 = vpop.f32.mrf.mxu0
        %v2797 = vadd.f32 0.0, %v2796
        %v2798 = vpop.f32.mrf.mxu0
        %2799 = vmatprep.mubr.f32.mxu0 0.0
        %2800 = vmatmul.mubr.f32.gmra.mxu0 %v2455
        %v2801 = vpop.f32.mrf.mxu0
        %v2802 = vadd.f32 0.0, %v2801
        %v2803 = vpop.f32.mrf.mxu0
        %2804 = vmatprep.mubr.f32.mxu0 0.0
        %2805 = vmatmul.mubr.f32.gmra.mxu0 %v2458
        %v2806 = vpop.f32.mrf.mxu0
        %v2807 = vadd.f32 0.0, %v2806
        %v2808 = vpop.f32.mrf.mxu0
        %2809 = vmatprep.mubr.f32.mxu0 0.0
        %2810 = vmatmul.mubr.f32.gmra.mxu0 %v2461
        %v2811 = vpop.f32.mrf.mxu0
        %v2812 = vadd.f32 0.0, %v2811
        %v2813 = vpop.f32.mrf.mxu0
        %2814 = vmatprep.mubr.f32.mxu0 0.0
        %2815 = vmatmul.mubr.f32.gmra.mxu0 %v2464
        %v2816 = vpop.f32.mrf.mxu0
        %v2817 = vadd.f32 0.0, %v2816
        %v2818 = vpop.f32.mrf.mxu0
        %2819 = vmatprep.mubr.f32.mxu0 0.0
        %2820 = vmatmul.mubr.f32.gmra.mxu0 %v2467
        %v2821 = vpop.f32.mrf.mxu0
        %v2822 = vadd.f32 0.0, %v2821
        %v2823 = vpop.f32.mrf.mxu0
        %2824 = vmatprep.mubr.f32.mxu0 0.0
        %2825 = vmatmul.mubr.f32.gmra.mxu0 %v2470
        %v2826 = vpop.f32.mrf.mxu0
        %v2827 = vadd.f32 0.0, %v2826
        %v2828 = vpop.f32.mrf.mxu0
        %2829 = vmatprep.mubr.f32.mxu0 0.0
        %2830 = vmatmul.mubr.f32.gmra.mxu0 %v2473
        %v2831 = vpop.f32.mrf.mxu0
        %v2832 = vadd.f32 0.0, %v2831
        %v2833 = vpop.f32.mrf.mxu0
        %2834 = vmatprep.mubr.f32.mxu0 0.0
        %2835 = vmatmul.mubr.f32.gmra.mxu0 %v2476
        %v2836 = vpop.f32.mrf.mxu0
        %v2837 = vadd.f32 0.0, %v2836
        %v2838 = vpop.f32.mrf.mxu0
        %2839 = vmatprep.mubr.f32.mxu0 0.0
        %2840 = vmatmul.mubr.f32.gmra.mxu0 %v2479
        %v2841 = vpop.f32.mrf.mxu0
        %v2842 = vadd.f32 0.0, %v2841
        %v2843 = vpop.f32.mrf.mxu0
        %2844 = vmatprep.mubr.f32.mxu0 0.0
        %2845 = vmatmul.mubr.f32.gmra.mxu0 %v2482
        %v2846 = vpop.f32.mrf.mxu0
        %v2847 = vadd.f32 0.0, %v2846
        %v2848 = vpop.f32.mrf.mxu0
        %2849 = vmatprep.mubr.f32.mxu0 0.0
        %2850 = vmatmul.mubr.f32.gmra.mxu0 %v2485
        %v2851 = vpop.f32.mrf.mxu0
        %v2852 = vadd.f32 0.0, %v2851
        %v2853 = vpop.f32.mrf.mxu0
        %2854 = vmatprep.mubr.f32.mxu0 0.0
        %2855 = vmatmul.mubr.f32.gmra.mxu0 %v2488
        %v2856 = vpop.f32.mrf.mxu0
        %v2857 = vadd.f32 0.0, %v2856
        %v2858 = vpop.f32.mrf.mxu0
        %2859 = vmatprep.mubr.f32.mxu0 0.0
        %2860 = vmatmul.mubr.f32.gmra.mxu0 %v2491
        %v2861 = vpop.f32.mrf.mxu0
        %v2862 = vadd.f32 0.0, %v2861
        %v2863 = vpop.f32.mrf.mxu0
        %2864 = vmatprep.mubr.f32.mxu0 0.0
        %2865 = vmatmul.mubr.f32.gmra.mxu0 %v2494
        %v2866 = vpop.f32.mrf.mxu0
        %v2867 = vadd.f32 0.0, %v2866
        %v2868 = vpop.f32.mrf.mxu0
        %2869 = vmatprep.mubr.f32.mxu0 0.0
        %2870 = vmatmul.mubr.f32.gmra.mxu0 %v2497
        %v2871 = vpop.f32.mrf.mxu0
        %v2872 = vadd.f32 0.0, %v2871
        %v2873 = vpop.f32.mrf.mxu0
        %2874 = vmatprep.mubr.f32.mxu0 0.0
        %2875 = vmatmul.mubr.f32.gmra.mxu0 %v2500
        %v2876 = vpop.f32.mrf.mxu0
        %v2877 = vadd.f32 0.0, %v2876
        %v2878 = vpop.f32.mrf.mxu0
        %2879 = vmatprep.mubr.f32.mxu0 0.0
        %2880 = vmatmul.mubr.f32.gmra.mxu0 %v2503
        %v2881 = vpop.f32.mrf.mxu0
        %v2882 = vadd.f32 0.0, %v2881
        %v2883 = vpop.f32.mrf.mxu0
        %2884 = vmatprep.mubr.f32.mxu0 0.0
        %2885 = vmatmul.mubr.f32.gmra.mxu0 %v2506
        %v2886 = vpop.f32.mrf.mxu0
        %v2887 = vadd.f32 0.0, %v2886
        %v2888 = vpop.f32.mrf.mxu0
        %2889 = vmatprep.mubr.f32.mxu0 0.0
        %2890 = vmatmul.mubr.f32.gmra.mxu0 %v2509
        %v2891 = vpop.f32.mrf.mxu0
        %v2892 = vadd.f32 0.0, %v2891
        %v2893 = vpop.f32.mrf.mxu0
        %2894 = vmatprep.mubr.f32.mxu0 0.0
        %2895 = vmatmul.mubr.f32.gmra.mxu0 %v2512
        %v2896 = vpop.f32.mrf.mxu0
        %v2897 = vadd.f32 0.0, %v2896
        %v2898 = vpop.f32.mrf.mxu0
        %2899 = vmatprep.mubr.f32.mxu0 0.0
        %2900 = vmatmul.mubr.f32.gmra.mxu0 %v2515
        %v2901 = vpop.f32.mrf.mxu0
        %v2902 = vadd.f32 0.0, %v2901
        %v2903 = vpop.f32.mrf.mxu0
        %2904 = vdwg.mxu0
        %v2905 = vld [vmem:[%s827] sm:$0xff]
        %v2906 = vld [vmem:[%s827 + $0x8] sm:$0xff]
        %v2907 = vld [vmem:[%s827 + $0x10] sm:$0xff]
        %v2908 = vld [vmem:[%s827 + $0x18] sm:$0xff]
        %v2909 = vld [vmem:[%s827 + $0x20] sm:$0xff]
        %v2910 = vld [vmem:[%s827 + $0x28] sm:$0xff]
        %v2911 = vld [vmem:[%s827 + $0x30] sm:$0xff]
        %v2912 = vld [vmem:[%s827 + $0x38] sm:$0xff]
        %v2913 = vld [vmem:[%s827 + $0x40] sm:$0xff]
        %v2914 = vld [vmem:[%s827 + $0x48] sm:$0xff]
        %v2915 = vld [vmem:[%s827 + $0x50] sm:$0xff]
        %v2916 = vld [vmem:[%s827 + $0x58] sm:$0xff]
        %v2917 = vld [vmem:[%s827 + $0x60] sm:$0xff]
        %v2918 = vld [vmem:[%s827 + $0x68] sm:$0xff]
        %v2919 = vld [vmem:[%s827 + $0x70] sm:$0xff]
        %v2920 = vld [vmem:[%s827 + $0x78] sm:$0xff]
        %v2921 = vld [vmem:[%s827 + $0x80] sm:$0xff]
        %v2922 = vld [vmem:[%s827 + $0x88] sm:$0xff]
        %v2923 = vld [vmem:[%s827 + $0x90] sm:$0xff]
        %v2924 = vld [vmem:[%s827 + $0x98] sm:$0xff]
        %v2925 = vld [vmem:[%s827 + $0xa0] sm:$0xff]
        %v2926 = vld [vmem:[%s827 + $0xa8] sm:$0xff]
        %v2927 = vld [vmem:[%s827 + $0xb0] sm:$0xff]
        %v2928 = vld [vmem:[%s827 + $0xb8] sm:$0xff]
        %v2929 = vld [vmem:[%s827 + $0xc0] sm:$0xff]
        %v2930 = vld [vmem:[%s827 + $0xc8] sm:$0xff]
        %v2931 = vld [vmem:[%s827 + $0xd0] sm:$0xff]
        %v2932 = vld [vmem:[%s827 + $0xd8] sm:$0xff]
        %v2933 = vld [vmem:[%s827 + $0xe0] sm:$0xff]
        %v2934 = vld [vmem:[%s827 + $0xe8] sm:$0xff]
        %v2935 = vld [vmem:[%s827 + $0xf0] sm:$0xff]
        %v2936 = vld [vmem:[%s827 + $0xf8] sm:$0xff]
        %v2937 = vld [vmem:[%s827 + $0x100] sm:$0xff]
        %v2938 = vld [vmem:[%s827 + $0x108] sm:$0xff]
        %v2939 = vld [vmem:[%s827 + $0x110] sm:$0xff]
        %v2940 = vld [vmem:[%s827 + $0x118] sm:$0xff]
        %v2941 = vld [vmem:[%s827 + $0x120] sm:$0xff]
        %v2942 = vld [vmem:[%s827 + $0x128] sm:$0xff]
        %v2943 = vld [vmem:[%s827 + $0x130] sm:$0xff]
        %v2944 = vld [vmem:[%s827 + $0x138] sm:$0xff]
        %v2945 = vld [vmem:[%s827 + $0x140] sm:$0xff]
        %v2946 = vld [vmem:[%s827 + $0x148] sm:$0xff]
        %v2947 = vld [vmem:[%s827 + $0x150] sm:$0xff]
        %v2948 = vld [vmem:[%s827 + $0x158] sm:$0xff]
        %v2949 = vld [vmem:[%s827 + $0x160] sm:$0xff]
        %v2950 = vld [vmem:[%s827 + $0x168] sm:$0xff]
        %v2951 = vld [vmem:[%s827 + $0x170] sm:$0xff]
        %v2952 = vld [vmem:[%s827 + $0x178] sm:$0xff]
        %v2953 = vld [vmem:[%s827 + $0x180] sm:$0xff]
        %v2954 = vld [vmem:[%s827 + $0x188] sm:$0xff]
        %v2955 = vld [vmem:[%s827 + $0x190] sm:$0xff]
        %v2956 = vld [vmem:[%s827 + $0x198] sm:$0xff]
        %v2957 = vld [vmem:[%s827 + $0x1a0] sm:$0xff]
        %v2958 = vld [vmem:[%s827 + $0x1a8] sm:$0xff]
        %v2959 = vld [vmem:[%s827 + $0x1b0] sm:$0xff]
        %v2960 = vld [vmem:[%s827 + $0x1b8] sm:$0xff]
        %v2961 = vld [vmem:[%s827 + $0x1c0] sm:$0xff]
        %v2962 = vld [vmem:[%s827 + $0x1c8] sm:$0xff]
        %v2963 = vld [vmem:[%s827 + $0x1d0] sm:$0xff]
        %v2964 = vld [vmem:[%s827 + $0x1d8] sm:$0xff]
        %v2965 = vld [vmem:[%s827 + $0x1e0] sm:$0xff]
        %v2966 = vld [vmem:[%s827 + $0x1e8] sm:$0xff]
        %v2967 = vld [vmem:[%s827 + $0x1f0] sm:$0xff]
        %v2968 = vld [vmem:[%s827 + $0x1f8] sm:$0xff]
        %v2969 = vadd.f32 %v2905, %v2587
        %v2970 = vadd.f32 %v2906, %v2592
        %v2971 = vadd.f32 %v2907, %v2597
        %v2972 = vadd.f32 %v2908, %v2602
        %v2973 = vadd.f32 %v2909, %v2607
        %v2974 = vadd.f32 %v2910, %v2612
        %v2975 = vadd.f32 %v2911, %v2617
        %v2976 = vadd.f32 %v2912, %v2622
        %v2977 = vadd.f32 %v2913, %v2627
        %v2978 = vadd.f32 %v2914, %v2632
        %v2979 = vadd.f32 %v2915, %v2637
        %v2980 = vadd.f32 %v2916, %v2642
        %v2981 = vadd.f32 %v2917, %v2647
        %v2982 = vadd.f32 %v2918, %v2652
        %v2983 = vadd.f32 %v2919, %v2657
        %v2984 = vadd.f32 %v2920, %v2662
        %v2985 = vadd.f32 %v2921, %v2667
        %v2986 = vadd.f32 %v2922, %v2672
        %v2987 = vadd.f32 %v2923, %v2677
        %v2988 = vadd.f32 %v2924, %v2682
        %v2989 = vadd.f32 %v2925, %v2687
        %v2990 = vadd.f32 %v2926, %v2692
        %v2991 = vadd.f32 %v2927, %v2697
        %v2992 = vadd.f32 %v2928, %v2702
        %v2993 = vadd.f32 %v2929, %v2707
        %v2994 = vadd.f32 %v2930, %v2712
        %v2995 = vadd.f32 %v2931, %v2717
        %v2996 = vadd.f32 %v2932, %v2722
        %v2997 = vadd.f32 %v2933, %v2727
        %v2998 = vadd.f32 %v2934, %v2732
        %v2999 = vadd.f32 %v2935, %v2737
        %v3000 = vadd.f32 %v2936, %v2742
        %v3001 = vadd.f32 %v2937, %v2747
        %v3002 = vadd.f32 %v2938, %v2752
        %v3003 = vadd.f32 %v2939, %v2757
        %v3004 = vadd.f32 %v2940, %v2762
        %v3005 = vadd.f32 %v2941, %v2767
        %v3006 = vadd.f32 %v2942, %v2772
        %v3007 = vadd.f32 %v2943, %v2777
        %v3008 = vadd.f32 %v2944, %v2782
        %v3009 = vadd.f32 %v2945, %v2787
        %v3010 = vadd.f32 %v2946, %v2792
        %v3011 = vadd.f32 %v2947, %v2797
        %v3012 = vadd.f32 %v2948, %v2802
        %v3013 = vadd.f32 %v2949, %v2807
        %v3014 = vadd.f32 %v2950, %v2812
        %v3015 = vadd.f32 %v2951, %v2817
        %v3016 = vadd.f32 %v2952, %v2822
        %v3017 = vadd.f32 %v2953, %v2827
        %v3018 = vadd.f32 %v2954, %v2832
        %v3019 = vadd.f32 %v2955, %v2837
        %v3020 = vadd.f32 %v2956, %v2842
        %v3021 = vadd.f32 %v2957, %v2847
        %v3022 = vadd.f32 %v2958, %v2852
        %v3023 = vadd.f32 %v2959, %v2857
        %v3024 = vadd.f32 %v2960, %v2862
        %v3025 = vadd.f32 %v2961, %v2867
        %v3026 = vadd.f32 %v2962, %v2872
        %v3027 = vadd.f32 %v2963, %v2877
        %v3028 = vadd.f32 %v2964, %v2882
        %v3029 = vadd.f32 %v2965, %v2887
        %v3030 = vadd.f32 %v2966, %v2892
        %v3031 = vadd.f32 %v2967, %v2897
        %v3032 = vadd.f32 %v2968, %v2902
        %3033 = vst.msk [vmem:[%s804] sm:$0xff] %vm1732, %v2969
        %3034 = vst.msk [vmem:[%s804 + $0x8] sm:$0xff] %vm1732, %v2970
        %3035 = vst.msk [vmem:[%s804 + $0x10] sm:$0xff] %vm1732, %v2971
        %3036 = vst.msk [vmem:[%s804 + $0x18] sm:$0xff] %vm1732, %v2972
        %3037 = vst.msk [vmem:[%s804 + $0x20] sm:$0xff] %vm1732, %v2973
        %3038 = vst.msk [vmem:[%s804 + $0x28] sm:$0xff] %vm1732, %v2974
        %3039 = vst.msk [vmem:[%s804 + $0x30] sm:$0xff] %vm1732, %v2975
        %3040 = vst.msk [vmem:[%s804 + $0x38] sm:$0xff] %vm1732, %v2976
        %3041 = vst.msk [vmem:[%s804 + $0x40] sm:$0xff] %vm1732, %v2977
        %3042 = vst.msk [vmem:[%s804 + $0x48] sm:$0xff] %vm1732, %v2978
        %3043 = vst.msk [vmem:[%s804 + $0x50] sm:$0xff] %vm1732, %v2979
        %3044 = vst.msk [vmem:[%s804 + $0x58] sm:$0xff] %vm1732, %v2980
        %3045 = vst.msk [vmem:[%s804 + $0x60] sm:$0xff] %vm1732, %v2981
        %3046 = vst.msk [vmem:[%s804 + $0x68] sm:$0xff] %vm1732, %v2982
        %3047 = vst.msk [vmem:[%s804 + $0x70] sm:$0xff] %vm1732, %v2983
        %3048 = vst.msk [vmem:[%s804 + $0x78] sm:$0xff] %vm1732, %v2984
        %3049 = vst.msk [vmem:[%s804 + $0x80] sm:$0xff] %vm1732, %v2985
        %3050 = vst.msk [vmem:[%s804 + $0x88] sm:$0xff] %vm1732, %v2986
        %3051 = vst.msk [vmem:[%s804 + $0x90] sm:$0xff] %vm1732, %v2987
        %3052 = vst.msk [vmem:[%s804 + $0x98] sm:$0xff] %vm1732, %v2988
        %3053 = vst.msk [vmem:[%s804 + $0xa0] sm:$0xff] %vm1732, %v2989
        %3054 = vst.msk [vmem:[%s804 + $0xa8] sm:$0xff] %vm1732, %v2990
        %3055 = vst.msk [vmem:[%s804 + $0xb0] sm:$0xff] %vm1732, %v2991
        %3056 = vst.msk [vmem:[%s804 + $0xb8] sm:$0xff] %vm1732, %v2992
        %3057 = vst.msk [vmem:[%s804 + $0xc0] sm:$0xff] %vm1732, %v2993
        %3058 = vst.msk [vmem:[%s804 + $0xc8] sm:$0xff] %vm1732, %v2994
        %3059 = vst.msk [vmem:[%s804 + $0xd0] sm:$0xff] %vm1732, %v2995
        %3060 = vst.msk [vmem:[%s804 + $0xd8] sm:$0xff] %vm1732, %v2996
        %3061 = vst.msk [vmem:[%s804 + $0xe0] sm:$0xff] %vm1732, %v2997
        %3062 = vst.msk [vmem:[%s804 + $0xe8] sm:$0xff] %vm1732, %v2998
        %3063 = vst.msk [vmem:[%s804 + $0xf0] sm:$0xff] %vm1732, %v2999
        %3064 = vst.msk [vmem:[%s804 + $0xf8] sm:$0xff] %vm1732, %v3000
        %3065 = vst.msk [vmem:[%s804 + $0x100] sm:$0xff] %vm1732, %v3001
        %3066 = vst.msk [vmem:[%s804 + $0x108] sm:$0xff] %vm1732, %v3002
        %3067 = vst.msk [vmem:[%s804 + $0x110] sm:$0xff] %vm1732, %v3003
        %3068 = vst.msk [vmem:[%s804 + $0x118] sm:$0xff] %vm1732, %v3004
        %3069 = vst.msk [vmem:[%s804 + $0x120] sm:$0xff] %vm1732, %v3005
        %3070 = vst.msk [vmem:[%s804 + $0x128] sm:$0xff] %vm1732, %v3006
        %3071 = vst.msk [vmem:[%s804 + $0x130] sm:$0xff] %vm1732, %v3007
        %3072 = vst.msk [vmem:[%s804 + $0x138] sm:$0xff] %vm1732, %v3008
        %3073 = vst.msk [vmem:[%s804 + $0x140] sm:$0xff] %vm1732, %v3009
        %3074 = vst.msk [vmem:[%s804 + $0x148] sm:$0xff] %vm1732, %v3010
        %3075 = vst.msk [vmem:[%s804 + $0x150] sm:$0xff] %vm1732, %v3011
        %3076 = vst.msk [vmem:[%s804 + $0x158] sm:$0xff] %vm1732, %v3012
        %3077 = vst.msk [vmem:[%s804 + $0x160] sm:$0xff] %vm1732, %v3013
        %3078 = vst.msk [vmem:[%s804 + $0x168] sm:$0xff] %vm1732, %v3014
        %3079 = vst.msk [vmem:[%s804 + $0x170] sm:$0xff] %vm1732, %v3015
        %3080 = vst.msk [vmem:[%s804 + $0x178] sm:$0xff] %vm1732, %v3016
        %3081 = vst.msk [vmem:[%s804 + $0x180] sm:$0xff] %vm1732, %v3017
        %3082 = vst.msk [vmem:[%s804 + $0x188] sm:$0xff] %vm1732, %v3018
        %3083 = vst.msk [vmem:[%s804 + $0x190] sm:$0xff] %vm1732, %v3019
        %3084 = vst.msk [vmem:[%s804 + $0x198] sm:$0xff] %vm1732, %v3020
        %3085 = vst.msk [vmem:[%s804 + $0x1a0] sm:$0xff] %vm1732, %v3021
        %3086 = vst.msk [vmem:[%s804 + $0x1a8] sm:$0xff] %vm1732, %v3022
        %3087 = vst.msk [vmem:[%s804 + $0x1b0] sm:$0xff] %vm1732, %v3023
        %3088 = vst.msk [vmem:[%s804 + $0x1b8] sm:$0xff] %vm1732, %v3024
        %3089 = vst.msk [vmem:[%s804 + $0x1c0] sm:$0xff] %vm1732, %v3025
        %3090 = vst.msk [vmem:[%s804 + $0x1c8] sm:$0xff] %vm1732, %v3026
        %3091 = vst.msk [vmem:[%s804 + $0x1d0] sm:$0xff] %vm1732, %v3027
        %3092 = vst.msk [vmem:[%s804 + $0x1d8] sm:$0xff] %vm1732, %v3028
        %3093 = vst.msk [vmem:[%s804 + $0x1e0] sm:$0xff] %vm1732, %v3029
        %3094 = vst.msk [vmem:[%s804 + $0x1e8] sm:$0xff] %vm1732, %v3030
        %3095 = vst.msk [vmem:[%s804 + $0x1f0] sm:$0xff] %vm1732, %v3031
        %3096 = vst.msk [vmem:[%s804 + $0x1f8] sm:$0xff] %vm1732, %v3032
        %s3097 = sand.u32 %s206, 1
        %s3098 = sand.u32 %s206, 1
        %s3099 = smul.addr %s3098, 512
        %s3100 = scalar_lea.vmem [#allocation5], %s3099
        // Predicated region
        $region119: #{tpu_custom_call.1} parent=109 // pred_check
          %p3101 = pneg %p216
        $region120: #{tpu_custom_call.1} parent=109 // pred_check_branch
          %3103 = sbr.rel (%p3101) target = $region122
        $region121: #{tpu_custom_call.1} parent=109 // pred_region
          %s3104 = smul.u32 64, %s23
          %s3105 = ssub.s32 392, %s3104
          %p3106 = scmp.lt.s32.totalorder %s3105, 64
          %s3107 = scalar_select %p3106, %s3105, 64
          %s3108 = smul.u32 128, %s3107
          %p3109 = scmp.ne.s32.totalorder 0, %s3108
          %s3110 = smul.addr %s22, 392
          %s3111 = sadd.s32 %s3104, %s3110
          %s3112 = smul.addr %s3111, 8
          %s3113 = scalar_lea.vmem %s7, %s3112
          // Predicated region
          $region123: #{tpu_custom_call.1} parent=121 // pred_check
            %p3114 = pneg %p3109
          $region124: #{tpu_custom_call.1} parent=121 // pred_check_branch
            %3116 = sbr.rel (%p3114) target = $region126
          $region125: #{tpu_custom_call.1} parent=121 // pred_region
            // Predicated region
            $region127: #{tpu_custom_call.1} parent=125 // pred_check
              _
            $region128: #{tpu_custom_call.1} parent=125 // pred_check_branch
              %3118 = sbr.rel (0) target = $region130
            $region129: #{tpu_custom_call.1} parent=125 // pred_region
              // Predicated region
              $region149: #{tpu_custom_call.1} parent=129 // pred_check
                _
              $region150: #{tpu_custom_call.1} parent=129 // pred_check_branch
                %3294 = sbr.rel (0) target = $region152
              $region151: #{tpu_custom_call.1} parent=129 // pred_region
                %s3295 = sshrl.u32 %s3107, 6
                // While loop
                $region153: #{tpu_custom_call.1} parent=151 // loop_pre_header
                  _
                $region154: #{tpu_custom_call.1} parent=151 // loop_header
                  %s3297 = sphi 0, %s3299
                  %p3298 = scmp.ge.s32.totalorder %s3297, %s3295
                  %s3302 = sphi 0, %s3435
                  %s3303 = sphi %s3100, %s3438
                  %s3304 = sphi %s3113, %s3439
                $region155: #{tpu_custom_call.1} parent=151 // loop_header_branch
                  %3301 = sbr.rel (%p3298) target = $region159
                $region156: #{tpu_custom_call.1} parent=151 // loop_body
                  %v3305 = vld [vmem:[%s3303] sm:$0xff]
                  %3306 = vst [vmem:[%s3304] sm:$0xff] %v3305
                  %v3307 = vld [vmem:[%s3303 + $0x8] sm:$0xff]
                  %3308 = vst [vmem:[%s3304 + $0x8] sm:$0xff] %v3307
                  %v3309 = vld [vmem:[%s3303 + $0x10] sm:$0xff]
                  %3310 = vst [vmem:[%s3304 + $0x10] sm:$0xff] %v3309
                  %v3311 = vld [vmem:[%s3303 + $0x18] sm:$0xff]
                  %3312 = vst [vmem:[%s3304 + $0x18] sm:$0xff] %v3311
                  %v3313 = vld [vmem:[%s3303 + $0x20] sm:$0xff]
                  %3314 = vst [vmem:[%s3304 + $0x20] sm:$0xff] %v3313
                  %v3315 = vld [vmem:[%s3303 + $0x28] sm:$0xff]
                  %3316 = vst [vmem:[%s3304 + $0x28] sm:$0xff] %v3315
                  %v3317 = vld [vmem:[%s3303 + $0x30] sm:$0xff]
                  %3318 = vst [vmem:[%s3304 + $0x30] sm:$0xff] %v3317
                  %v3319 = vld [vmem:[%s3303 + $0x38] sm:$0xff]
                  %3320 = vst [vmem:[%s3304 + $0x38] sm:$0xff] %v3319
                  %v3321 = vld [vmem:[%s3303 + $0x40] sm:$0xff]
                  %3322 = vst [vmem:[%s3304 + $0x40] sm:$0xff] %v3321
                  %v3323 = vld [vmem:[%s3303 + $0x48] sm:$0xff]
                  %3324 = vst [vmem:[%s3304 + $0x48] sm:$0xff] %v3323
                  %v3325 = vld [vmem:[%s3303 + $0x50] sm:$0xff]
                  %3326 = vst [vmem:[%s3304 + $0x50] sm:$0xff] %v3325
                  %v3327 = vld [vmem:[%s3303 + $0x58] sm:$0xff]
                  %3328 = vst [vmem:[%s3304 + $0x58] sm:$0xff] %v3327
                  %v3329 = vld [vmem:[%s3303 + $0x60] sm:$0xff]
                  %3330 = vst [vmem:[%s3304 + $0x60] sm:$0xff] %v3329
                  %v3331 = vld [vmem:[%s3303 + $0x68] sm:$0xff]
                  %3332 = vst [vmem:[%s3304 + $0x68] sm:$0xff] %v3331
                  %v3333 = vld [vmem:[%s3303 + $0x70] sm:$0xff]
                  %3334 = vst [vmem:[%s3304 + $0x70] sm:$0xff] %v3333
                  %v3335 = vld [vmem:[%s3303 + $0x78] sm:$0xff]
                  %3336 = vst [vmem:[%s3304 + $0x78] sm:$0xff] %v3335
                  %v3337 = vld [vmem:[%s3303 + $0x80] sm:$0xff]
                  %3338 = vst [vmem:[%s3304 + $0x80] sm:$0xff] %v3337
                  %v3339 = vld [vmem:[%s3303 + $0x88] sm:$0xff]
                  %3340 = vst [vmem:[%s3304 + $0x88] sm:$0xff] %v3339
                  %v3341 = vld [vmem:[%s3303 + $0x90] sm:$0xff]
                  %3342 = vst [vmem:[%s3304 + $0x90] sm:$0xff] %v3341
                  %v3343 = vld [vmem:[%s3303 + $0x98] sm:$0xff]
                  %3344 = vst [vmem:[%s3304 + $0x98] sm:$0xff] %v3343
                  %v3345 = vld [vmem:[%s3303 + $0xa0] sm:$0xff]
                  %3346 = vst [vmem:[%s3304 + $0xa0] sm:$0xff] %v3345
                  %v3347 = vld [vmem:[%s3303 + $0xa8] sm:$0xff]
                  %3348 = vst [vmem:[%s3304 + $0xa8] sm:$0xff] %v3347
                  %v3349 = vld [vmem:[%s3303 + $0xb0] sm:$0xff]
                  %3350 = vst [vmem:[%s3304 + $0xb0] sm:$0xff] %v3349
                  %v3351 = vld [vmem:[%s3303 + $0xb8] sm:$0xff]
                  %3352 = vst [vmem:[%s3304 + $0xb8] sm:$0xff] %v3351
                  %v3353 = vld [vmem:[%s3303 + $0xc0] sm:$0xff]
                  %3354 = vst [vmem:[%s3304 + $0xc0] sm:$0xff] %v3353
                  %v3355 = vld [vmem:[%s3303 + $0xc8] sm:$0xff]
                  %3356 = vst [vmem:[%s3304 + $0xc8] sm:$0xff] %v3355
                  %v3357 = vld [vmem:[%s3303 + $0xd0] sm:$0xff]
                  %3358 = vst [vmem:[%s3304 + $0xd0] sm:$0xff] %v3357
                  %v3359 = vld [vmem:[%s3303 + $0xd8] sm:$0xff]
                  %3360 = vst [vmem:[%s3304 + $0xd8] sm:$0xff] %v3359
                  %v3361 = vld [vmem:[%s3303 + $0xe0] sm:$0xff]
                  %3362 = vst [vmem:[%s3304 + $0xe0] sm:$0xff] %v3361
                  %v3363 = vld [vmem:[%s3303 + $0xe8] sm:$0xff]
                  %3364 = vst [vmem:[%s3304 + $0xe8] sm:$0xff] %v3363
                  %v3365 = vld [vmem:[%s3303 + $0xf0] sm:$0xff]
                  %3366 = vst [vmem:[%s3304 + $0xf0] sm:$0xff] %v3365
                  %v3367 = vld [vmem:[%s3303 + $0xf8] sm:$0xff]
                  %3368 = vst [vmem:[%s3304 + $0xf8] sm:$0xff] %v3367
                  %v3369 = vld [vmem:[%s3303 + $0x100] sm:$0xff]
                  %3370 = vst [vmem:[%s3304 + $0x100] sm:$0xff] %v3369
                  %v3371 = vld [vmem:[%s3303 + $0x108] sm:$0xff]
                  %3372 = vst [vmem:[%s3304 + $0x108] sm:$0xff] %v3371
                  %v3373 = vld [vmem:[%s3303 + $0x110] sm:$0xff]
                  %3374 = vst [vmem:[%s3304 + $0x110] sm:$0xff] %v3373
                  %v3375 = vld [vmem:[%s3303 + $0x118] sm:$0xff]
                  %3376 = vst [vmem:[%s3304 + $0x118] sm:$0xff] %v3375
                  %v3377 = vld [vmem:[%s3303 + $0x120] sm:$0xff]
                  %3378 = vst [vmem:[%s3304 + $0x120] sm:$0xff] %v3377
                  %v3379 = vld [vmem:[%s3303 + $0x128] sm:$0xff]
                  %3380 = vst [vmem:[%s3304 + $0x128] sm:$0xff] %v3379
                  %v3381 = vld [vmem:[%s3303 + $0x130] sm:$0xff]
                  %3382 = vst [vmem:[%s3304 + $0x130] sm:$0xff] %v3381
                  %v3383 = vld [vmem:[%s3303 + $0x138] sm:$0xff]
                  %3384 = vst [vmem:[%s3304 + $0x138] sm:$0xff] %v3383
                  %v3385 = vld [vmem:[%s3303 + $0x140] sm:$0xff]
                  %3386 = vst [vmem:[%s3304 + $0x140] sm:$0xff] %v3385
                  %v3387 = vld [vmem:[%s3303 + $0x148] sm:$0xff]
                  %3388 = vst [vmem:[%s3304 + $0x148] sm:$0xff] %v3387
                  %v3389 = vld [vmem:[%s3303 + $0x150] sm:$0xff]
                  %3390 = vst [vmem:[%s3304 + $0x150] sm:$0xff] %v3389
                  %v3391 = vld [vmem:[%s3303 + $0x158] sm:$0xff]
                  %3392 = vst [vmem:[%s3304 + $0x158] sm:$0xff] %v3391
                  %v3393 = vld [vmem:[%s3303 + $0x160] sm:$0xff]
                  %3394 = vst [vmem:[%s3304 + $0x160] sm:$0xff] %v3393
                  %v3395 = vld [vmem:[%s3303 + $0x168] sm:$0xff]
                  %3396 = vst [vmem:[%s3304 + $0x168] sm:$0xff] %v3395
                  %v3397 = vld [vmem:[%s3303 + $0x170] sm:$0xff]
                  %3398 = vst [vmem:[%s3304 + $0x170] sm:$0xff] %v3397
                  %v3399 = vld [vmem:[%s3303 + $0x178] sm:$0xff]
                  %3400 = vst [vmem:[%s3304 + $0x178] sm:$0xff] %v3399
                  %v3401 = vld [vmem:[%s3303 + $0x180] sm:$0xff]
                  %3402 = vst [vmem:[%s3304 + $0x180] sm:$0xff] %v3401
                  %v3403 = vld [vmem:[%s3303 + $0x188] sm:$0xff]
                  %3404 = vst [vmem:[%s3304 + $0x188] sm:$0xff] %v3403
                  %v3405 = vld [vmem:[%s3303 + $0x190] sm:$0xff]
                  %3406 = vst [vmem:[%s3304 + $0x190] sm:$0xff] %v3405
                  %v3407 = vld [vmem:[%s3303 + $0x198] sm:$0xff]
                  %3408 = vst [vmem:[%s3304 + $0x198] sm:$0xff] %v3407
                  %v3409 = vld [vmem:[%s3303 + $0x1a0] sm:$0xff]
                  %3410 = vst [vmem:[%s3304 + $0x1a0] sm:$0xff] %v3409
                  %v3411 = vld [vmem:[%s3303 + $0x1a8] sm:$0xff]
                  %3412 = vst [vmem:[%s3304 + $0x1a8] sm:$0xff] %v3411
                  %v3413 = vld [vmem:[%s3303 + $0x1b0] sm:$0xff]
                  %3414 = vst [vmem:[%s3304 + $0x1b0] sm:$0xff] %v3413
                  %v3415 = vld [vmem:[%s3303 + $0x1b8] sm:$0xff]
                  %3416 = vst [vmem:[%s3304 + $0x1b8] sm:$0xff] %v3415
                  %v3417 = vld [vmem:[%s3303 + $0x1c0] sm:$0xff]
                  %3418 = vst [vmem:[%s3304 + $0x1c0] sm:$0xff] %v3417
                  %v3419 = vld [vmem:[%s3303 + $0x1c8] sm:$0xff]
                  %3420 = vst [vmem:[%s3304 + $0x1c8] sm:$0xff] %v3419
                  %v3421 = vld [vmem:[%s3303 + $0x1d0] sm:$0xff]
                  %3422 = vst [vmem:[%s3304 + $0x1d0] sm:$0xff] %v3421
                  %v3423 = vld [vmem:[%s3303 + $0x1d8] sm:$0xff]
                  %3424 = vst [vmem:[%s3304 + $0x1d8] sm:$0xff] %v3423
                  %v3425 = vld [vmem:[%s3303 + $0x1e0] sm:$0xff]
                  %3426 = vst [vmem:[%s3304 + $0x1e0] sm:$0xff] %v3425
                  %v3427 = vld [vmem:[%s3303 + $0x1e8] sm:$0xff]
                  %3428 = vst [vmem:[%s3304 + $0x1e8] sm:$0xff] %v3427
                  %v3429 = vld [vmem:[%s3303 + $0x1f0] sm:$0xff]
                  %3430 = vst [vmem:[%s3304 + $0x1f0] sm:$0xff] %v3429
                  %v3431 = vld [vmem:[%s3303 + $0x1f8] sm:$0xff]
                  %3432 = vst [vmem:[%s3304 + $0x1f8] sm:$0xff] %v3431
                  %s3433 = sadd.s32 1, %s3302
                  %p3434 = scmp.ge.s32.totalorder %s3433, %s3295
                  %s3435 = scalar_select %p3434, 0, %s3433
                  %s3436 = smul.u32 %s3435, 512
                  %s3437 = smul.u32 %s3435, 512
                  %s3438 = scalar_lea.vmem %s3100, %s3436 [#allocation5]
                  %s3439 = scalar_lea.vmem %s3113, %s3437
                $region157: #{tpu_custom_call.1} parent=151 // loop_footer
                  %s3299 = sadd.s32 %s3297, 1
                $region158: #{tpu_custom_call.1} parent=151 // loop_footer_branch
                  %3296 = sbr.rel target = $region154
                $region159: #{tpu_custom_call.1} parent=151 // loop_exit
                  _
                %s3440 = sshrl.u32 %s3107, 6
                %s3441 = sand.u32 %s3107, 63
                %s3442 = smul.u32 %s3440, 64
                %s3443 = smul.u32 8, %s3442
                %s3444 = scalar_lea.vmem %s3100, %s3443 [#allocation5]
                %s3445 = smul.u32 8, %s3442
                %s3446 = scalar_lea.vmem %s3113, %s3445
                // While loop
                $region160: #{tpu_custom_call.1} parent=151 // loop_pre_header
                  _
                $region161: #{tpu_custom_call.1} parent=151 // loop_header
                  %s3448 = sphi 0, %s3450
                  %p3449 = scmp.ge.s32.totalorder %s3448, %s3441
                  %s3453 = sphi 0, %s3460
                  %s3454 = sphi %s3444, %s3463
                  %s3455 = sphi %s3446, %s3464
                $region162: #{tpu_custom_call.1} parent=151 // loop_header_branch
                  %3452 = sbr.rel (%p3449) target = $region166
                $region163: #{tpu_custom_call.1} parent=151 // loop_body
                  %v3456 = vld [vmem:[%s3454] sm:$0xff]
                  %3457 = vst [vmem:[%s3455] sm:$0xff] %v3456
                  %s3458 = sadd.s32 1, %s3453
                  %p3459 = scmp.ge.s32.totalorder %s3458, %s3441
                  %s3460 = scalar_select %p3459, 0, %s3458
                  %s3461 = smul.u32 %s3460, 8
                  %s3462 = smul.u32 %s3460, 8
                  %s3463 = scalar_lea.vmem %s3444, %s3461 [#allocation5]
                  %s3464 = scalar_lea.vmem %s3446, %s3462
                $region164: #{tpu_custom_call.1} parent=151 // loop_footer
                  %s3450 = sadd.s32 %s3448, 1
                $region165: #{tpu_custom_call.1} parent=151 // loop_footer_branch
                  %3447 = sbr.rel target = $region161
                $region166: #{tpu_custom_call.1} parent=151 // loop_exit
                  _
              $region152: #{tpu_custom_call.1} parent=129 // pred_fallthru
                _
              // Predicated region
              $region167: #{tpu_custom_call.1} parent=129 // pred_check
                _
              $region168: #{tpu_custom_call.1} parent=129 // pred_check_branch
                %3466 = sbr.rel target = $region170
              $region169: #{tpu_custom_call.1} parent=129 // pred_region
                _
              $region170: #{tpu_custom_call.1} parent=129 // pred_fallthru
                _
            $region130: #{tpu_custom_call.1} parent=125 // pred_fallthru
              _
            // Predicated region
            $region131: #{tpu_custom_call.1} parent=125 // pred_check
              _
            $region132: #{tpu_custom_call.1} parent=125 // pred_check_branch
              %3120 = sbr.rel target = $region134
            $region133: #{tpu_custom_call.1} parent=125 // pred_region
              %s3122 = ssub.s32 256, 1
              %s3123 = sshrl.u32 %s3107, 6
              // While loop
              $region135: #{tpu_custom_call.1} parent=133 // loop_pre_header
                _
              $region136: #{tpu_custom_call.1} parent=133 // loop_header
                %s3125 = sphi 0, %s3127
                %p3126 = scmp.ge.s32.totalorder %s3125, %s3123
                %s3130 = sphi 0, %s3263
                %s3131 = sphi %s3100, %s3266
                %s3132 = sphi %s3113, %s3267
              $region137: #{tpu_custom_call.1} parent=133 // loop_header_branch
                %3129 = sbr.rel (%p3126) target = $region141
              $region138: #{tpu_custom_call.1} parent=133 // loop_body
                %v3133 = vld [vmem:[%s3131] sm:%s3122]
                %3134 = vst [vmem:[%s3132] sm:%s3122] %v3133
                %v3135 = vld [vmem:[%s3131 + $0x8] sm:%s3122]
                %3136 = vst [vmem:[%s3132 + $0x8] sm:%s3122] %v3135
                %v3137 = vld [vmem:[%s3131 + $0x10] sm:%s3122]
                %3138 = vst [vmem:[%s3132 + $0x10] sm:%s3122] %v3137
                %v3139 = vld [vmem:[%s3131 + $0x18] sm:%s3122]
                %3140 = vst [vmem:[%s3132 + $0x18] sm:%s3122] %v3139
                %v3141 = vld [vmem:[%s3131 + $0x20] sm:%s3122]
                %3142 = vst [vmem:[%s3132 + $0x20] sm:%s3122] %v3141
                %v3143 = vld [vmem:[%s3131 + $0x28] sm:%s3122]
                %3144 = vst [vmem:[%s3132 + $0x28] sm:%s3122] %v3143
                %v3145 = vld [vmem:[%s3131 + $0x30] sm:%s3122]
                %3146 = vst [vmem:[%s3132 + $0x30] sm:%s3122] %v3145
                %v3147 = vld [vmem:[%s3131 + $0x38] sm:%s3122]
                %3148 = vst [vmem:[%s3132 + $0x38] sm:%s3122] %v3147
                %v3149 = vld [vmem:[%s3131 + $0x40] sm:%s3122]
                %3150 = vst [vmem:[%s3132 + $0x40] sm:%s3122] %v3149
                %v3151 = vld [vmem:[%s3131 + $0x48] sm:%s3122]
                %3152 = vst [vmem:[%s3132 + $0x48] sm:%s3122] %v3151
                %v3153 = vld [vmem:[%s3131 + $0x50] sm:%s3122]
                %3154 = vst [vmem:[%s3132 + $0x50] sm:%s3122] %v3153
                %v3155 = vld [vmem:[%s3131 + $0x58] sm:%s3122]
                %3156 = vst [vmem:[%s3132 + $0x58] sm:%s3122] %v3155
                %v3157 = vld [vmem:[%s3131 + $0x60] sm:%s3122]
                %3158 = vst [vmem:[%s3132 + $0x60] sm:%s3122] %v3157
                %v3159 = vld [vmem:[%s3131 + $0x68] sm:%s3122]
                %3160 = vst [vmem:[%s3132 + $0x68] sm:%s3122] %v3159
                %v3161 = vld [vmem:[%s3131 + $0x70] sm:%s3122]
                %3162 = vst [vmem:[%s3132 + $0x70] sm:%s3122] %v3161
                %v3163 = vld [vmem:[%s3131 + $0x78] sm:%s3122]
                %3164 = vst [vmem:[%s3132 + $0x78] sm:%s3122] %v3163
                %v3165 = vld [vmem:[%s3131 + $0x80] sm:%s3122]
                %3166 = vst [vmem:[%s3132 + $0x80] sm:%s3122] %v3165
                %v3167 = vld [vmem:[%s3131 + $0x88] sm:%s3122]
                %3168 = vst [vmem:[%s3132 + $0x88] sm:%s3122] %v3167
                %v3169 = vld [vmem:[%s3131 + $0x90] sm:%s3122]
                %3170 = vst [vmem:[%s3132 + $0x90] sm:%s3122] %v3169
                %v3171 = vld [vmem:[%s3131 + $0x98] sm:%s3122]
                %3172 = vst [vmem:[%s3132 + $0x98] sm:%s3122] %v3171
                %v3173 = vld [vmem:[%s3131 + $0xa0] sm:%s3122]
                %3174 = vst [vmem:[%s3132 + $0xa0] sm:%s3122] %v3173
                %v3175 = vld [vmem:[%s3131 + $0xa8] sm:%s3122]
                %3176 = vst [vmem:[%s3132 + $0xa8] sm:%s3122] %v3175
                %v3177 = vld [vmem:[%s3131 + $0xb0] sm:%s3122]
                %3178 = vst [vmem:[%s3132 + $0xb0] sm:%s3122] %v3177
                %v3179 = vld [vmem:[%s3131 + $0xb8] sm:%s3122]
                %3180 = vst [vmem:[%s3132 + $0xb8] sm:%s3122] %v3179
                %v3181 = vld [vmem:[%s3131 + $0xc0] sm:%s3122]
                %3182 = vst [vmem:[%s3132 + $0xc0] sm:%s3122] %v3181
                %v3183 = vld [vmem:[%s3131 + $0xc8] sm:%s3122]
                %3184 = vst [vmem:[%s3132 + $0xc8] sm:%s3122] %v3183
                %v3185 = vld [vmem:[%s3131 + $0xd0] sm:%s3122]
                %3186 = vst [vmem:[%s3132 + $0xd0] sm:%s3122] %v3185
                %v3187 = vld [vmem:[%s3131 + $0xd8] sm:%s3122]
                %3188 = vst [vmem:[%s3132 + $0xd8] sm:%s3122] %v3187
                %v3189 = vld [vmem:[%s3131 + $0xe0] sm:%s3122]
                %3190 = vst [vmem:[%s3132 + $0xe0] sm:%s3122] %v3189
                %v3191 = vld [vmem:[%s3131 + $0xe8] sm:%s3122]
                %3192 = vst [vmem:[%s3132 + $0xe8] sm:%s3122] %v3191
                %v3193 = vld [vmem:[%s3131 + $0xf0] sm:%s3122]
                %3194 = vst [vmem:[%s3132 + $0xf0] sm:%s3122] %v3193
                %v3195 = vld [vmem:[%s3131 + $0xf8] sm:%s3122]
                %3196 = vst [vmem:[%s3132 + $0xf8] sm:%s3122] %v3195
                %v3197 = vld [vmem:[%s3131 + $0x100] sm:%s3122]
                %3198 = vst [vmem:[%s3132 + $0x100] sm:%s3122] %v3197
                %v3199 = vld [vmem:[%s3131 + $0x108] sm:%s3122]
                %3200 = vst [vmem:[%s3132 + $0x108] sm:%s3122] %v3199
                %v3201 = vld [vmem:[%s3131 + $0x110] sm:%s3122]
                %3202 = vst [vmem:[%s3132 + $0x110] sm:%s3122] %v3201
                %v3203 = vld [vmem:[%s3131 + $0x118] sm:%s3122]
                %3204 = vst [vmem:[%s3132 + $0x118] sm:%s3122] %v3203
                %v3205 = vld [vmem:[%s3131 + $0x120] sm:%s3122]
                %3206 = vst [vmem:[%s3132 + $0x120] sm:%s3122] %v3205
                %v3207 = vld [vmem:[%s3131 + $0x128] sm:%s3122]
                %3208 = vst [vmem:[%s3132 + $0x128] sm:%s3122] %v3207
                %v3209 = vld [vmem:[%s3131 + $0x130] sm:%s3122]
                %3210 = vst [vmem:[%s3132 + $0x130] sm:%s3122] %v3209
                %v3211 = vld [vmem:[%s3131 + $0x138] sm:%s3122]
                %3212 = vst [vmem:[%s3132 + $0x138] sm:%s3122] %v3211
                %v3213 = vld [vmem:[%s3131 + $0x140] sm:%s3122]
                %3214 = vst [vmem:[%s3132 + $0x140] sm:%s3122] %v3213
                %v3215 = vld [vmem:[%s3131 + $0x148] sm:%s3122]
                %3216 = vst [vmem:[%s3132 + $0x148] sm:%s3122] %v3215
                %v3217 = vld [vmem:[%s3131 + $0x150] sm:%s3122]
                %3218 = vst [vmem:[%s3132 + $0x150] sm:%s3122] %v3217
                %v3219 = vld [vmem:[%s3131 + $0x158] sm:%s3122]
                %3220 = vst [vmem:[%s3132 + $0x158] sm:%s3122] %v3219
                %v3221 = vld [vmem:[%s3131 + $0x160] sm:%s3122]
                %3222 = vst [vmem:[%s3132 + $0x160] sm:%s3122] %v3221
                %v3223 = vld [vmem:[%s3131 + $0x168] sm:%s3122]
                %3224 = vst [vmem:[%s3132 + $0x168] sm:%s3122] %v3223
                %v3225 = vld [vmem:[%s3131 + $0x170] sm:%s3122]
                %3226 = vst [vmem:[%s3132 + $0x170] sm:%s3122] %v3225
                %v3227 = vld [vmem:[%s3131 + $0x178] sm:%s3122]
                %3228 = vst [vmem:[%s3132 + $0x178] sm:%s3122] %v3227
                %v3229 = vld [vmem:[%s3131 + $0x180] sm:%s3122]
                %3230 = vst [vmem:[%s3132 + $0x180] sm:%s3122] %v3229
                %v3231 = vld [vmem:[%s3131 + $0x188] sm:%s3122]
                %3232 = vst [vmem:[%s3132 + $0x188] sm:%s3122] %v3231
                %v3233 = vld [vmem:[%s3131 + $0x190] sm:%s3122]
                %3234 = vst [vmem:[%s3132 + $0x190] sm:%s3122] %v3233
                %v3235 = vld [vmem:[%s3131 + $0x198] sm:%s3122]
                %3236 = vst [vmem:[%s3132 + $0x198] sm:%s3122] %v3235
                %v3237 = vld [vmem:[%s3131 + $0x1a0] sm:%s3122]
                %3238 = vst [vmem:[%s3132 + $0x1a0] sm:%s3122] %v3237
                %v3239 = vld [vmem:[%s3131 + $0x1a8] sm:%s3122]
                %3240 = vst [vmem:[%s3132 + $0x1a8] sm:%s3122] %v3239
                %v3241 = vld [vmem:[%s3131 + $0x1b0] sm:%s3122]
                %3242 = vst [vmem:[%s3132 + $0x1b0] sm:%s3122] %v3241
                %v3243 = vld [vmem:[%s3131 + $0x1b8] sm:%s3122]
                %3244 = vst [vmem:[%s3132 + $0x1b8] sm:%s3122] %v3243
                %v3245 = vld [vmem:[%s3131 + $0x1c0] sm:%s3122]
                %3246 = vst [vmem:[%s3132 + $0x1c0] sm:%s3122] %v3245
                %v3247 = vld [vmem:[%s3131 + $0x1c8] sm:%s3122]
                %3248 = vst [vmem:[%s3132 + $0x1c8] sm:%s3122] %v3247
                %v3249 = vld [vmem:[%s3131 + $0x1d0] sm:%s3122]
                %3250 = vst [vmem:[%s3132 + $0x1d0] sm:%s3122] %v3249
                %v3251 = vld [vmem:[%s3131 + $0x1d8] sm:%s3122]
                %3252 = vst [vmem:[%s3132 + $0x1d8] sm:%s3122] %v3251
                %v3253 = vld [vmem:[%s3131 + $0x1e0] sm:%s3122]
                %3254 = vst [vmem:[%s3132 + $0x1e0] sm:%s3122] %v3253
                %v3255 = vld [vmem:[%s3131 + $0x1e8] sm:%s3122]
                %3256 = vst [vmem:[%s3132 + $0x1e8] sm:%s3122] %v3255
                %v3257 = vld [vmem:[%s3131 + $0x1f0] sm:%s3122]
                %3258 = vst [vmem:[%s3132 + $0x1f0] sm:%s3122] %v3257
                %v3259 = vld [vmem:[%s3131 + $0x1f8] sm:%s3122]
                %3260 = vst [vmem:[%s3132 + $0x1f8] sm:%s3122] %v3259
                %s3261 = sadd.s32 1, %s3130
                %p3262 = scmp.ge.s32.totalorder %s3261, %s3123
                %s3263 = scalar_select %p3262, 0, %s3261
                %s3264 = smul.u32 %s3263, 512
                %s3265 = smul.u32 %s3263, 512
                %s3266 = scalar_lea.vmem %s3100, %s3264 [#allocation5]
                %s3267 = scalar_lea.vmem %s3113, %s3265
              $region139: #{tpu_custom_call.1} parent=133 // loop_footer
                %s3127 = sadd.s32 %s3125, 1
              $region140: #{tpu_custom_call.1} parent=133 // loop_footer_branch
                %3124 = sbr.rel target = $region136
              $region141: #{tpu_custom_call.1} parent=133 // loop_exit
                _
              %s3268 = sshrl.u32 %s3107, 6
              %s3269 = sand.u32 %s3107, 63
              %s3270 = smul.u32 %s3268, 64
              %s3271 = smul.u32 8, %s3270
              %s3272 = scalar_lea.vmem %s3100, %s3271 [#allocation5]
              %s3273 = smul.u32 8, %s3270
              %s3274 = scalar_lea.vmem %s3113, %s3273
              // While loop
              $region142: #{tpu_custom_call.1} parent=133 // loop_pre_header
                _
              $region143: #{tpu_custom_call.1} parent=133 // loop_header
                %s3276 = sphi 0, %s3278
                %p3277 = scmp.ge.s32.totalorder %s3276, %s3269
                %s3281 = sphi 0, %s3288
                %s3282 = sphi %s3272, %s3291
                %s3283 = sphi %s3274, %s3292
              $region144: #{tpu_custom_call.1} parent=133 // loop_header_branch
                %3280 = sbr.rel (%p3277) target = $region148
              $region145: #{tpu_custom_call.1} parent=133 // loop_body
                %v3284 = vld [vmem:[%s3282] sm:%s3122]
                %3285 = vst [vmem:[%s3283] sm:%s3122] %v3284
                %s3286 = sadd.s32 1, %s3281
                %p3287 = scmp.ge.s32.totalorder %s3286, %s3269
                %s3288 = scalar_select %p3287, 0, %s3286
                %s3289 = smul.u32 %s3288, 8
                %s3290 = smul.u32 %s3288, 8
                %s3291 = scalar_lea.vmem %s3272, %s3289 [#allocation5]
                %s3292 = scalar_lea.vmem %s3274, %s3290
              $region146: #{tpu_custom_call.1} parent=133 // loop_footer
                %s3278 = sadd.s32 %s3276, 1
              $region147: #{tpu_custom_call.1} parent=133 // loop_footer_branch
                %3275 = sbr.rel target = $region143
              $region148: #{tpu_custom_call.1} parent=133 // loop_exit
                _
            $region134: #{tpu_custom_call.1} parent=125 // pred_fallthru
              _
          $region126: #{tpu_custom_call.1} parent=121 // pred_fallthru
            _
          %3467 = vnop
        $region122: #{tpu_custom_call.1} parent=109 // pred_fallthru
          _
      $region110: #{tpu_custom_call.1} parent=5 // pred_fallthru
        _
      %p3468 = scmp.le.s32.totalorder 2, %s13
      // Predicated region
      $region171: #{tpu_custom_call.1} parent=5 // pred_check
        %p3469 = pneg %p3468
      $region172: #{tpu_custom_call.1} parent=5 // pred_check_branch
        %3471 = sbr.rel (%p3469) target = $region174
      $region173: #{tpu_custom_call.1} parent=5 // pred_region
        %s3472 = ssub.s32 %s13, 2
        // Predicated region
        $region175: #{tpu_custom_call.1} parent=173 // pred_check
          %p3473 = pneg %p222
        $region176: #{tpu_custom_call.1} parent=173 // pred_check_branch
          %3475 = sbr.rel (%p3473) target = $region178
        $region177: #{tpu_custom_call.1} parent=173 // pred_region
          %s3476 = sand.u32 %s207, 1
          %s3477 = sand.u32 %s207, 1
          %s3478 = smul.addr %s3477, 512
          %s3479 = scalar_lea.vmem [#allocation5], %s3478
        $region178: #{tpu_custom_call.1} parent=173 // pred_fallthru
          _
      $region174: #{tpu_custom_call.1} parent=5 // pred_fallthru
        _
    $region6: #{tpu_custom_call.1} parent=1 // loop_footer
      %s17 = sadd.s32 1, %s13
    $region7: #{tpu_custom_call.1} parent=1 // loop_footer_branch
      %12 = sbr.rel target = $region3
    $region8: #{tpu_custom_call.1} parent=1 // loop_exit
      _

</llo_original>
